<compile_context>
chip_gen: v6e
topology: v6e:2x2x1
jax: 0.10.0
libtpu: 0.0.40
codegen_flags: <defaults>
</compile_context>

<pallas_src>
import functools

import jax
import jax.numpy as jnp
from jax.experimental import pallas as pl
from jax.experimental.pallas import tpu as pltpu


def _sigmoid_fast(x):
    # sigmoid(x) = 0.5 * tanh(0.5 x) + 0.5 : single EUP op, divide-free.
    return 0.5 * jnp.tanh(0.5 * x) + 0.5


def _time_reverse(x, L, Bp):
    """Reverse the L time blocks (Bp sublane rows each) of an (L*Bp, D) slab.
    Static, sublane-aligned slices; done once per layer, off the serial chain."""
    return jnp.concatenate([x[(L - 1 - s) * Bp:(L - s) * Bp] for s in range(L)], axis=0)


def _simple_lstm_kernel(n_layers, seq_len, hidden, tok_ref, table_ref, *refs):
    """refs = (A, B, W_hh, bias) * n_layers + (fc_w, fc_b) | out_ref | scr_ref

    Paired gate-column layout everywhere (built in the wrapper):
        [ i_f i_b | f_f f_b | g_f g_b | o_f o_b ]        (8H = 256 lanes for H = 32)
    so the fused hidden/cell state is one (Bp, 2H) slab [·_f | ·_b], the recurrence is
    ONE (Bp,2H)@(2H,8H) matmul per step and the cell takes four 2H-wide gate slices.

      A, B  : (in, 8H) bf16 input-projection weights; `B` is applied to the
              time-reversed input rows (bwd direction folded in, see wrapper).
      W_hh  : (2H, 8H) bf16, rows 0:H = fwd recurrent weights into fwd slots,
              rows H:2H = bwd recurrent weights into bwd slots.
      bias  : (1, 8H) f32 (b_ih + b_hh folded, paired layout).
      fc_w  : (2H, Cp) bf16 (fc.weight.T, lane-padded).   fc_b : (1, Cp) f32.
    """
    L, H = seq_len, hidden
    layer_refs = refs[:4 * n_layers]
    fcw_ref, fcb_ref, out_ref, scr_ref = refs[4 * n_layers:]

    NBp = tok_ref.shape[0]
    Bp = NBp // L
    Vp = table_ref.shape[0]

    # ---- fused embedding lookup: one-hot (L*Bp, Vp) @ table (Vp, E) on the MXU.
    # bf16 operands (one-hot is exact in bf16), f32 accumulate.
    # TODO(synk): DMA row-gather from HBM for large vocab instead of VMEM one-hot.
    tok = tok_ref[...]                                               # (L*Bp, 1) int32
    vocab_iota = jax.lax.broadcasted_iota(jnp.int32, (NBp, Vp), 1)
    onehot = (vocab_iota == tok).astype(jnp.bfloat16)
    cur = jnp.dot(onehot, table_ref[...],
                  preferred_element_type=jnp.float32)                # (L*Bp, E) f32

    h = None
    for layer in range(n_layers):
        A = layer_refs[4 * layer][...]                               # (in, 8H) bf16
        B = layer_refs[4 * layer + 1][...]                           # (in, 8H) bf16
        w_hh = layer_refs[4 * layer + 2][...]                        # (2H, 8H) bf16
        bias = layer_refs[4 * layer + 3][...]                        # (1, 8H)  f32

        # All timesteps x both directions projected by TWO lane-dense matmuls; the bwd
        # direction's time reversal is folded in here (once per layer), so each step
        # reads a single contiguous aligned (Bp, 8H) row block.
        cur_rev = _time_reverse(cur, L, Bp)
        xproj = (jnp.dot(cur.astype(jnp.bfloat16), A,
                         preferred_element_type=jnp.float32)
                 + jnp.dot(cur_rev.astype(jnp.bfloat16), B,
                           preferred_element_type=jnp.float32)
                 + bias)                                             # (L*Bp, 8H) f32

        h = jnp.zeros((Bp, 2 * H), jnp.float32)                      # [h_f | h_b]
        c = jnp.zeros((Bp, 2 * H), jnp.float32)                      # [c_f | c_b]
        # TODO(synk): for long sequences switch to lax.fori_loop(..., unroll=k) over the
        # VMEM scratch to bound live ranges; L is tiny & static here, so fully unrolled.
        for s in range(L):
            # ONE fused recurrent matmul per step: (8,64)@(64,256), 256 MXU columns.
            g = xproj[s * Bp:(s + 1) * Bp, :] + jnp.dot(
                h.astype(jnp.bfloat16), w_hh, preferred_element_type=jnp.float32)
            i = _sigmoid_fast(g[:, 0:2 * H])
            f = _sigmoid_fast(g[:, 2 * H:4 * H])
            gg = jnp.tanh(g[:, 4 * H:6 * H])
            o = _sigmoid_fast(g[:, 6 * H:8 * H])
            c = f * c + i * gg
            h = o * jnp.tanh(c)
            if layer < n_layers - 1:
                # Step-ordered inter-layer slab: row block s = [h_f(t=s) | h_b(t=L-1-s)];
                # the next layer's wrapper-built A/B weights account for this ordering.
                scr_ref[s * Bp:(s + 1) * Bp, :] = h
        if layer < n_layers - 1:
            # TODO(synk): nn.LSTM inter-layer dropout applied as identity (inference).
            cur = scr_ref[...]                                       # (L*Bp, 2H) f32

    # x = fc(dropout(cat(hidden[-2], hidden[-1]))): after the last fused step, h already
    # IS [h_fwd_final | h_bwd_final]; one lane-dense (Bp,2H)@(2H,Cp=128) matmul.
    # TODO(synk): nn.Dropout before the FC applied as identity (inference semantics).
    logits = (jnp.dot(h.astype(jnp.bfloat16), fcw_ref[...],
                      preferred_element_type=jnp.float32) + fcb_ref[...])
    out_ref[...] = logits                                            # (Bp, Cp) lane-dense


def _pair_gate_cols(w_f, w_b, H):
    """(in, 4H) fwd / bwd gate blocks (PyTorch column order i|f|g|o) -> (in, 8H) in the
    paired layout [i_f i_b | f_f f_b | g_f g_b | o_f o_b]."""
    parts = []
    for gate in range(4):
        parts.append(w_f[:, gate * H:(gate + 1) * H])
        parts.append(w_b[:, gate * H:(gate + 1) * H])
    return jnp.concatenate(parts, axis=1)


def simple_lstm_forward(tokens, emb_table, layers, fc_w, fc_b):
    """tokens: (L, B) int32 (seq-major, nn.LSTM batch_first=False).
    emb_table: (V, E).  layers[l] dict with
        w_ih_f / w_ih_b : (in_dim_l, 4H)  (= PyTorch weight_ih_l{l}[_reverse].T)
        w_hh_f / w_hh_b : (H, 4H)         (= PyTorch weight_hh_l{l}[_reverse].T)
        b_f / b_b       : (4H,)           (= bias_ih + bias_hh per direction)
    fc_w: (2H, C) (= fc.weight.T), fc_b: (C,).   Returns logits (B, C)."""
    L, B = tokens.shape
    V, E = emb_table.shape
    H = layers[0]["w_hh_f"].shape[0]
    C = fc_w.shape[1]
    n_layers = len(layers)

    Bp = max(8, ((B + 7) // 8) * 8)       # sublane-aligned batch (pad rows discarded)
    Vp = ((V + 127) // 128) * 128         # lane-aligned one-hot contraction
    Cp = ((C + 127) // 128) * 128         # lane-dense output slab
    NBp = L * Bp

    tok_pad = jnp.pad(tokens.astype(jnp.int32), ((0, 0), (0, Bp - B)))
    table_pad = jnp.pad(emb_table.astype(jnp.float32), ((0, Vp - V), (0, 0)))

    args = [tok_pad.reshape(NBp, 1), table_pad.astype(jnp.bfloat16)]
    for l, p in enumerate(layers):
        w_ih_f = p["w_ih_f"].astype(jnp.float32)
        w_ih_b = p["w_ih_b"].astype(jnp.float32)
        if l == 0:
            # Layer 0 input is the embedded sequence in TIME order.
            z = jnp.zeros_like(w_ih_f)
            A = _pair_gate_cols(w_ih_f, z, H)                        # fwd slots, t = s
            Bm = _pair_gate_cols(z, w_ih_b, H)                       # bwd slots, t = L-1-s
        else:
            # Deeper layers read the STEP-ordered scratch [h_f(s) | h_b(L-1-s)].
            zH = jnp.zeros((H, 4 * H), jnp.float32)
            A = jnp.concatenate([_pair_gate_cols(w_ih_f[:H], zH, H),
                                 _pair_gate_cols(zH, w_ih_b[H:], H)], axis=0)
            Bm = jnp.concatenate([_pair_gate_cols(zH, w_ih_b[:H], H),
                                  _pair_gate_cols(w_ih_f[H:], zH, H)], axis=0)
        zhh = jnp.zeros((H, 4 * H), jnp.float32)
        w_hh_cat = jnp.concatenate(
            [_pair_gate_cols(p["w_hh_f"].astype(jnp.float32), zhh, H),
             _pair_gate_cols(zhh, p["w_hh_b"].astype(jnp.float32), H)], axis=0)
        b_cat = _pair_gate_cols(p["b_f"].reshape(1, 4 * H).astype(jnp.float32),
                                p["b_b"].reshape(1, 4 * H).astype(jnp.float32), H)
        args += [A.astype(jnp.bfloat16), Bm.astype(jnp.bfloat16),
                 w_hh_cat.astype(jnp.bfloat16), b_cat]

    fc_w_pad = jnp.zeros((2 * H, Cp), jnp.float32).at[:, :C].set(fc_w.astype(jnp.float32))
    fc_b_pad = jnp.zeros((1, Cp), jnp.float32).at[:, :C].set(
        fc_b.reshape(1, C).astype(jnp.float32))
    args += [fc_w_pad.astype(jnp.bfloat16), fc_b_pad]

    # Advisory cost estimate so XLA schedules surrounding glue ops sensibly.
    flops = 2 * NBp * Vp * E                                   # one-hot embedding
    for l in range(n_layers):
        in_l = E if l == 0 else 2 * H
        flops += 2 * (2 * NBp * in_l * 8 * H)                  # two projection matmuls
        flops += L * 2 * Bp * (2 * H) * (8 * H)                # fused recurrent matmuls
    flops += 2 * Bp * (2 * H) * Cp                             # final linear
    transcendentals = n_layers * L * 5 * Bp * 2 * H            # 4 gate tanh + tanh(c)
    bytes_accessed = sum(int(a.size) * a.dtype.itemsize for a in args) + Bp * Cp * 4

    kernel = functools.partial(_simple_lstm_kernel, n_layers, L, H)
    out = pl.pallas_call(
        kernel,
        out_shape=jax.ShapeDtypeStruct((Bp, Cp), jnp.float32),
        in_specs=[pl.BlockSpec(memory_space=pltpu.MemorySpace.VMEM) for _ in args],
        out_specs=pl.BlockSpec(memory_space=pltpu.MemorySpace.VMEM),
        scratch_shapes=[pltpu.VMEM((NBp, 2 * H), jnp.float32)],   # inter-layer slab
        cost_estimate=pl.CostEstimate(flops=int(flops),
                                      transcendentals=int(transcendentals),
                                      bytes_accessed=int(bytes_accessed)),
    )(*args)
    return out[:B, :C]


def simple_lstm_reference(tokens, emb_table, layers, fc_w, fc_b):
    """Pure-JAX reference with PyTorch nn.LSTM(bidirectional=True) semantics (f32)."""
    L, B = tokens.shape
    H = layers[0]["w_hh_f"].shape[0]
    hi = jax.lax.Precision.HIGHEST
    sig = lambda x: 1.0 / (1.0 + jnp.exp(-x))
    seq = emb_table[tokens].astype(jnp.float32)                    # (L, B, E)

    h_f_last = h_b_last = None
    for p in layers:
        def run(w_ih, w_hh, b, reverse):
            h = jnp.zeros((B, H), jnp.float32)
            c = jnp.zeros((B, H), jnp.float32)
            outs = [None] * L
            ts = range(L - 1, -1, -1) if reverse else range(L)
            for t in ts:
                g = (jnp.dot(seq[t], w_ih, precision=hi)
                     + jnp.dot(h, w_hh, precision=hi) + b)
                i = sig(g[:, :H]); f = sig(g[:, H:2 * H])
                gg = jnp.tanh(g[:, 2 * H:3 * H]); o = sig(g[:, 3 * H:])
                c = f * c + i * gg
                h = o * jnp.tanh(c)
                outs[t] = h
            return jnp.stack(outs, axis=0), h
        out_f, h_f_last = run(p["w_ih_f"], p["w_hh_f"], p["b_f"], False)
        out_b, h_b_last = run(p["w_ih_b"], p["w_hh_b"], p["b_b"], True)
        seq = jnp.concatenate([out_f, out_b], axis=-1)             # (L, B, 2H)

    hidden = jnp.concatenate([h_f_last, h_b_last], axis=1)         # cat(h[-2], h[-1])
    return jnp.dot(hidden, fc_w, precision=hi) + fc_b


if __name__ == "__main__":
    # Small config consistent with SimpleLSTM.__init__ / forward.
    input_dim = 50        # vocabulary size
    embedding_dim = 32    # E
    hidden_dim = 32       # H
    output_dim = 4        # classes
    n_layers = 2
    batch = 2             # B
    seq_len = 8           # L  (text is (seq, batch): nn.LSTM batch_first=False)

    key = jax.random.PRNGKey(0)
    keys = jax.random.split(key, 3 + 6 * n_layers)
    k_tok, k_emb, k_fc = keys[0], keys[1], keys[2]
    k_layers = keys[3:]

    emb_table = jax.random.normal(k_emb, (input_dim, embedding_dim), jnp.float32) * 0.1
    H = hidden_dim
    layers = []
    for l in range(n_layers):
        in_dim = embedding_dim if l == 0 else 2 * hidden_dim
        ks = k_layers[6 * l:6 * (l + 1)]
        layers.append(dict(
            w_ih_f=jax.random.normal(ks[0], (in_dim, 4 * H), jnp.float32) * 0.1,
            w_ih_b=jax.random.normal(ks[1], (in_dim, 4 * H), jnp.float32) * 0.1,
            w_hh_f=jax.random.normal(ks[2], (H, 4 * H), jnp.float32) * 0.1,
            w_hh_b=jax.random.normal(ks[3], (H, 4 * H), jnp.float32) * 0.1,
            b_f=jax.random.normal(ks[4], (4 * H,), jnp.float32) * 0.1,
            b_b=jax.random.normal(ks[5], (4 * H,), jnp.float32) * 0.1,
        ))
    k_fc_w, k_fc_b = jax.random.split(k_fc)
    fc_w = jax.random.normal(k_fc_w, (2 * H, output_dim), jnp.float32) * 0.1
    fc_b = jax.random.normal(k_fc_b, (output_dim,), jnp.float32) * 0.1

    # The module's input `text`: (seq_len, batch) int token ids.
    tokens = jax.random.randint(k_tok, (seq_len, batch), 0, input_dim, dtype=jnp.int32)

    logits = simple_lstm_forward(tokens, emb_table, layers, fc_w, fc_b)
    logits = jax.block_until_ready(logits)

    ref = simple_lstm_reference(tokens, emb_table, layers, fc_w, fc_b)
    assert logits.shape == (batch, output_dim)
    # bf16 MXU operands (f32 accumulation) vs. an f32 HIGHEST-precision reference:
    # tolerance widened accordingly.
    assert jnp.allclose(logits, ref, atol=2e-2, rtol=2e-2), (
        f"max abs diff {jnp.max(jnp.abs(logits - ref))}")

    print("KERNEL_OK")
</pallas_src>

<mosaic_0001>
module attributes {stable_mosaic.version = 11 : i64} {
  func.func @_simple_lstm_kernel(%arg0: memref<64x1xi32, #tpu.memory_space<vmem>>, %arg1: memref<128x32xbf16, #tpu.memory_space<vmem>>, %arg2: memref<32x256xbf16, #tpu.memory_space<vmem>>, %arg3: memref<32x256xbf16, #tpu.memory_space<vmem>>, %arg4: memref<64x256xbf16, #tpu.memory_space<vmem>>, %arg5: memref<1x256xf32, #tpu.memory_space<vmem>>, %arg6: memref<64x256xbf16, #tpu.memory_space<vmem>>, %arg7: memref<64x256xbf16, #tpu.memory_space<vmem>>, %arg8: memref<64x256xbf16, #tpu.memory_space<vmem>>, %arg9: memref<1x256xf32, #tpu.memory_space<vmem>>, %arg10: memref<64x128xbf16, #tpu.memory_space<vmem>>, %arg11: memref<1x128xf32, #tpu.memory_space<vmem>>, %arg12: memref<8x128xf32, #tpu.memory_space<vmem>>, %arg13: memref<64x64xf32, #tpu.memory_space<vmem>>) attributes {dimension_semantics = [], scalar_prefetch = 0 : i64, scratch_operands = 1 : i64, tpu.core_type = #tpu.core_type<tc>} {
    %c0 = arith.constant 0 : index
    %c0_0 = arith.constant 0 : index
    %0 = vector.load %arg0[%c0, %c0_0] : memref<64x1xi32, #tpu.memory_space<vmem>>, vector<64x1xi32>
    %1 = tpu.iota {dimensions = array<i32: 1>} : vector<64x128xi32>
    %2 = vector.broadcast %0 : vector<64x1xi32> to vector<64x128xi32>
    %3 = arith.cmpi eq, %1, %2 : vector<64x128xi32>
    %4 = arith.extui %3 : vector<64x128xi1> to vector<64x128xi32>
    %5 = arith.sitofp %4 : vector<64x128xi32> to vector<64x128xf32>
    %6 = arith.truncf %5 : vector<64x128xf32> to vector<64x128xbf16>
    %c0_1 = arith.constant 0 : index
    %c0_2 = arith.constant 0 : index
    %7 = vector.load %arg1[%c0_1, %c0_2] : memref<128x32xbf16, #tpu.memory_space<vmem>>, vector<128x32xbf16>
    %cst = arith.constant dense<0.000000e+00> : vector<64x32xf32>
    %8 = tpu.matmul %6, %7, %cst {dimension_numbers = #tpu.dot_dimension_numbers<[1], [0], [0], [1], [0, 0, 1, 1], [], []>} : vector<64x128xbf16>, vector<128x32xbf16>, vector<64x32xf32> -> vector<64x32xf32>
    %c0_3 = arith.constant 0 : index
    %c0_4 = arith.constant 0 : index
    %9 = vector.load %arg2[%c0_3, %c0_4] : memref<32x256xbf16, #tpu.memory_space<vmem>>, vector<32x256xbf16>
    %c0_5 = arith.constant 0 : index
    %c0_6 = arith.constant 0 : index
    %10 = vector.load %arg3[%c0_5, %c0_6] : memref<32x256xbf16, #tpu.memory_space<vmem>>, vector<32x256xbf16>
    %c0_7 = arith.constant 0 : index
    %c0_8 = arith.constant 0 : index
    %11 = vector.load %arg4[%c0_7, %c0_8] : memref<64x256xbf16, #tpu.memory_space<vmem>>, vector<64x256xbf16>
    %c0_9 = arith.constant 0 : index
    %c0_10 = arith.constant 0 : index
    %12 = vector.load %arg5[%c0_9, %c0_10] : memref<1x256xf32, #tpu.memory_space<vmem>>, vector<1x256xf32>
    %13 = vector.extract_strided_slice %8 {offsets = [56, 0], sizes = [8, 32], strides = [1, 1]} : vector<64x32xf32> to vector<8x32xf32>
    %14 = vector.extract_strided_slice %8 {offsets = [48, 0], sizes = [8, 32], strides = [1, 1]} : vector<64x32xf32> to vector<8x32xf32>
    %15 = vector.extract_strided_slice %8 {offsets = [40, 0], sizes = [8, 32], strides = [1, 1]} : vector<64x32xf32> to vector<8x32xf32>
    %16 = vector.extract_strided_slice %8 {offsets = [32, 0], sizes = [8, 32], strides = [1, 1]} : vector<64x32xf32> to vector<8x32xf32>
    %17 = vector.extract_strided_slice %8 {offsets = [24, 0], sizes = [8, 32], strides = [1, 1]} : vector<64x32xf32> to vector<8x32xf32>
    %18 = vector.extract_strided_slice %8 {offsets = [16, 0], sizes = [8, 32], strides = [1, 1]} : vector<64x32xf32> to vector<8x32xf32>
    %19 = vector.extract_strided_slice %8 {offsets = [8, 0], sizes = [8, 32], strides = [1, 1]} : vector<64x32xf32> to vector<8x32xf32>
    %20 = vector.extract_strided_slice %8 {offsets = [0, 0], sizes = [8, 32], strides = [1, 1]} : vector<64x32xf32> to vector<8x32xf32>
    %21 = tpu.concatenate %13, %14, %15, %16, %17, %18, %19, %20 in 0 : vector<8x32xf32>, vector<8x32xf32>, vector<8x32xf32>, vector<8x32xf32>, vector<8x32xf32>, vector<8x32xf32>, vector<8x32xf32>, vector<8x32xf32> -> vector<64x32xf32>
    %22 = arith.truncf %8 : vector<64x32xf32> to vector<64x32xbf16>
    %cst_11 = arith.constant dense<0.000000e+00> : vector<64x256xf32>
    %23 = tpu.matmul %22, %9, %cst_11 {dimension_numbers = #tpu.dot_dimension_numbers<[1], [0], [0], [1], [0, 0, 1, 1], [], []>} : vector<64x32xbf16>, vector<32x256xbf16>, vector<64x256xf32> -> vector<64x256xf32>
    %24 = arith.truncf %21 : vector<64x32xf32> to vector<64x32xbf16>
    %cst_12 = arith.constant dense<0.000000e+00> : vector<64x256xf32>
    %25 = tpu.matmul %24, %10, %cst_12 {dimension_numbers = #tpu.dot_dimension_numbers<[1], [0], [0], [1], [0, 0, 1, 1], [], []>} : vector<64x32xbf16>, vector<32x256xbf16>, vector<64x256xf32> -> vector<64x256xf32>
    %26 = arith.addf %23, %25 : vector<64x256xf32>
    %27 = vector.broadcast %12 : vector<1x256xf32> to vector<64x256xf32>
    %28 = arith.addf %26, %27 : vector<64x256xf32>
    %cst_13 = arith.constant 0.000000e+00 : f32
    %29 = vector.broadcast %cst_13 : f32 to vector<8x64xf32>
    %cst_14 = arith.constant 0.000000e+00 : f32
    %30 = vector.broadcast %cst_14 : f32 to vector<8x64xf32>
    %31 = vector.extract_strided_slice %28 {offsets = [0, 0], sizes = [8, 256], strides = [1, 1]} : vector<64x256xf32> to vector<8x256xf32>
    %32 = arith.truncf %29 : vector<8x64xf32> to vector<8x64xbf16>
    %cst_15 = arith.constant dense<0.000000e+00> : vector<8x256xf32>
    %33 = tpu.matmul %32, %11, %cst_15 {dimension_numbers = #tpu.dot_dimension_numbers<[1], [0], [0], [1], [0, 0, 1, 1], [], []>} : vector<8x64xbf16>, vector<64x256xbf16>, vector<8x256xf32> -> vector<8x256xf32>
    %34 = arith.addf %31, %33 : vector<8x256xf32>
    %35 = vector.extract_strided_slice %34 {offsets = [0, 0], sizes = [8, 64], strides = [1, 1]} : vector<8x256xf32> to vector<8x64xf32>
    %cst_16 = arith.constant 5.000000e-01 : f32
    %36 = vector.broadcast %cst_16 : f32 to vector<8x64xf32>
    %37 = arith.mulf %36, %35 : vector<8x64xf32>
    %38 = math.tanh %37 : vector<8x64xf32>
    %cst_17 = arith.constant 5.000000e-01 : f32
    %39 = vector.broadcast %cst_17 : f32 to vector<8x64xf32>
    %40 = arith.mulf %39, %38 : vector<8x64xf32>
    %cst_18 = arith.constant 5.000000e-01 : f32
    %41 = vector.broadcast %cst_18 : f32 to vector<8x64xf32>
    %42 = arith.addf %40, %41 : vector<8x64xf32>
    %43 = vector.extract_strided_slice %34 {offsets = [0, 64], sizes = [8, 64], strides = [1, 1]} : vector<8x256xf32> to vector<8x64xf32>
    %cst_19 = arith.constant 5.000000e-01 : f32
    %44 = vector.broadcast %cst_19 : f32 to vector<8x64xf32>
    %45 = arith.mulf %44, %43 : vector<8x64xf32>
    %46 = math.tanh %45 : vector<8x64xf32>
    %cst_20 = arith.constant 5.000000e-01 : f32
    %47 = vector.broadcast %cst_20 : f32 to vector<8x64xf32>
    %48 = arith.mulf %47, %46 : vector<8x64xf32>
    %cst_21 = arith.constant 5.000000e-01 : f32
    %49 = vector.broadcast %cst_21 : f32 to vector<8x64xf32>
    %50 = arith.addf %48, %49 : vector<8x64xf32>
    %51 = vector.extract_strided_slice %34 {offsets = [0, 128], sizes = [8, 64], strides = [1, 1]} : vector<8x256xf32> to vector<8x64xf32>
    %52 = math.tanh %51 : vector<8x64xf32>
    %53 = vector.extract_strided_slice %34 {offsets = [0, 192], sizes = [8, 64], strides = [1, 1]} : vector<8x256xf32> to vector<8x64xf32>
    %cst_22 = arith.constant 5.000000e-01 : f32
    %54 = vector.broadcast %cst_22 : f32 to vector<8x64xf32>
    %55 = arith.mulf %54, %53 : vector<8x64xf32>
    %56 = math.tanh %55 : vector<8x64xf32>
    %cst_23 = arith.constant 5.000000e-01 : f32
    %57 = vector.broadcast %cst_23 : f32 to vector<8x64xf32>
    %58 = arith.mulf %57, %56 : vector<8x64xf32>
    %cst_24 = arith.constant 5.000000e-01 : f32
    %59 = vector.broadcast %cst_24 : f32 to vector<8x64xf32>
    %60 = arith.addf %58, %59 : vector<8x64xf32>
    %61 = arith.mulf %50, %30 : vector<8x64xf32>
    %62 = arith.mulf %42, %52 : vector<8x64xf32>
    %63 = arith.addf %61, %62 : vector<8x64xf32>
    %64 = math.tanh %63 : vector<8x64xf32>
    %65 = arith.mulf %60, %64 : vector<8x64xf32>
    %c0_25 = arith.constant 0 : index
    %c0_26 = arith.constant 0 : index
    %66 = vector.load %arg13[%c0_25, %c0_26] : memref<64x64xf32, #tpu.memory_space<vmem>>, vector<8x64xf32>
    tpu.vector_store %arg13[%c0_25, %c0_26], %65 {strides = array<i32>} : memref<64x64xf32, #tpu.memory_space<vmem>>, vector<8x64xf32>,
    %67 = vector.extract_strided_slice %28 {offsets = [8, 0], sizes = [8, 256], strides = [1, 1]} : vector<64x256xf32> to vector<8x256xf32>
    %68 = arith.truncf %65 : vector<8x64xf32> to vector<8x64xbf16>
    %cst_27 = arith.constant dense<0.000000e+00> : vector<8x256xf32>
    %69 = tpu.matmul %68, %11, %cst_27 {dimension_numbers = #tpu.dot_dimension_numbers<[1], [0], [0], [1], [0, 0, 1, 1], [], []>} : vector<8x64xbf16>, vector<64x256xbf16>, vector<8x256xf32> -> vector<8x256xf32>
    %70 = arith.addf %67, %69 : vector<8x256xf32>
    %71 = vector.extract_strided_slice %70 {offsets = [0, 0], sizes = [8, 64], strides = [1, 1]} : vector<8x256xf32> to vector<8x64xf32>
    %cst_28 = arith.constant 5.000000e-01 : f32
    %72 = vector.broadcast %cst_28 : f32 to vector<8x64xf32>
    %73 = arith.mulf %72, %71 : vector<8x64xf32>
    %74 = math.tanh %73 : vector<8x64xf32>
    %cst_29 = arith.constant 5.000000e-01 : f32
    %75 = vector.broadcast %cst_29 : f32 to vector<8x64xf32>
    %76 = arith.mulf %75, %74 : vector<8x64xf32>
    %cst_30 = arith.constant 5.000000e-01 : f32
    %77 = vector.broadcast %cst_30 : f32 to vector<8x64xf32>
    %78 = arith.addf %76, %77 : vector<8x64xf32>
    %79 = vector.extract_strided_slice %70 {offsets = [0, 64], sizes = [8, 64], strides = [1, 1]} : vector<8x256xf32> to vector<8x64xf32>
    %cst_31 = arith.constant 5.000000e-01 : f32
    %80 = vector.broadcast %cst_31 : f32 to vector<8x64xf32>
    %81 = arith.mulf %80, %79 : vector<8x64xf32>
    %82 = math.tanh %81 : vector<8x64xf32>
    %cst_32 = arith.constant 5.000000e-01 : f32
    %83 = vector.broadcast %cst_32 : f32 to vector<8x64xf32>
    %84 = arith.mulf %83, %82 : vector<8x64xf32>
    %cst_33 = arith.constant 5.000000e-01 : f32
    %85 = vector.broadcast %cst_33 : f32 to vector<8x64xf32>
    %86 = arith.addf %84, %85 : vector<8x64xf32>
    %87 = vector.extract_strided_slice %70 {offsets = [0, 128], sizes = [8, 64], strides = [1, 1]} : vector<8x256xf32> to vector<8x64xf32>
    %88 = math.tanh %87 : vector<8x64xf32>
    %89 = vector.extract_strided_slice %70 {offsets = [0, 192], sizes = [8, 64], strides = [1, 1]} : vector<8x256xf32> to vector<8x64xf32>
    %cst_34 = arith.constant 5.000000e-01 : f32
    %90 = vector.broadcast %cst_34 : f32 to vector<8x64xf32>
    %91 = arith.mulf %90, %89 : vector<8x64xf32>
    %92 = math.tanh %91 : vector<8x64xf32>
    %cst_35 = arith.constant 5.000000e-01 : f32
    %93 = vector.broadcast %cst_35 : f32 to vector<8x64xf32>
    %94 = arith.mulf %93, %92 : vector<8x64xf32>
    %cst_36 = arith.constant 5.000000e-01 : f32
    %95 = vector.broadcast %cst_36 : f32 to vector<8x64xf32>
    %96 = arith.addf %94, %95 : vector<8x64xf32>
    %97 = arith.mulf %86, %63 : vector<8x64xf32>
    %98 = arith.mulf %78, %88 : vector<8x64xf32>
    %99 = arith.addf %97, %98 : vector<8x64xf32>
    %100 = math.tanh %99 : vector<8x64xf32>
    %101 = arith.mulf %96, %100 : vector<8x64xf32>
    %c8 = arith.constant 8 : index
    %c0_37 = arith.constant 0 : index
    %102 = vector.load %arg13[%c8, %c0_37] : memref<64x64xf32, #tpu.memory_space<vmem>>, vector<8x64xf32>
    tpu.vector_store %arg13[%c8, %c0_37], %101 {strides = array<i32>} : memref<64x64xf32, #tpu.memory_space<vmem>>, vector<8x64xf32>,
    %103 = vector.extract_strided_slice %28 {offsets = [16, 0], sizes = [8, 256], strides = [1, 1]} : vector<64x256xf32> to vector<8x256xf32>
    %104 = arith.truncf %101 : vector<8x64xf32> to vector<8x64xbf16>
    %cst_38 = arith.constant dense<0.000000e+00> : vector<8x256xf32>
    %105 = tpu.matmul %104, %11, %cst_38 {dimension_numbers = #tpu.dot_dimension_numbers<[1], [0], [0], [1], [0, 0, 1, 1], [], []>} : vector<8x64xbf16>, vector<64x256xbf16>, vector<8x256xf32> -> vector<8x256xf32>
    %106 = arith.addf %103, %105 : vector<8x256xf32>
    %107 = vector.extract_strided_slice %106 {offsets = [0, 0], sizes = [8, 64], strides = [1, 1]} : vector<8x256xf32> to vector<8x64xf32>
    %cst_39 = arith.constant 5.000000e-01 : f32
    %108 = vector.broadcast %cst_39 : f32 to vector<8x64xf32>
    %109 = arith.mulf %108, %107 : vector<8x64xf32>
    %110 = math.tanh %109 : vector<8x64xf32>
    %cst_40 = arith.constant 5.000000e-01 : f32
    %111 = vector.broadcast %cst_40 : f32 to vector<8x64xf32>
    %112 = arith.mulf %111, %110 : vector<8x64xf32>
    %cst_41 = arith.constant 5.000000e-01 : f32
    %113 = vector.broadcast %cst_41 : f32 to vector<8x64xf32>
    %114 = arith.addf %112, %113 : vector<8x64xf32>
    %115 = vector.extract_strided_slice %106 {offsets = [0, 64], sizes = [8, 64], strides = [1, 1]} : vector<8x256xf32> to vector<8x64xf32>
    %cst_42 = arith.constant 5.000000e-01 : f32
    %116 = vector.broadcast %cst_42 : f32 to vector<8x64xf32>
    %117 = arith.mulf %116, %115 : vector<8x64xf32>
    %118 = math.tanh %117 : vector<8x64xf32>
    %cst_43 = arith.constant 5.000000e-01 : f32
    %119 = vector.broadcast %cst_43 : f32 to vector<8x64xf32>
    %120 = arith.mulf %119, %118 : vector<8x64xf32>
    %cst_44 = arith.constant 5.000000e-01 : f32
    %121 = vector.broadcast %cst_44 : f32 to vector<8x64xf32>
    %122 = arith.addf %120, %121 : vector<8x64xf32>
    %123 = vector.extract_strided_slice %106 {offsets = [0, 128], sizes = [8, 64], strides = [1, 1]} : vector<8x256xf32> to vector<8x64xf32>
    %124 = math.tanh %123 : vector<8x64xf32>
    %125 = vector.extract_strided_slice %106 {offsets = [0, 192], sizes = [8, 64], strides = [1, 1]} : vector<8x256xf32> to vector<8x64xf32>
    %cst_45 = arith.constant 5.000000e-01 : f32
    %126 = vector.broadcast %cst_45 : f32 to vector<8x64xf32>
    %127 = arith.mulf %126, %125 : vector<8x64xf32>
    %128 = math.tanh %127 : vector<8x64xf32>
    %cst_46 = arith.constant 5.000000e-01 : f32
    %129 = vector.broadcast %cst_46 : f32 to vector<8x64xf32>
    %130 = arith.mulf %129, %128 : vector<8x64xf32>
    %cst_47 = arith.constant 5.000000e-01 : f32
    %131 = vector.broadcast %cst_47 : f32 to vector<8x64xf32>
    %132 = arith.addf %130, %131 : vector<8x64xf32>
    %133 = arith.mulf %122, %99 : vector<8x64xf32>
    %134 = arith.mulf %114, %124 : vector<8x64xf32>
    %135 = arith.addf %133, %134 : vector<8x64xf32>
    %136 = math.tanh %135 : vector<8x64xf32>
    %137 = arith.mulf %132, %136 : vector<8x64xf32>
    %c16 = arith.constant 16 : index
    %c0_48 = arith.constant 0 : index
    %138 = vector.load %arg13[%c16, %c0_48] : memref<64x64xf32, #tpu.memory_space<vmem>>, vector<8x64xf32>
    tpu.vector_store %arg13[%c16, %c0_48], %137 {strides = array<i32>} : memref<64x64xf32, #tpu.memory_space<vmem>>, vector<8x64xf32>,
    %139 = vector.extract_strided_slice %28 {offsets = [24, 0], sizes = [8, 256], strides = [1, 1]} : vector<64x256xf32> to vector<8x256xf32>
    %140 = arith.truncf %137 : vector<8x64xf32> to vector<8x64xbf16>
    %cst_49 = arith.constant dense<0.000000e+00> : vector<8x256xf32>
    %141 = tpu.matmul %140, %11, %cst_49 {dimension_numbers = #tpu.dot_dimension_numbers<[1], [0], [0], [1], [0, 0, 1, 1], [], []>} : vector<8x64xbf16>, vector<64x256xbf16>, vector<8x256xf32> -> vector<8x256xf32>
    %142 = arith.addf %139, %141 : vector<8x256xf32>
    %143 = vector.extract_strided_slice %142 {offsets = [0, 0], sizes = [8, 64], strides = [1, 1]} : vector<8x256xf32> to vector<8x64xf32>
    %cst_50 = arith.constant 5.000000e-01 : f32
    %144 = vector.broadcast %cst_50 : f32 to vector<8x64xf32>
    %145 = arith.mulf %144, %143 : vector<8x64xf32>
    %146 = math.tanh %145 : vector<8x64xf32>
    %cst_51 = arith.constant 5.000000e-01 : f32
    %147 = vector.broadcast %cst_51 : f32 to vector<8x64xf32>
    %148 = arith.mulf %147, %146 : vector<8x64xf32>
    %cst_52 = arith.constant 5.000000e-01 : f32
    %149 = vector.broadcast %cst_52 : f32 to vector<8x64xf32>
    %150 = arith.addf %148, %149 : vector<8x64xf32>
    %151 = vector.extract_strided_slice %142 {offsets = [0, 64], sizes = [8, 64], strides = [1, 1]} : vector<8x256xf32> to vector<8x64xf32>
    %cst_53 = arith.constant 5.000000e-01 : f32
    %152 = vector.broadcast %cst_53 : f32 to vector<8x64xf32>
    %153 = arith.mulf %152, %151 : vector<8x64xf32>
    %154 = math.tanh %153 : vector<8x64xf32>
    %cst_54 = arith.constant 5.000000e-01 : f32
    %155 = vector.broadcast %cst_54 : f32 to vector<8x64xf32>
    %156 = arith.mulf %155, %154 : vector<8x64xf32>
    %cst_55 = arith.constant 5.000000e-01 : f32
    %157 = vector.broadcast %cst_55 : f32 to vector<8x64xf32>
    %158 = arith.addf %156, %157 : vector<8x64xf32>
    %159 = vector.extract_strided_slice %142 {offsets = [0, 128], sizes = [8, 64], strides = [1, 1]} : vector<8x256xf32> to vector<8x64xf32>
    %160 = math.tanh %159 : vector<8x64xf32>
    %161 = vector.extract_strided_slice %142 {offsets = [0, 192], sizes = [8, 64], strides = [1, 1]} : vector<8x256xf32> to vector<8x64xf32>
    %cst_56 = arith.constant 5.000000e-01 : f32
    %162 = vector.broadcast %cst_56 : f32 to vector<8x64xf32>
    %163 = arith.mulf %162, %161 : vector<8x64xf32>
    %164 = math.tanh %163 : vector<8x64xf32>
    %cst_57 = arith.constant 5.000000e-01 : f32
    %165 = vector.broadcast %cst_57 : f32 to vector<8x64xf32>
    %166 = arith.mulf %165, %164 : vector<8x64xf32>
    %cst_58 = arith.constant 5.000000e-01 : f32
    %167 = vector.broadcast %cst_58 : f32 to vector<8x64xf32>
    %168 = arith.addf %166, %167 : vector<8x64xf32>
    %169 = arith.mulf %158, %135 : vector<8x64xf32>
    %170 = arith.mulf %150, %160 : vector<8x64xf32>
    %171 = arith.addf %169, %170 : vector<8x64xf32>
    %172 = math.tanh %171 : vector<8x64xf32>
    %173 = arith.mulf %168, %172 : vector<8x64xf32>
    %c24 = arith.constant 24 : index
    %c0_59 = arith.constant 0 : index
    %174 = vector.load %arg13[%c24, %c0_59] : memref<64x64xf32, #tpu.memory_space<vmem>>, vector<8x64xf32>
    tpu.vector_store %arg13[%c24, %c0_59], %173 {strides = array<i32>} : memref<64x64xf32, #tpu.memory_space<vmem>>, vector<8x64xf32>,
    %175 = vector.extract_strided_slice %28 {offsets = [32, 0], sizes = [8, 256], strides = [1, 1]} : vector<64x256xf32> to vector<8x256xf32>
    %176 = arith.truncf %173 : vector<8x64xf32> to vector<8x64xbf16>
    %cst_60 = arith.constant dense<0.000000e+00> : vector<8x256xf32>
    %177 = tpu.matmul %176, %11, %cst_60 {dimension_numbers = #tpu.dot_dimension_numbers<[1], [0], [0], [1], [0, 0, 1, 1], [], []>} : vector<8x64xbf16>, vector<64x256xbf16>, vector<8x256xf32> -> vector<8x256xf32>
    %178 = arith.addf %175, %177 : vector<8x256xf32>
    %179 = vector.extract_strided_slice %178 {offsets = [0, 0], sizes = [8, 64], strides = [1, 1]} : vector<8x256xf32> to vector<8x64xf32>
    %cst_61 = arith.constant 5.000000e-01 : f32
    %180 = vector.broadcast %cst_61 : f32 to vector<8x64xf32>
    %181 = arith.mulf %180, %179 : vector<8x64xf32>
    %182 = math.tanh %181 : vector<8x64xf32>
    %cst_62 = arith.constant 5.000000e-01 : f32
    %183 = vector.broadcast %cst_62 : f32 to vector<8x64xf32>
    %184 = arith.mulf %183, %182 : vector<8x64xf32>
    %cst_63 = arith.constant 5.000000e-01 : f32
    %185 = vector.broadcast %cst_63 : f32 to vector<8x64xf32>
    %186 = arith.addf %184, %185 : vector<8x64xf32>
    %187 = vector.extract_strided_slice %178 {offsets = [0, 64], sizes = [8, 64], strides = [1, 1]} : vector<8x256xf32> to vector<8x64xf32>
    %cst_64 = arith.constant 5.000000e-01 : f32
    %188 = vector.broadcast %cst_64 : f32 to vector<8x64xf32>
    %189 = arith.mulf %188, %187 : vector<8x64xf32>
    %190 = math.tanh %189 : vector<8x64xf32>
    %cst_65 = arith.constant 5.000000e-01 : f32
    %191 = vector.broadcast %cst_65 : f32 to vector<8x64xf32>
    %192 = arith.mulf %191, %190 : vector<8x64xf32>
    %cst_66 = arith.constant 5.000000e-01 : f32
    %193 = vector.broadcast %cst_66 : f32 to vector<8x64xf32>
    %194 = arith.addf %192, %193 : vector<8x64xf32>
    %195 = vector.extract_strided_slice %178 {offsets = [0, 128], sizes = [8, 64], strides = [1, 1]} : vector<8x256xf32> to vector<8x64xf32>
    %196 = math.tanh %195 : vector<8x64xf32>
    %197 = vector.extract_strided_slice %178 {offsets = [0, 192], sizes = [8, 64], strides = [1, 1]} : vector<8x256xf32> to vector<8x64xf32>
    %cst_67 = arith.constant 5.000000e-01 : f32
    %198 = vector.broadcast %cst_67 : f32 to vector<8x64xf32>
    %199 = arith.mulf %198, %197 : vector<8x64xf32>
    %200 = math.tanh %199 : vector<8x64xf32>
    %cst_68 = arith.constant 5.000000e-01 : f32
    %201 = vector.broadcast %cst_68 : f32 to vector<8x64xf32>
    %202 = arith.mulf %201, %200 : vector<8x64xf32>
    %cst_69 = arith.constant 5.000000e-01 : f32
    %203 = vector.broadcast %cst_69 : f32 to vector<8x64xf32>
    %204 = arith.addf %202, %203 : vector<8x64xf32>
    %205 = arith.mulf %194, %171 : vector<8x64xf32>
    %206 = arith.mulf %186, %196 : vector<8x64xf32>
    %207 = arith.addf %205, %206 : vector<8x64xf32>
    %208 = math.tanh %207 : vector<8x64xf32>
    %209 = arith.mulf %204, %208 : vector<8x64xf32>
    %c32 = arith.constant 32 : index
    %c0_70 = arith.constant 0 : index
    %210 = vector.load %arg13[%c32, %c0_70] : memref<64x64xf32, #tpu.memory_space<vmem>>, vector<8x64xf32>
    tpu.vector_store %arg13[%c32, %c0_70], %209 {strides = array<i32>} : memref<64x64xf32, #tpu.memory_space<vmem>>, vector<8x64xf32>,
    %211 = vector.extract_strided_slice %28 {offsets = [40, 0], sizes = [8, 256], strides = [1, 1]} : vector<64x256xf32> to vector<8x256xf32>
    %212 = arith.truncf %209 : vector<8x64xf32> to vector<8x64xbf16>
    %cst_71 = arith.constant dense<0.000000e+00> : vector<8x256xf32>
    %213 = tpu.matmul %212, %11, %cst_71 {dimension_numbers = #tpu.dot_dimension_numbers<[1], [0], [0], [1], [0, 0, 1, 1], [], []>} : vector<8x64xbf16>, vector<64x256xbf16>, vector<8x256xf32> -> vector<8x256xf32>
    %214 = arith.addf %211, %213 : vector<8x256xf32>
    %215 = vector.extract_strided_slice %214 {offsets = [0, 0], sizes = [8, 64], strides = [1, 1]} : vector<8x256xf32> to vector<8x64xf32>
    %cst_72 = arith.constant 5.000000e-01 : f32
    %216 = vector.broadcast %cst_72 : f32 to vector<8x64xf32>
    %217 = arith.mulf %216, %215 : vector<8x64xf32>
    %218 = math.tanh %217 : vector<8x64xf32>
    %cst_73 = arith.constant 5.000000e-01 : f32
    %219 = vector.broadcast %cst_73 : f32 to vector<8x64xf32>
    %220 = arith.mulf %219, %218 : vector<8x64xf32>
    %cst_74 = arith.constant 5.000000e-01 : f32
    %221 = vector.broadcast %cst_74 : f32 to vector<8x64xf32>
    %222 = arith.addf %220, %221 : vector<8x64xf32>
    %223 = vector.extract_strided_slice %214 {offsets = [0, 64], sizes = [8, 64], strides = [1, 1]} : vector<8x256xf32> to vector<8x64xf32>
    %cst_75 = arith.constant 5.000000e-01 : f32
    %224 = vector.broadcast %cst_75 : f32 to vector<8x64xf32>
    %225 = arith.mulf %224, %223 : vector<8x64xf32>
    %226 = math.tanh %225 : vector<8x64xf32>
    %cst_76 = arith.constant 5.000000e-01 : f32
    %227 = vector.broadcast %cst_76 : f32 to vector<8x64xf32>
    %228 = arith.mulf %227, %226 : vector<8x64xf32>
    %cst_77 = arith.constant 5.000000e-01 : f32
    %229 = vector.broadcast %cst_77 : f32 to vector<8x64xf32>
    %230 = arith.addf %228, %229 : vector<8x64xf32>
    %231 = vector.extract_strided_slice %214 {offsets = [0, 128], sizes = [8, 64], strides = [1, 1]} : vector<8x256xf32> to vector<8x64xf32>
    %232 = math.tanh %231 : vector<8x64xf32>
    %233 = vector.extract_strided_slice %214 {offsets = [0, 192], sizes = [8, 64], strides = [1, 1]} : vector<8x256xf32> to vector<8x64xf32>
    %cst_78 = arith.constant 5.000000e-01 : f32
    %234 = vector.broadcast %cst_78 : f32 to vector<8x64xf32>
    %235 = arith.mulf %234, %233 : vector<8x64xf32>
    %236 = math.tanh %235 : vector<8x64xf32>
    %cst_79 = arith.constant 5.000000e-01 : f32
    %237 = vector.broadcast %cst_79 : f32 to vector<8x64xf32>
    %238 = arith.mulf %237, %236 : vector<8x64xf32>
    %cst_80 = arith.constant 5.000000e-01 : f32
    %239 = vector.broadcast %cst_80 : f32 to vector<8x64xf32>
    %240 = arith.addf %238, %239 : vector<8x64xf32>
    %241 = arith.mulf %230, %207 : vector<8x64xf32>
    %242 = arith.mulf %222, %232 : vector<8x64xf32>
    %243 = arith.addf %241, %242 : vector<8x64xf32>
    %244 = math.tanh %243 : vector<8x64xf32>
    %245 = arith.mulf %240, %244 : vector<8x64xf32>
    %c40 = arith.constant 40 : index
    %c0_81 = arith.constant 0 : index
    %246 = vector.load %arg13[%c40, %c0_81] : memref<64x64xf32, #tpu.memory_space<vmem>>, vector<8x64xf32>
    tpu.vector_store %arg13[%c40, %c0_81], %245 {strides = array<i32>} : memref<64x64xf32, #tpu.memory_space<vmem>>, vector<8x64xf32>,
    %247 = vector.extract_strided_slice %28 {offsets = [48, 0], sizes = [8, 256], strides = [1, 1]} : vector<64x256xf32> to vector<8x256xf32>
    %248 = arith.truncf %245 : vector<8x64xf32> to vector<8x64xbf16>
    %cst_82 = arith.constant dense<0.000000e+00> : vector<8x256xf32>
    %249 = tpu.matmul %248, %11, %cst_82 {dimension_numbers = #tpu.dot_dimension_numbers<[1], [0], [0], [1], [0, 0, 1, 1], [], []>} : vector<8x64xbf16>, vector<64x256xbf16>, vector<8x256xf32> -> vector<8x256xf32>
    %250 = arith.addf %247, %249 : vector<8x256xf32>
    %251 = vector.extract_strided_slice %250 {offsets = [0, 0], sizes = [8, 64], strides = [1, 1]} : vector<8x256xf32> to vector<8x64xf32>
    %cst_83 = arith.constant 5.000000e-01 : f32
    %252 = vector.broadcast %cst_83 : f32 to vector<8x64xf32>
    %253 = arith.mulf %252, %251 : vector<8x64xf32>
    %254 = math.tanh %253 : vector<8x64xf32>
    %cst_84 = arith.constant 5.000000e-01 : f32
    %255 = vector.broadcast %cst_84 : f32 to vector<8x64xf32>
    %256 = arith.mulf %255, %254 : vector<8x64xf32>
    %cst_85 = arith.constant 5.000000e-01 : f32
    %257 = vector.broadcast %cst_85 : f32 to vector<8x64xf32>
    %258 = arith.addf %256, %257 : vector<8x64xf32>
    %259 = vector.extract_strided_slice %250 {offsets = [0, 64], sizes = [8, 64], strides = [1, 1]} : vector<8x256xf32> to vector<8x64xf32>
    %cst_86 = arith.constant 5.000000e-01 : f32
    %260 = vector.broadcast %cst_86 : f32 to vector<8x64xf32>
    %261 = arith.mulf %260, %259 : vector<8x64xf32>
    %262 = math.tanh %261 : vector<8x64xf32>
    %cst_87 = arith.constant 5.000000e-01 : f32
    %263 = vector.broadcast %cst_87 : f32 to vector<8x64xf32>
    %264 = arith.mulf %263, %262 : vector<8x64xf32>
    %cst_88 = arith.constant 5.000000e-01 : f32
    %265 = vector.broadcast %cst_88 : f32 to vector<8x64xf32>
    %266 = arith.addf %264, %265 : vector<8x64xf32>
    %267 = vector.extract_strided_slice %250 {offsets = [0, 128], sizes = [8, 64], strides = [1, 1]} : vector<8x256xf32> to vector<8x64xf32>
    %268 = math.tanh %267 : vector<8x64xf32>
    %269 = vector.extract_strided_slice %250 {offsets = [0, 192], sizes = [8, 64], strides = [1, 1]} : vector<8x256xf32> to vector<8x64xf32>
    %cst_89 = arith.constant 5.000000e-01 : f32
    %270 = vector.broadcast %cst_89 : f32 to vector<8x64xf32>
    %271 = arith.mulf %270, %269 : vector<8x64xf32>
    %272 = math.tanh %271 : vector<8x64xf32>
    %cst_90 = arith.constant 5.000000e-01 : f32
    %273 = vector.broadcast %cst_90 : f32 to vector<8x64xf32>
    %274 = arith.mulf %273, %272 : vector<8x64xf32>
    %cst_91 = arith.constant 5.000000e-01 : f32
    %275 = vector.broadcast %cst_91 : f32 to vector<8x64xf32>
    %276 = arith.addf %274, %275 : vector<8x64xf32>
    %277 = arith.mulf %266, %243 : vector<8x64xf32>
    %278 = arith.mulf %258, %268 : vector<8x64xf32>
    %279 = arith.addf %277, %278 : vector<8x64xf32>
    %280 = math.tanh %279 : vector<8x64xf32>
    %281 = arith.mulf %276, %280 : vector<8x64xf32>
    %c48 = arith.constant 48 : index
    %c0_92 = arith.constant 0 : index
    %282 = vector.load %arg13[%c48, %c0_92] : memref<64x64xf32, #tpu.memory_space<vmem>>, vector<8x64xf32>
    tpu.vector_store %arg13[%c48, %c0_92], %281 {strides = array<i32>} : memref<64x64xf32, #tpu.memory_space<vmem>>, vector<8x64xf32>,
    %283 = vector.extract_strided_slice %28 {offsets = [56, 0], sizes = [8, 256], strides = [1, 1]} : vector<64x256xf32> to vector<8x256xf32>
    %284 = arith.truncf %281 : vector<8x64xf32> to vector<8x64xbf16>
    %cst_93 = arith.constant dense<0.000000e+00> : vector<8x256xf32>
    %285 = tpu.matmul %284, %11, %cst_93 {dimension_numbers = #tpu.dot_dimension_numbers<[1], [0], [0], [1], [0, 0, 1, 1], [], []>} : vector<8x64xbf16>, vector<64x256xbf16>, vector<8x256xf32> -> vector<8x256xf32>
    %286 = arith.addf %283, %285 : vector<8x256xf32>
    %287 = vector.extract_strided_slice %286 {offsets = [0, 0], sizes = [8, 64], strides = [1, 1]} : vector<8x256xf32> to vector<8x64xf32>
    %cst_94 = arith.constant 5.000000e-01 : f32
    %288 = vector.broadcast %cst_94 : f32 to vector<8x64xf32>
    %289 = arith.mulf %288, %287 : vector<8x64xf32>
    %290 = math.tanh %289 : vector<8x64xf32>
    %cst_95 = arith.constant 5.000000e-01 : f32
    %291 = vector.broadcast %cst_95 : f32 to vector<8x64xf32>
    %292 = arith.mulf %291, %290 : vector<8x64xf32>
    %cst_96 = arith.constant 5.000000e-01 : f32
    %293 = vector.broadcast %cst_96 : f32 to vector<8x64xf32>
    %294 = arith.addf %292, %293 : vector<8x64xf32>
    %295 = vector.extract_strided_slice %286 {offsets = [0, 64], sizes = [8, 64], strides = [1, 1]} : vector<8x256xf32> to vector<8x64xf32>
    %cst_97 = arith.constant 5.000000e-01 : f32
    %296 = vector.broadcast %cst_97 : f32 to vector<8x64xf32>
    %297 = arith.mulf %296, %295 : vector<8x64xf32>
    %298 = math.tanh %297 : vector<8x64xf32>
    %cst_98 = arith.constant 5.000000e-01 : f32
    %299 = vector.broadcast %cst_98 : f32 to vector<8x64xf32>
    %300 = arith.mulf %299, %298 : vector<8x64xf32>
    %cst_99 = arith.constant 5.000000e-01 : f32
    %301 = vector.broadcast %cst_99 : f32 to vector<8x64xf32>
    %302 = arith.addf %300, %301 : vector<8x64xf32>
    %303 = vector.extract_strided_slice %286 {offsets = [0, 128], sizes = [8, 64], strides = [1, 1]} : vector<8x256xf32> to vector<8x64xf32>
    %304 = math.tanh %303 : vector<8x64xf32>
    %305 = vector.extract_strided_slice %286 {offsets = [0, 192], sizes = [8, 64], strides = [1, 1]} : vector<8x256xf32> to vector<8x64xf32>
    %cst_100 = arith.constant 5.000000e-01 : f32
    %306 = vector.broadcast %cst_100 : f32 to vector<8x64xf32>
    %307 = arith.mulf %306, %305 : vector<8x64xf32>
    %308 = math.tanh %307 : vector<8x64xf32>
    %cst_101 = arith.constant 5.000000e-01 : f32
    %309 = vector.broadcast %cst_101 : f32 to vector<8x64xf32>
    %310 = arith.mulf %309, %308 : vector<8x64xf32>
    %cst_102 = arith.constant 5.000000e-01 : f32
    %311 = vector.broadcast %cst_102 : f32 to vector<8x64xf32>
    %312 = arith.addf %310, %311 : vector<8x64xf32>
    %313 = arith.mulf %302, %279 : vector<8x64xf32>
    %314 = arith.mulf %294, %304 : vector<8x64xf32>
    %315 = arith.addf %313, %314 : vector<8x64xf32>
    %316 = math.tanh %315 : vector<8x64xf32>
    %317 = arith.mulf %312, %316 : vector<8x64xf32>
    %c56 = arith.constant 56 : index
    %c0_103 = arith.constant 0 : index
    %318 = vector.load %arg13[%c56, %c0_103] : memref<64x64xf32, #tpu.memory_space<vmem>>, vector<8x64xf32>
    tpu.vector_store %arg13[%c56, %c0_103], %317 {strides = array<i32>} : memref<64x64xf32, #tpu.memory_space<vmem>>, vector<8x64xf32>,
    %c0_104 = arith.constant 0 : index
    %c0_105 = arith.constant 0 : index
    %319 = vector.load %arg13[%c0_104, %c0_105] : memref<64x64xf32, #tpu.memory_space<vmem>>, vector<64x64xf32>
    %c0_106 = arith.constant 0 : index
    %c0_107 = arith.constant 0 : index
    %320 = vector.load %arg6[%c0_106, %c0_107] : memref<64x256xbf16, #tpu.memory_space<vmem>>, vector<64x256xbf16>
    %c0_108 = arith.constant 0 : index
    %c0_109 = arith.constant 0 : index
    %321 = vector.load %arg7[%c0_108, %c0_109] : memref<64x256xbf16, #tpu.memory_space<vmem>>, vector<64x256xbf16>
    %c0_110 = arith.constant 0 : index
    %c0_111 = arith.constant 0 : index
    %322 = vector.load %arg8[%c0_110, %c0_111] : memref<64x256xbf16, #tpu.memory_space<vmem>>, vector<64x256xbf16>
    %c0_112 = arith.constant 0 : index
    %c0_113 = arith.constant 0 : index
    %323 = vector.load %arg9[%c0_112, %c0_113] : memref<1x256xf32, #tpu.memory_space<vmem>>, vector<1x256xf32>
    %324 = vector.extract_strided_slice %319 {offsets = [56, 0], sizes = [8, 64], strides = [1, 1]} : vector<64x64xf32> to vector<8x64xf32>
    %325 = vector.extract_strided_slice %319 {offsets = [48, 0], sizes = [8, 64], strides = [1, 1]} : vector<64x64xf32> to vector<8x64xf32>
    %326 = vector.extract_strided_slice %319 {offsets = [40, 0], sizes = [8, 64], strides = [1, 1]} : vector<64x64xf32> to vector<8x64xf32>
    %327 = vector.extract_strided_slice %319 {offsets = [32, 0], sizes = [8, 64], strides = [1, 1]} : vector<64x64xf32> to vector<8x64xf32>
    %328 = vector.extract_strided_slice %319 {offsets = [24, 0], sizes = [8, 64], strides = [1, 1]} : vector<64x64xf32> to vector<8x64xf32>
    %329 = vector.extract_strided_slice %319 {offsets = [16, 0], sizes = [8, 64], strides = [1, 1]} : vector<64x64xf32> to vector<8x64xf32>
    %330 = vector.extract_strided_slice %319 {offsets = [8, 0], sizes = [8, 64], strides = [1, 1]} : vector<64x64xf32> to vector<8x64xf32>
    %331 = vector.extract_strided_slice %319 {offsets = [0, 0], sizes = [8, 64], strides = [1, 1]} : vector<64x64xf32> to vector<8x64xf32>
    %332 = tpu.concatenate %324, %325, %326, %327, %328, %329, %330, %331 in 0 : vector<8x64xf32>, vector<8x64xf32>, vector<8x64xf32>, vector<8x64xf32>, vector<8x64xf32>, vector<8x64xf32>, vector<8x64xf32>, vector<8x64xf32> -> vector<64x64xf32>
    %333 = arith.truncf %319 : vector<64x64xf32> to vector<64x64xbf16>
    %cst_114 = arith.constant dense<0.000000e+00> : vector<64x256xf32>
    %334 = tpu.matmul %333, %320, %cst_114 {dimension_numbers = #tpu.dot_dimension_numbers<[1], [0], [0], [1], [0, 0, 1, 1], [], []>} : vector<64x64xbf16>, vector<64x256xbf16>, vector<64x256xf32> -> vector<64x256xf32>
    %335 = arith.truncf %332 : vector<64x64xf32> to vector<64x64xbf16>
    %cst_115 = arith.constant dense<0.000000e+00> : vector<64x256xf32>
    %336 = tpu.matmul %335, %321, %cst_115 {dimension_numbers = #tpu.dot_dimension_numbers<[1], [0], [0], [1], [0, 0, 1, 1], [], []>} : vector<64x64xbf16>, vector<64x256xbf16>, vector<64x256xf32> -> vector<64x256xf32>
    %337 = arith.addf %334, %336 : vector<64x256xf32>
    %338 = vector.broadcast %323 : vector<1x256xf32> to vector<64x256xf32>
    %339 = arith.addf %337, %338 : vector<64x256xf32>
    %cst_116 = arith.constant 0.000000e+00 : f32
    %340 = vector.broadcast %cst_116 : f32 to vector<8x64xf32>
    %cst_117 = arith.constant 0.000000e+00 : f32
    %341 = vector.broadcast %cst_117 : f32 to vector<8x64xf32>
    %342 = vector.extract_strided_slice %339 {offsets = [0, 0], sizes = [8, 256], strides = [1, 1]} : vector<64x256xf32> to vector<8x256xf32>
    %343 = arith.truncf %340 : vector<8x64xf32> to vector<8x64xbf16>
    %cst_118 = arith.constant dense<0.000000e+00> : vector<8x256xf32>
    %344 = tpu.matmul %343, %322, %cst_118 {dimension_numbers = #tpu.dot_dimension_numbers<[1], [0], [0], [1], [0, 0, 1, 1], [], []>} : vector<8x64xbf16>, vector<64x256xbf16>, vector<8x256xf32> -> vector<8x256xf32>
    %345 = arith.addf %342, %344 : vector<8x256xf32>
    %346 = vector.extract_strided_slice %345 {offsets = [0, 0], sizes = [8, 64], strides = [1, 1]} : vector<8x256xf32> to vector<8x64xf32>
    %cst_119 = arith.constant 5.000000e-01 : f32
    %347 = vector.broadcast %cst_119 : f32 to vector<8x64xf32>
    %348 = arith.mulf %347, %346 : vector<8x64xf32>
    %349 = math.tanh %348 : vector<8x64xf32>
    %cst_120 = arith.constant 5.000000e-01 : f32
    %350 = vector.broadcast %cst_120 : f32 to vector<8x64xf32>
    %351 = arith.mulf %350, %349 : vector<8x64xf32>
    %cst_121 = arith.constant 5.000000e-01 : f32
    %352 = vector.broadcast %cst_121 : f32 to vector<8x64xf32>
    %353 = arith.addf %351, %352 : vector<8x64xf32>
    %354 = vector.extract_strided_slice %345 {offsets = [0, 64], sizes = [8, 64], strides = [1, 1]} : vector<8x256xf32> to vector<8x64xf32>
    %cst_122 = arith.constant 5.000000e-01 : f32
    %355 = vector.broadcast %cst_122 : f32 to vector<8x64xf32>
    %356 = arith.mulf %355, %354 : vector<8x64xf32>
    %357 = math.tanh %356 : vector<8x64xf32>
    %cst_123 = arith.constant 5.000000e-01 : f32
    %358 = vector.broadcast %cst_123 : f32 to vector<8x64xf32>
    %359 = arith.mulf %358, %357 : vector<8x64xf32>
    %cst_124 = arith.constant 5.000000e-01 : f32
    %360 = vector.broadcast %cst_124 : f32 to vector<8x64xf32>
    %361 = arith.addf %359, %360 : vector<8x64xf32>
    %362 = vector.extract_strided_slice %345 {offsets = [0, 128], sizes = [8, 64], strides = [1, 1]} : vector<8x256xf32> to vector<8x64xf32>
    %363 = math.tanh %362 : vector<8x64xf32>
    %364 = vector.extract_strided_slice %345 {offsets = [0, 192], sizes = [8, 64], strides = [1, 1]} : vector<8x256xf32> to vector<8x64xf32>
    %cst_125 = arith.constant 5.000000e-01 : f32
    %365 = vector.broadcast %cst_125 : f32 to vector<8x64xf32>
    %366 = arith.mulf %365, %364 : vector<8x64xf32>
    %367 = math.tanh %366 : vector<8x64xf32>
    %cst_126 = arith.constant 5.000000e-01 : f32
    %368 = vector.broadcast %cst_126 : f32 to vector<8x64xf32>
    %369 = arith.mulf %368, %367 : vector<8x64xf32>
    %cst_127 = arith.constant 5.000000e-01 : f32
    %370 = vector.broadcast %cst_127 : f32 to vector<8x64xf32>
    %371 = arith.addf %369, %370 : vector<8x64xf32>
    %372 = arith.mulf %361, %341 : vector<8x64xf32>
    %373 = arith.mulf %353, %363 : vector<8x64xf32>
    %374 = arith.addf %372, %373 : vector<8x64xf32>
    %375 = math.tanh %374 : vector<8x64xf32>
    %376 = arith.mulf %371, %375 : vector<8x64xf32>
    %377 = vector.extract_strided_slice %339 {offsets = [8, 0], sizes = [8, 256], strides = [1, 1]} : vector<64x256xf32> to vector<8x256xf32>
    %378 = arith.truncf %376 : vector<8x64xf32> to vector<8x64xbf16>
    %cst_128 = arith.constant dense<0.000000e+00> : vector<8x256xf32>
    %379 = tpu.matmul %378, %322, %cst_128 {dimension_numbers = #tpu.dot_dimension_numbers<[1], [0], [0], [1], [0, 0, 1, 1], [], []>} : vector<8x64xbf16>, vector<64x256xbf16>, vector<8x256xf32> -> vector<8x256xf32>
    %380 = arith.addf %377, %379 : vector<8x256xf32>
    %381 = vector.extract_strided_slice %380 {offsets = [0, 0], sizes = [8, 64], strides = [1, 1]} : vector<8x256xf32> to vector<8x64xf32>
    %cst_129 = arith.constant 5.000000e-01 : f32
    %382 = vector.broadcast %cst_129 : f32 to vector<8x64xf32>
    %383 = arith.mulf %382, %381 : vector<8x64xf32>
    %384 = math.tanh %383 : vector<8x64xf32>
    %cst_130 = arith.constant 5.000000e-01 : f32
    %385 = vector.broadcast %cst_130 : f32 to vector<8x64xf32>
    %386 = arith.mulf %385, %384 : vector<8x64xf32>
    %cst_131 = arith.constant 5.000000e-01 : f32
    %387 = vector.broadcast %cst_131 : f32 to vector<8x64xf32>
    %388 = arith.addf %386, %387 : vector<8x64xf32>
    %389 = vector.extract_strided_slice %380 {offsets = [0, 64], sizes = [8, 64], strides = [1, 1]} : vector<8x256xf32> to vector<8x64xf32>
    %cst_132 = arith.constant 5.000000e-01 : f32
    %390 = vector.broadcast %cst_132 : f32 to vector<8x64xf32>
    %391 = arith.mulf %390, %389 : vector<8x64xf32>
    %392 = math.tanh %391 : vector<8x64xf32>
    %cst_133 = arith.constant 5.000000e-01 : f32
    %393 = vector.broadcast %cst_133 : f32 to vector<8x64xf32>
    %394 = arith.mulf %393, %392 : vector<8x64xf32>
    %cst_134 = arith.constant 5.000000e-01 : f32
    %395 = vector.broadcast %cst_134 : f32 to vector<8x64xf32>
    %396 = arith.addf %394, %395 : vector<8x64xf32>
    %397 = vector.extract_strided_slice %380 {offsets = [0, 128], sizes = [8, 64], strides = [1, 1]} : vector<8x256xf32> to vector<8x64xf32>
    %398 = math.tanh %397 : vector<8x64xf32>
    %399 = vector.extract_strided_slice %380 {offsets = [0, 192], sizes = [8, 64], strides = [1, 1]} : vector<8x256xf32> to vector<8x64xf32>
    %cst_135 = arith.constant 5.000000e-01 : f32
    %400 = vector.broadcast %cst_135 : f32 to vector<8x64xf32>
    %401 = arith.mulf %400, %399 : vector<8x64xf32>
    %402 = math.tanh %401 : vector<8x64xf32>
    %cst_136 = arith.constant 5.000000e-01 : f32
    %403 = vector.broadcast %cst_136 : f32 to vector<8x64xf32>
    %404 = arith.mulf %403, %402 : vector<8x64xf32>
    %cst_137 = arith.constant 5.000000e-01 : f32
    %405 = vector.broadcast %cst_137 : f32 to vector<8x64xf32>
    %406 = arith.addf %404, %405 : vector<8x64xf32>
    %407 = arith.mulf %396, %374 : vector<8x64xf32>
    %408 = arith.mulf %388, %398 : vector<8x64xf32>
    %409 = arith.addf %407, %408 : vector<8x64xf32>
    %410 = math.tanh %409 : vector<8x64xf32>
    %411 = arith.mulf %406, %410 : vector<8x64xf32>
    %412 = vector.extract_strided_slice %339 {offsets = [16, 0], sizes = [8, 256], strides = [1, 1]} : vector<64x256xf32> to vector<8x256xf32>
    %413 = arith.truncf %411 : vector<8x64xf32> to vector<8x64xbf16>
    %cst_138 = arith.constant dense<0.000000e+00> : vector<8x256xf32>
    %414 = tpu.matmul %413, %322, %cst_138 {dimension_numbers = #tpu.dot_dimension_numbers<[1], [0], [0], [1], [0, 0, 1, 1], [], []>} : vector<8x64xbf16>, vector<64x256xbf16>, vector<8x256xf32> -> vector<8x256xf32>
    %415 = arith.addf %412, %414 : vector<8x256xf32>
    %416 = vector.extract_strided_slice %415 {offsets = [0, 0], sizes = [8, 64], strides = [1, 1]} : vector<8x256xf32> to vector<8x64xf32>
    %cst_139 = arith.constant 5.000000e-01 : f32
    %417 = vector.broadcast %cst_139 : f32 to vector<8x64xf32>
    %418 = arith.mulf %417, %416 : vector<8x64xf32>
    %419 = math.tanh %418 : vector<8x64xf32>
    %cst_140 = arith.constant 5.000000e-01 : f32
    %420 = vector.broadcast %cst_140 : f32 to vector<8x64xf32>
    %421 = arith.mulf %420, %419 : vector<8x64xf32>
    %cst_141 = arith.constant 5.000000e-01 : f32
    %422 = vector.broadcast %cst_141 : f32 to vector<8x64xf32>
    %423 = arith.addf %421, %422 : vector<8x64xf32>
    %424 = vector.extract_strided_slice %415 {offsets = [0, 64], sizes = [8, 64], strides = [1, 1]} : vector<8x256xf32> to vector<8x64xf32>
    %cst_142 = arith.constant 5.000000e-01 : f32
    %425 = vector.broadcast %cst_142 : f32 to vector<8x64xf32>
    %426 = arith.mulf %425, %424 : vector<8x64xf32>
    %427 = math.tanh %426 : vector<8x64xf32>
    %cst_143 = arith.constant 5.000000e-01 : f32
    %428 = vector.broadcast %cst_143 : f32 to vector<8x64xf32>
    %429 = arith.mulf %428, %427 : vector<8x64xf32>
    %cst_144 = arith.constant 5.000000e-01 : f32
    %430 = vector.broadcast %cst_144 : f32 to vector<8x64xf32>
    %431 = arith.addf %429, %430 : vector<8x64xf32>
    %432 = vector.extract_strided_slice %415 {offsets = [0, 128], sizes = [8, 64], strides = [1, 1]} : vector<8x256xf32> to vector<8x64xf32>
    %433 = math.tanh %432 : vector<8x64xf32>
    %434 = vector.extract_strided_slice %415 {offsets = [0, 192], sizes = [8, 64], strides = [1, 1]} : vector<8x256xf32> to vector<8x64xf32>
    %cst_145 = arith.constant 5.000000e-01 : f32
    %435 = vector.broadcast %cst_145 : f32 to vector<8x64xf32>
    %436 = arith.mulf %435, %434 : vector<8x64xf32>
    %437 = math.tanh %436 : vector<8x64xf32>
    %cst_146 = arith.constant 5.000000e-01 : f32
    %438 = vector.broadcast %cst_146 : f32 to vector<8x64xf32>
    %439 = arith.mulf %438, %437 : vector<8x64xf32>
    %cst_147 = arith.constant 5.000000e-01 : f32
    %440 = vector.broadcast %cst_147 : f32 to vector<8x64xf32>
    %441 = arith.addf %439, %440 : vector<8x64xf32>
    %442 = arith.mulf %431, %409 : vector<8x64xf32>
    %443 = arith.mulf %423, %433 : vector<8x64xf32>
    %444 = arith.addf %442, %443 : vector<8x64xf32>
    %445 = math.tanh %444 : vector<8x64xf32>
    %446 = arith.mulf %441, %445 : vector<8x64xf32>
    %447 = vector.extract_strided_slice %339 {offsets = [24, 0], sizes = [8, 256], strides = [1, 1]} : vector<64x256xf32> to vector<8x256xf32>
    %448 = arith.truncf %446 : vector<8x64xf32> to vector<8x64xbf16>
    %cst_148 = arith.constant dense<0.000000e+00> : vector<8x256xf32>
    %449 = tpu.matmul %448, %322, %cst_148 {dimension_numbers = #tpu.dot_dimension_numbers<[1], [0], [0], [1], [0, 0, 1, 1], [], []>} : vector<8x64xbf16>, vector<64x256xbf16>, vector<8x256xf32> -> vector<8x256xf32>
    %450 = arith.addf %447, %449 : vector<8x256xf32>
    %451 = vector.extract_strided_slice %450 {offsets = [0, 0], sizes = [8, 64], strides = [1, 1]} : vector<8x256xf32> to vector<8x64xf32>
    %cst_149 = arith.constant 5.000000e-01 : f32
    %452 = vector.broadcast %cst_149 : f32 to vector<8x64xf32>
    %453 = arith.mulf %452, %451 : vector<8x64xf32>
    %454 = math.tanh %453 : vector<8x64xf32>
    %cst_150 = arith.constant 5.000000e-01 : f32
    %455 = vector.broadcast %cst_150 : f32 to vector<8x64xf32>
    %456 = arith.mulf %455, %454 : vector<8x64xf32>
    %cst_151 = arith.constant 5.000000e-01 : f32
    %457 = vector.broadcast %cst_151 : f32 to vector<8x64xf32>
    %458 = arith.addf %456, %457 : vector<8x64xf32>
    %459 = vector.extract_strided_slice %450 {offsets = [0, 64], sizes = [8, 64], strides = [1, 1]} : vector<8x256xf32> to vector<8x64xf32>
    %cst_152 = arith.constant 5.000000e-01 : f32
    %460 = vector.broadcast %cst_152 : f32 to vector<8x64xf32>
    %461 = arith.mulf %460, %459 : vector<8x64xf32>
    %462 = math.tanh %461 : vector<8x64xf32>
    %cst_153 = arith.constant 5.000000e-01 : f32
    %463 = vector.broadcast %cst_153 : f32 to vector<8x64xf32>
    %464 = arith.mulf %463, %462 : vector<8x64xf32>
    %cst_154 = arith.constant 5.000000e-01 : f32
    %465 = vector.broadcast %cst_154 : f32 to vector<8x64xf32>
    %466 = arith.addf %464, %465 : vector<8x64xf32>
    %467 = vector.extract_strided_slice %450 {offsets = [0, 128], sizes = [8, 64], strides = [1, 1]} : vector<8x256xf32> to vector<8x64xf32>
    %468 = math.tanh %467 : vector<8x64xf32>
    %469 = vector.extract_strided_slice %450 {offsets = [0, 192], sizes = [8, 64], strides = [1, 1]} : vector<8x256xf32> to vector<8x64xf32>
    %cst_155 = arith.constant 5.000000e-01 : f32
    %470 = vector.broadcast %cst_155 : f32 to vector<8x64xf32>
    %471 = arith.mulf %470, %469 : vector<8x64xf32>
    %472 = math.tanh %471 : vector<8x64xf32>
    %cst_156 = arith.constant 5.000000e-01 : f32
    %473 = vector.broadcast %cst_156 : f32 to vector<8x64xf32>
    %474 = arith.mulf %473, %472 : vector<8x64xf32>
    %cst_157 = arith.constant 5.000000e-01 : f32
    %475 = vector.broadcast %cst_157 : f32 to vector<8x64xf32>
    %476 = arith.addf %474, %475 : vector<8x64xf32>
    %477 = arith.mulf %466, %444 : vector<8x64xf32>
    %478 = arith.mulf %458, %468 : vector<8x64xf32>
    %479 = arith.addf %477, %478 : vector<8x64xf32>
    %480 = math.tanh %479 : vector<8x64xf32>
    %481 = arith.mulf %476, %480 : vector<8x64xf32>
    %482 = vector.extract_strided_slice %339 {offsets = [32, 0], sizes = [8, 256], strides = [1, 1]} : vector<64x256xf32> to vector<8x256xf32>
    %483 = arith.truncf %481 : vector<8x64xf32> to vector<8x64xbf16>
    %cst_158 = arith.constant dense<0.000000e+00> : vector<8x256xf32>
    %484 = tpu.matmul %483, %322, %cst_158 {dimension_numbers = #tpu.dot_dimension_numbers<[1], [0], [0], [1], [0, 0, 1, 1], [], []>} : vector<8x64xbf16>, vector<64x256xbf16>, vector<8x256xf32> -> vector<8x256xf32>
    %485 = arith.addf %482, %484 : vector<8x256xf32>
    %486 = vector.extract_strided_slice %485 {offsets = [0, 0], sizes = [8, 64], strides = [1, 1]} : vector<8x256xf32> to vector<8x64xf32>
    %cst_159 = arith.constant 5.000000e-01 : f32
    %487 = vector.broadcast %cst_159 : f32 to vector<8x64xf32>
    %488 = arith.mulf %487, %486 : vector<8x64xf32>
    %489 = math.tanh %488 : vector<8x64xf32>
    %cst_160 = arith.constant 5.000000e-01 : f32
    %490 = vector.broadcast %cst_160 : f32 to vector<8x64xf32>
    %491 = arith.mulf %490, %489 : vector<8x64xf32>
    %cst_161 = arith.constant 5.000000e-01 : f32
    %492 = vector.broadcast %cst_161 : f32 to vector<8x64xf32>
    %493 = arith.addf %491, %492 : vector<8x64xf32>
    %494 = vector.extract_strided_slice %485 {offsets = [0, 64], sizes = [8, 64], strides = [1, 1]} : vector<8x256xf32> to vector<8x64xf32>
    %cst_162 = arith.constant 5.000000e-01 : f32
    %495 = vector.broadcast %cst_162 : f32 to vector<8x64xf32>
    %496 = arith.mulf %495, %494 : vector<8x64xf32>
    %497 = math.tanh %496 : vector<8x64xf32>
    %cst_163 = arith.constant 5.000000e-01 : f32
    %498 = vector.broadcast %cst_163 : f32 to vector<8x64xf32>
    %499 = arith.mulf %498, %497 : vector<8x64xf32>
    %cst_164 = arith.constant 5.000000e-01 : f32
    %500 = vector.broadcast %cst_164 : f32 to vector<8x64xf32>
    %501 = arith.addf %499, %500 : vector<8x64xf32>
    %502 = vector.extract_strided_slice %485 {offsets = [0, 128], sizes = [8, 64], strides = [1, 1]} : vector<8x256xf32> to vector<8x64xf32>
    %503 = math.tanh %502 : vector<8x64xf32>
    %504 = vector.extract_strided_slice %485 {offsets = [0, 192], sizes = [8, 64], strides = [1, 1]} : vector<8x256xf32> to vector<8x64xf32>
    %cst_165 = arith.constant 5.000000e-01 : f32
    %505 = vector.broadcast %cst_165 : f32 to vector<8x64xf32>
    %506 = arith.mulf %505, %504 : vector<8x64xf32>
    %507 = math.tanh %506 : vector<8x64xf32>
    %cst_166 = arith.constant 5.000000e-01 : f32
    %508 = vector.broadcast %cst_166 : f32 to vector<8x64xf32>
    %509 = arith.mulf %508, %507 : vector<8x64xf32>
    %cst_167 = arith.constant 5.000000e-01 : f32
    %510 = vector.broadcast %cst_167 : f32 to vector<8x64xf32>
    %511 = arith.addf %509, %510 : vector<8x64xf32>
    %512 = arith.mulf %501, %479 : vector<8x64xf32>
    %513 = arith.mulf %493, %503 : vector<8x64xf32>
    %514 = arith.addf %512, %513 : vector<8x64xf32>
    %515 = math.tanh %514 : vector<8x64xf32>
    %516 = arith.mulf %511, %515 : vector<8x64xf32>
    %517 = vector.extract_strided_slice %339 {offsets = [40, 0], sizes = [8, 256], strides = [1, 1]} : vector<64x256xf32> to vector<8x256xf32>
    %518 = arith.truncf %516 : vector<8x64xf32> to vector<8x64xbf16>
    %cst_168 = arith.constant dense<0.000000e+00> : vector<8x256xf32>
    %519 = tpu.matmul %518, %322, %cst_168 {dimension_numbers = #tpu.dot_dimension_numbers<[1], [0], [0], [1], [0, 0, 1, 1], [], []>} : vector<8x64xbf16>, vector<64x256xbf16>, vector<8x256xf32> -> vector<8x256xf32>
    %520 = arith.addf %517, %519 : vector<8x256xf32>
    %521 = vector.extract_strided_slice %520 {offsets = [0, 0], sizes = [8, 64], strides = [1, 1]} : vector<8x256xf32> to vector<8x64xf32>
    %cst_169 = arith.constant 5.000000e-01 : f32
    %522 = vector.broadcast %cst_169 : f32 to vector<8x64xf32>
    %523 = arith.mulf %522, %521 : vector<8x64xf32>
    %524 = math.tanh %523 : vector<8x64xf32>
    %cst_170 = arith.constant 5.000000e-01 : f32
    %525 = vector.broadcast %cst_170 : f32 to vector<8x64xf32>
    %526 = arith.mulf %525, %524 : vector<8x64xf32>
    %cst_171 = arith.constant 5.000000e-01 : f32
    %527 = vector.broadcast %cst_171 : f32 to vector<8x64xf32>
    %528 = arith.addf %526, %527 : vector<8x64xf32>
    %529 = vector.extract_strided_slice %520 {offsets = [0, 64], sizes = [8, 64], strides = [1, 1]} : vector<8x256xf32> to vector<8x64xf32>
    %cst_172 = arith.constant 5.000000e-01 : f32
    %530 = vector.broadcast %cst_172 : f32 to vector<8x64xf32>
    %531 = arith.mulf %530, %529 : vector<8x64xf32>
    %532 = math.tanh %531 : vector<8x64xf32>
    %cst_173 = arith.constant 5.000000e-01 : f32
    %533 = vector.broadcast %cst_173 : f32 to vector<8x64xf32>
    %534 = arith.mulf %533, %532 : vector<8x64xf32>
    %cst_174 = arith.constant 5.000000e-01 : f32
    %535 = vector.broadcast %cst_174 : f32 to vector<8x64xf32>
    %536 = arith.addf %534, %535 : vector<8x64xf32>
    %537 = vector.extract_strided_slice %520 {offsets = [0, 128], sizes = [8, 64], strides = [1, 1]} : vector<8x256xf32> to vector<8x64xf32>
    %538 = math.tanh %537 : vector<8x64xf32>
    %539 = vector.extract_strided_slice %520 {offsets = [0, 192], sizes = [8, 64], strides = [1, 1]} : vector<8x256xf32> to vector<8x64xf32>
    %cst_175 = arith.constant 5.000000e-01 : f32
    %540 = vector.broadcast %cst_175 : f32 to vector<8x64xf32>
    %541 = arith.mulf %540, %539 : vector<8x64xf32>
    %542 = math.tanh %541 : vector<8x64xf32>
    %cst_176 = arith.constant 5.000000e-01 : f32
    %543 = vector.broadcast %cst_176 : f32 to vector<8x64xf32>
    %544 = arith.mulf %543, %542 : vector<8x64xf32>
    %cst_177 = arith.constant 5.000000e-01 : f32
    %545 = vector.broadcast %cst_177 : f32 to vector<8x64xf32>
    %546 = arith.addf %544, %545 : vector<8x64xf32>
    %547 = arith.mulf %536, %514 : vector<8x64xf32>
    %548 = arith.mulf %528, %538 : vector<8x64xf32>
    %549 = arith.addf %547, %548 : vector<8x64xf32>
    %550 = math.tanh %549 : vector<8x64xf32>
    %551 = arith.mulf %546, %550 : vector<8x64xf32>
    %552 = vector.extract_strided_slice %339 {offsets = [48, 0], sizes = [8, 256], strides = [1, 1]} : vector<64x256xf32> to vector<8x256xf32>
    %553 = arith.truncf %551 : vector<8x64xf32> to vector<8x64xbf16>
    %cst_178 = arith.constant dense<0.000000e+00> : vector<8x256xf32>
    %554 = tpu.matmul %553, %322, %cst_178 {dimension_numbers = #tpu.dot_dimension_numbers<[1], [0], [0], [1], [0, 0, 1, 1], [], []>} : vector<8x64xbf16>, vector<64x256xbf16>, vector<8x256xf32> -> vector<8x256xf32>
    %555 = arith.addf %552, %554 : vector<8x256xf32>
    %556 = vector.extract_strided_slice %555 {offsets = [0, 0], sizes = [8, 64], strides = [1, 1]} : vector<8x256xf32> to vector<8x64xf32>
    %cst_179 = arith.constant 5.000000e-01 : f32
    %557 = vector.broadcast %cst_179 : f32 to vector<8x64xf32>
    %558 = arith.mulf %557, %556 : vector<8x64xf32>
    %559 = math.tanh %558 : vector<8x64xf32>
    %cst_180 = arith.constant 5.000000e-01 : f32
    %560 = vector.broadcast %cst_180 : f32 to vector<8x64xf32>
    %561 = arith.mulf %560, %559 : vector<8x64xf32>
    %cst_181 = arith.constant 5.000000e-01 : f32
    %562 = vector.broadcast %cst_181 : f32 to vector<8x64xf32>
    %563 = arith.addf %561, %562 : vector<8x64xf32>
    %564 = vector.extract_strided_slice %555 {offsets = [0, 64], sizes = [8, 64], strides = [1, 1]} : vector<8x256xf32> to vector<8x64xf32>
    %cst_182 = arith.constant 5.000000e-01 : f32
    %565 = vector.broadcast %cst_182 : f32 to vector<8x64xf32>
    %566 = arith.mulf %565, %564 : vector<8x64xf32>
    %567 = math.tanh %566 : vector<8x64xf32>
    %cst_183 = arith.constant 5.000000e-01 : f32
    %568 = vector.broadcast %cst_183 : f32 to vector<8x64xf32>
    %569 = arith.mulf %568, %567 : vector<8x64xf32>
    %cst_184 = arith.constant 5.000000e-01 : f32
    %570 = vector.broadcast %cst_184 : f32 to vector<8x64xf32>
    %571 = arith.addf %569, %570 : vector<8x64xf32>
    %572 = vector.extract_strided_slice %555 {offsets = [0, 128], sizes = [8, 64], strides = [1, 1]} : vector<8x256xf32> to vector<8x64xf32>
    %573 = math.tanh %572 : vector<8x64xf32>
    %574 = vector.extract_strided_slice %555 {offsets = [0, 192], sizes = [8, 64], strides = [1, 1]} : vector<8x256xf32> to vector<8x64xf32>
    %cst_185 = arith.constant 5.000000e-01 : f32
    %575 = vector.broadcast %cst_185 : f32 to vector<8x64xf32>
    %576 = arith.mulf %575, %574 : vector<8x64xf32>
    %577 = math.tanh %576 : vector<8x64xf32>
    %cst_186 = arith.constant 5.000000e-01 : f32
    %578 = vector.broadcast %cst_186 : f32 to vector<8x64xf32>
    %579 = arith.mulf %578, %577 : vector<8x64xf32>
    %cst_187 = arith.constant 5.000000e-01 : f32
    %580 = vector.broadcast %cst_187 : f32 to vector<8x64xf32>
    %581 = arith.addf %579, %580 : vector<8x64xf32>
    %582 = arith.mulf %571, %549 : vector<8x64xf32>
    %583 = arith.mulf %563, %573 : vector<8x64xf32>
    %584 = arith.addf %582, %583 : vector<8x64xf32>
    %585 = math.tanh %584 : vector<8x64xf32>
    %586 = arith.mulf %581, %585 : vector<8x64xf32>
    %587 = vector.extract_strided_slice %339 {offsets = [56, 0], sizes = [8, 256], strides = [1, 1]} : vector<64x256xf32> to vector<8x256xf32>
    %588 = arith.truncf %586 : vector<8x64xf32> to vector<8x64xbf16>
    %cst_188 = arith.constant dense<0.000000e+00> : vector<8x256xf32>
    %589 = tpu.matmul %588, %322, %cst_188 {dimension_numbers = #tpu.dot_dimension_numbers<[1], [0], [0], [1], [0, 0, 1, 1], [], []>} : vector<8x64xbf16>, vector<64x256xbf16>, vector<8x256xf32> -> vector<8x256xf32>
    %590 = arith.addf %587, %589 : vector<8x256xf32>
    %591 = vector.extract_strided_slice %590 {offsets = [0, 0], sizes = [8, 64], strides = [1, 1]} : vector<8x256xf32> to vector<8x64xf32>
    %cst_189 = arith.constant 5.000000e-01 : f32
    %592 = vector.broadcast %cst_189 : f32 to vector<8x64xf32>
    %593 = arith.mulf %592, %591 : vector<8x64xf32>
    %594 = math.tanh %593 : vector<8x64xf32>
    %cst_190 = arith.constant 5.000000e-01 : f32
    %595 = vector.broadcast %cst_190 : f32 to vector<8x64xf32>
    %596 = arith.mulf %595, %594 : vector<8x64xf32>
    %cst_191 = arith.constant 5.000000e-01 : f32
    %597 = vector.broadcast %cst_191 : f32 to vector<8x64xf32>
    %598 = arith.addf %596, %597 : vector<8x64xf32>
    %599 = vector.extract_strided_slice %590 {offsets = [0, 64], sizes = [8, 64], strides = [1, 1]} : vector<8x256xf32> to vector<8x64xf32>
    %cst_192 = arith.constant 5.000000e-01 : f32
    %600 = vector.broadcast %cst_192 : f32 to vector<8x64xf32>
    %601 = arith.mulf %600, %599 : vector<8x64xf32>
    %602 = math.tanh %601 : vector<8x64xf32>
    %cst_193 = arith.constant 5.000000e-01 : f32
    %603 = vector.broadcast %cst_193 : f32 to vector<8x64xf32>
    %604 = arith.mulf %603, %602 : vector<8x64xf32>
    %cst_194 = arith.constant 5.000000e-01 : f32
    %605 = vector.broadcast %cst_194 : f32 to vector<8x64xf32>
    %606 = arith.addf %604, %605 : vector<8x64xf32>
    %607 = vector.extract_strided_slice %590 {offsets = [0, 128], sizes = [8, 64], strides = [1, 1]} : vector<8x256xf32> to vector<8x64xf32>
    %608 = math.tanh %607 : vector<8x64xf32>
    %609 = vector.extract_strided_slice %590 {offsets = [0, 192], sizes = [8, 64], strides = [1, 1]} : vector<8x256xf32> to vector<8x64xf32>
    %cst_195 = arith.constant 5.000000e-01 : f32
    %610 = vector.broadcast %cst_195 : f32 to vector<8x64xf32>
    %611 = arith.mulf %610, %609 : vector<8x64xf32>
    %612 = math.tanh %611 : vector<8x64xf32>
    %cst_196 = arith.constant 5.000000e-01 : f32
    %613 = vector.broadcast %cst_196 : f32 to vector<8x64xf32>
    %614 = arith.mulf %613, %612 : vector<8x64xf32>
    %cst_197 = arith.constant 5.000000e-01 : f32
    %615 = vector.broadcast %cst_197 : f32 to vector<8x64xf32>
    %616 = arith.addf %614, %615 : vector<8x64xf32>
    %617 = arith.mulf %606, %584 : vector<8x64xf32>
    %618 = arith.mulf %598, %608 : vector<8x64xf32>
    %619 = arith.addf %617, %618 : vector<8x64xf32>
    %620 = math.tanh %619 : vector<8x64xf32>
    %621 = arith.mulf %616, %620 : vector<8x64xf32>
    %622 = arith.truncf %621 : vector<8x64xf32> to vector<8x64xbf16>
    %c0_198 = arith.constant 0 : index
    %c0_199 = arith.constant 0 : index
    %623 = vector.load %arg10[%c0_198, %c0_199] : memref<64x128xbf16, #tpu.memory_space<vmem>>, vector<64x128xbf16>
    %cst_200 = arith.constant dense<0.000000e+00> : vector<8x128xf32>
    %624 = tpu.matmul %622, %623, %cst_200 {dimension_numbers = #tpu.dot_dimension_numbers<[1], [0], [0], [1], [0, 0, 1, 1], [], []>} : vector<8x64xbf16>, vector<64x128xbf16>, vector<8x128xf32> -> vector<8x128xf32>
    %c0_201 = arith.constant 0 : index
    %c0_202 = arith.constant 0 : index
    %625 = vector.load %arg11[%c0_201, %c0_202] : memref<1x128xf32, #tpu.memory_space<vmem>>, vector<1x128xf32>
    %626 = vector.broadcast %625 : vector<1x128xf32> to vector<8x128xf32>
    %627 = arith.addf %624, %626 : vector<8x128xf32>
    %c0_203 = arith.constant 0 : index
    %c0_204 = arith.constant 0 : index
    %628 = vector.load %arg12[%c0_203, %c0_204] : memref<8x128xf32, #tpu.memory_space<vmem>>, vector<8x128xf32>
    tpu.vector_store %arg12[%c0_203, %c0_204], %627 {strides = array<i32>} : memref<8x128xf32, #tpu.memory_space<vmem>>, vector<8x128xf32>,
    return
  }
}

</mosaic_0001>

<llo_original>
// kernel: tpu_custom_call.1
$region0: #{tpu_custom_call.1}
  #allocation0 [shape = 'u32[]', space=smem, size = 0x4, offset = 0x4, fixed_abs, tag = 'smem constant byte address 0x4 - core index']
  #allocation1 [shape = 'u32[144,128]{1,0:T(1,128)}', space=vmem, size = 0x12000, scoped, tag = 'internal scratch']
  #allocation2 [shape = 'f32[64,64]{1,0:T(8,128)}', space=vmem, size = 0x8000, scoped, tag = 'scratch operand']
  %s0 = inlined_call_operand.vmem [shape: s32[64,1], index: 0, kind: input, shape index: {}]
  %s1 = inlined_call_operand.vmem [shape: bf16[128,32], index: 1, kind: input, shape index: {}]
  %s2 = inlined_call_operand.hbm [shape: bf16[32,256], index: 2, kind: input, shape index: {}]
  %s3 = inlined_call_operand.hbm [shape: bf16[32,256], index: 3, kind: input, shape index: {}]
  %s4 = inlined_call_operand.vmem [shape: bf16[64,256], index: 4, kind: input, shape index: {}]
  %s5 = inlined_call_operand.hbm [shape: f32[1,256], index: 5, kind: input, shape index: {}]
  %s6 = inlined_call_operand.vmem [shape: bf16[64,256], index: 6, kind: input, shape index: {}]
  %s7 = inlined_call_operand.hbm [shape: bf16[64,256], index: 7, kind: input, shape index: {}]
  %s8 = inlined_call_operand.hbm [shape: bf16[64,256], index: 8, kind: input, shape index: {}]
  %s9 = inlined_call_operand.hbm [shape: f32[1,256], index: 9, kind: input, shape index: {}]
  %s10 = inlined_call_operand.vmem [shape: bf16[64,128], index: 10, kind: input, shape index: {}]
  %s11 = inlined_call_operand.vmem [shape: f32[1,128], index: 11, kind: input, shape index: {}]
  %s12 = inlined_call_operand.hbm [shape: f32[8,128], index: 12, kind: output, shape index: {}]
  %s13 = sld [smem:[#allocation0]]
  $region82: #{tpu_custom_call.1} parent=0
    _
  %s15 = ssub.s32 1, %s13
  %s16 = scalar_select 0, %s15, %s13
  $region1: #{tpu_custom_call.1} parent=0
    #allocation3 [shape = 'u8[16384]{0}', space=vmem, size = 0x4000, scoped, tag = 'input window, operand 2, single buffered']
    #allocation4 [shape = 's32[1]{0}', space=sflag, size = 0x4, scoped, tag = 'scoped memory for tpu_custom_call.1']
    #allocation5 [shape = 's32[1]{0}', space=sflag, size = 0x4, scoped, tag = 'scoped memory for tpu_custom_call.1']
    #allocation6 [shape = 'u8[16384]{0}', space=vmem, size = 0x4000, scoped, tag = 'input window, operand 3, single buffered']
    #allocation7 [shape = 's32[1]{0}', space=sflag, size = 0x4, scoped, tag = 'scoped memory for tpu_custom_call.1']
    #allocation8 [shape = 'u8[1024]{0}', space=vmem, size = 0x400, scoped, tag = 'input window, operand 5, single buffered']
    #allocation9 [shape = 'u8[32768]{0}', space=vmem, size = 0x8000, scoped, tag = 'input window, operand 7, single buffered']
    #allocation10 [shape = 's32[1]{0}', space=sflag, size = 0x4, scoped, tag = 'scoped memory for tpu_custom_call.1']
    #allocation11 [shape = 'u8[32768]{0}', space=vmem, size = 0x8000, scoped, tag = 'input window, operand 8, single buffered']
    #allocation12 [shape = 'u8[1024]{0}', space=vmem, size = 0x400, scoped, tag = 'input window, operand 9, single buffered']
    #allocation13 [shape = 's32[1]{0}', space=sflag, size = 0x4, scoped, tag = 'scoped memory for tpu_custom_call.1']
    #allocation14 [shape = 'u8[4096]{0}', space=vmem, size = 0x1000, scoped, tag = 'output window, operand 0, single buffered']
    %17 = vsyncpa [#allocation4], 0
    %18 = vsyncpa [#allocation7], 0
    %19 = vsyncpa [#allocation10], 0
    %20 = vsyncpa [#allocation13], 0
    %21 = vsyncpa [#allocation5], 0
    // Predicated region
    $region2: #{tpu_custom_call.1} parent=1 // pred_check
      _
    $region3: #{tpu_custom_call.1} parent=1 // pred_check_branch
      %23 = sbr.rel (0) target = $region5
    $region4: #{tpu_custom_call.1} parent=1 // pred_region
      _
    $region5: #{tpu_custom_call.1} parent=1 // pred_fallthru
      _
    // Predicated region
    $region6: #{tpu_custom_call.1} parent=1 // pred_check
      _
    $region7: #{tpu_custom_call.1} parent=1 // pred_check_branch
      %25 = sbr.rel (0) target = $region9
    $region8: #{tpu_custom_call.1} parent=1 // pred_region
      _
    $region9: #{tpu_custom_call.1} parent=1 // pred_fallthru
      _
    // Predicated region
    $region10: #{tpu_custom_call.1} parent=1 // pred_check
      _
    $region11: #{tpu_custom_call.1} parent=1 // pred_check_branch
      %27 = sbr.rel (0) target = $region13
    $region12: #{tpu_custom_call.1} parent=1 // pred_region
      %s29 = ssub.s32 512, 512
      %30 = vsyncadd [#allocation4], %s29
      %s31 = sshll.u32 [#allocation3], 4
      %s32 = int_to_ptr.vmem [resolvable:$true] %s31
      %37 = dma.hbm_to_vmem [thread:$0]  %s2, 512, %s32, [#allocation4], 128, 128, 8
    $region13: #{tpu_custom_call.1} parent=1 // pred_fallthru
      _
    // Predicated region
    $region14: #{tpu_custom_call.1} parent=1 // pred_check
      _
    $region15: #{tpu_custom_call.1} parent=1 // pred_check_branch
      %39 = sbr.rel (0) target = $region17
    $region16: #{tpu_custom_call.1} parent=1 // pred_region
      %s41 = ssub.s32 512, 512
      %42 = vsyncadd [#allocation7], %s41
      %s43 = sshll.u32 [#allocation6], 4
      %s44 = int_to_ptr.vmem [resolvable:$true] %s43
      %49 = dma.hbm_to_vmem [thread:$0]  %s3, 512, %s44, [#allocation7], 128, 128, 8
    $region17: #{tpu_custom_call.1} parent=1 // pred_fallthru
      _
    // Predicated region
    $region18: #{tpu_custom_call.1} parent=1 // pred_check
      _
    $region19: #{tpu_custom_call.1} parent=1 // pred_check_branch
      %51 = sbr.rel (0) target = $region21
    $region20: #{tpu_custom_call.1} parent=1 // pred_region
      _
    $region21: #{tpu_custom_call.1} parent=1 // pred_fallthru
      _
    // Predicated region
    $region22: #{tpu_custom_call.1} parent=1 // pred_check
      _
    $region23: #{tpu_custom_call.1} parent=1 // pred_check_branch
      %53 = sbr.rel (0) target = $region25
    $region24: #{tpu_custom_call.1} parent=1 // pred_region
      %s55 = ssub.s32 32, 32
      %56 = vsyncadd [#allocation7], %s55
      %s58 = sshll.u32 [#allocation8], 4
      %s59 = int_to_ptr.vmem [resolvable:$true] %s58
      %61 = dma.hbm_to_vmem [thread:$0]  %s5, 32, %s59, [#allocation7]
    $region25: #{tpu_custom_call.1} parent=1 // pred_fallthru
      _
    // Predicated region
    $region26: #{tpu_custom_call.1} parent=1 // pred_check
      _
    $region27: #{tpu_custom_call.1} parent=1 // pred_check_branch
      %63 = sbr.rel (0) target = $region29
    $region28: #{tpu_custom_call.1} parent=1 // pred_region
      _
    $region29: #{tpu_custom_call.1} parent=1 // pred_fallthru
      _
    // Predicated region
    $region30: #{tpu_custom_call.1} parent=1 // pred_check
      _
    $region31: #{tpu_custom_call.1} parent=1 // pred_check_branch
      %65 = sbr.rel (0) target = $region33
    $region32: #{tpu_custom_call.1} parent=1 // pred_region
      %s67 = ssub.s32 1024, 1024
      %68 = vsyncadd [#allocation10], %s67
      %s69 = sshll.u32 [#allocation9], 4
      %s70 = int_to_ptr.vmem [resolvable:$true] %s69
      %75 = dma.hbm_to_vmem [thread:$0]  %s7, 1024, %s70, [#allocation10], 128, 128, 8
    $region33: #{tpu_custom_call.1} parent=1 // pred_fallthru
      _
    // Predicated region
    $region34: #{tpu_custom_call.1} parent=1 // pred_check
      _
    $region35: #{tpu_custom_call.1} parent=1 // pred_check_branch
      %77 = sbr.rel (0) target = $region37
    $region36: #{tpu_custom_call.1} parent=1 // pred_region
      %s79 = ssub.s32 1024, 1024
      %80 = vsyncadd [#allocation10], %s79
      %s81 = sshll.u32 [#allocation11], 4
      %s82 = int_to_ptr.vmem [resolvable:$true] %s81
      %87 = dma.hbm_to_vmem [thread:$0]  %s8, 1024, %s82, [#allocation10], 128, 128, 8
    $region37: #{tpu_custom_call.1} parent=1 // pred_fallthru
      _
    // Predicated region
    $region38: #{tpu_custom_call.1} parent=1 // pred_check
      _
    $region39: #{tpu_custom_call.1} parent=1 // pred_check_branch
      %89 = sbr.rel (0) target = $region41
    $region40: #{tpu_custom_call.1} parent=1 // pred_region
      %s91 = ssub.s32 32, 32
      %92 = vsyncadd [#allocation13], %s91
      %s94 = sshll.u32 [#allocation12], 4
      %s95 = int_to_ptr.vmem [resolvable:$true] %s94
      %97 = dma.hbm_to_vmem [thread:$0]  %s9, 32, %s95, [#allocation13]
    $region41: #{tpu_custom_call.1} parent=1 // pred_fallthru
      _
    // Predicated region
    $region42: #{tpu_custom_call.1} parent=1 // pred_check
      _
    $region43: #{tpu_custom_call.1} parent=1 // pred_check_branch
      %99 = sbr.rel (0) target = $region45
    $region44: #{tpu_custom_call.1} parent=1 // pred_region
      _
    $region45: #{tpu_custom_call.1} parent=1 // pred_fallthru
      _
    // Predicated region
    $region46: #{tpu_custom_call.1} parent=1 // pred_check
      _
    $region47: #{tpu_custom_call.1} parent=1 // pred_check_branch
      %101 = sbr.rel (0) target = $region49
    $region48: #{tpu_custom_call.1} parent=1 // pred_region
      _
    $region49: #{tpu_custom_call.1} parent=1 // pred_fallthru
      _
    // Predicated region
    $region50: #{tpu_custom_call.1} parent=1 // pred_check
      _
    $region51: #{tpu_custom_call.1} parent=1 // pred_check_branch
      %103 = sbr.rel (0) target = $region53
    $region52: #{tpu_custom_call.1} parent=1 // pred_region
      %104 = dma.done [#allocation4], 512
    $region53: #{tpu_custom_call.1} parent=1 // pred_fallthru
      _
    // Predicated region
    $region54: #{tpu_custom_call.1} parent=1 // pred_check
      _
    $region55: #{tpu_custom_call.1} parent=1 // pred_check_branch
      %106 = sbr.rel (0) target = $region57
    $region56: #{tpu_custom_call.1} parent=1 // pred_region
      %107 = dma.done [#allocation7], 512
    $region57: #{tpu_custom_call.1} parent=1 // pred_fallthru
      _
    // Predicated region
    $region58: #{tpu_custom_call.1} parent=1 // pred_check
      _
    $region59: #{tpu_custom_call.1} parent=1 // pred_check_branch
      %109 = sbr.rel (0) target = $region61
    $region60: #{tpu_custom_call.1} parent=1 // pred_region
      %110 = dma.done [#allocation7], 32
    $region61: #{tpu_custom_call.1} parent=1 // pred_fallthru
      _
    // Predicated region
    $region62: #{tpu_custom_call.1} parent=1 // pred_check
      _
    $region63: #{tpu_custom_call.1} parent=1 // pred_check_branch
      %112 = sbr.rel (0) target = $region65
    $region64: #{tpu_custom_call.1} parent=1 // pred_region
      %113 = dma.done [#allocation10], 1024
    $region65: #{tpu_custom_call.1} parent=1 // pred_fallthru
      _
    // Predicated region
    $region66: #{tpu_custom_call.1} parent=1 // pred_check
      _
    $region67: #{tpu_custom_call.1} parent=1 // pred_check_branch
      %115 = sbr.rel (0) target = $region69
    $region68: #{tpu_custom_call.1} parent=1 // pred_region
      %116 = dma.done [#allocation10], 1024
    $region69: #{tpu_custom_call.1} parent=1 // pred_fallthru
      _
    // Predicated region
    $region70: #{tpu_custom_call.1} parent=1 // pred_check
      _
    $region71: #{tpu_custom_call.1} parent=1 // pred_check_branch
      %118 = sbr.rel (0) target = $region73
    $region72: #{tpu_custom_call.1} parent=1 // pred_region
      %119 = dma.done [#allocation13], 32
    $region73: #{tpu_custom_call.1} parent=1 // pred_fallthru
      _
    %v121 = vld [vmem:[%s0] sm:$0xff]
    %v122 = vld [vmem:[%s0 + $0x8] sm:$0xff]
    %v123 = vld [vmem:[%s0 + $0x10] sm:$0xff]
    %v124 = vld [vmem:[%s0 + $0x18] sm:$0xff]
    %v125 = vld [vmem:[%s0 + $0x20] sm:$0xff]
    %v126 = vld [vmem:[%s0 + $0x28] sm:$0xff]
    %v127 = vld [vmem:[%s0 + $0x30] sm:$0xff]
    %v128 = vld [vmem:[%s0 + $0x38] sm:$0xff]
    %v129 = vlaneseq
    %v130 = vand.u32 %v129, 127
    %131 = vset.pattern.permute.xlu0 0
    %132 = vperm.xlu0 %131, %v121
    %v133 = vpop.permute.xlu0 %132
    %134 = vset.pattern.permute.xlu0 0
    %135 = vperm.xlu0 %134, %v122
    %v136 = vpop.permute.xlu0 %135
    %137 = vset.pattern.permute.xlu0 0
    %138 = vperm.xlu0 %137, %v123
    %v139 = vpop.permute.xlu0 %138
    %140 = vset.pattern.permute.xlu0 0
    %141 = vperm.xlu0 %140, %v124
    %v142 = vpop.permute.xlu0 %141
    %143 = vset.pattern.permute.xlu0 0
    %144 = vperm.xlu0 %143, %v125
    %v145 = vpop.permute.xlu0 %144
    %146 = vset.pattern.permute.xlu0 0
    %147 = vperm.xlu0 %146, %v126
    %v148 = vpop.permute.xlu0 %147
    %149 = vset.pattern.permute.xlu0 0
    %150 = vperm.xlu0 %149, %v127
    %v151 = vpop.permute.xlu0 %150
    %152 = vset.pattern.permute.xlu0 0
    %153 = vperm.xlu0 %152, %v128
    %v154 = vpop.permute.xlu0 %153
    %vm155 = vcmp.eq.s32.totalorder %v130, %v133
    %vm156 = vcmp.eq.s32.totalorder %v130, %v136
    %vm157 = vcmp.eq.s32.totalorder %v130, %v139
    %vm158 = vcmp.eq.s32.totalorder %v130, %v142
    %vm159 = vcmp.eq.s32.totalorder %v130, %v145
    %vm160 = vcmp.eq.s32.totalorder %v130, %v148
    %vm161 = vcmp.eq.s32.totalorder %v130, %v151
    %vm162 = vcmp.eq.s32.totalorder %v130, %v154
    %v163 = vsel %vm155, 1, 0
    %v164 = vsel %vm156, 1, 0
    %v165 = vsel %vm157, 1, 0
    %v166 = vsel %vm158, 1, 0
    %v167 = vsel %vm159, 1, 0
    %v168 = vsel %vm160, 1, 0
    %v169 = vsel %vm161, 1, 0
    %v170 = vsel %vm162, 1, 0
    %v171 = vcvt.s32.f32 %v163
    %v172 = vcvt.s32.f32 %v164
    %v173 = vcvt.s32.f32 %v165
    %v174 = vcvt.s32.f32 %v166
    %v175 = vcvt.s32.f32 %v167
    %v176 = vcvt.s32.f32 %v168
    %v177 = vcvt.s32.f32 %v169
    %v178 = vcvt.s32.f32 %v170
    %v179 = vpack.c.bf16 %v172, %v171
    %v180 = vpack.c.bf16 %v174, %v173
    %v181 = vpack.c.bf16 %v176, %v175
    %v182 = vpack.c.bf16 %v178, %v177
    %v183 = vld [vmem:[%s1] sm:$0xf]
    %v184 = vld [vmem:[%s1 + $0x4] sm:$0xf]
    %v185 = vld [vmem:[%s1 + $0x8] sm:$0xf]
    %v186 = vld [vmem:[%s1 + $0xc] sm:$0xf]
    %v187 = vld [vmem:[%s1 + $0x10] sm:$0xf]
    %v188 = vld [vmem:[%s1 + $0x14] sm:$0xf]
    %v189 = vld [vmem:[%s1 + $0x18] sm:$0xf]
    %v190 = vld [vmem:[%s1 + $0x1c] sm:$0xf]
    %v191 = vld [vmem:[%s1 + $0x20] sm:$0xf]
    %v192 = vld [vmem:[%s1 + $0x24] sm:$0xf]
    %v193 = vld [vmem:[%s1 + $0x28] sm:$0xf]
    %v194 = vld [vmem:[%s1 + $0x2c] sm:$0xf]
    %v195 = vld [vmem:[%s1 + $0x30] sm:$0xf]
    %v196 = vld [vmem:[%s1 + $0x34] sm:$0xf]
    %v197 = vld [vmem:[%s1 + $0x38] sm:$0xf]
    %v198 = vld [vmem:[%s1 + $0x3c] sm:$0xf]
    %v215 = vunpack.c.l.b16 %v183
    %v216 = vunpack.c.l.b16 %v184
    %v217 = vunpack.c.l.b16 %v185
    %v218 = vunpack.c.l.b16 %v186
    %v219 = vunpack.c.l.b16 %v187
    %v220 = vunpack.c.l.b16 %v188
    %v221 = vunpack.c.l.b16 %v189
    %v222 = vunpack.c.l.b16 %v190
    %v223 = vunpack.c.l.b16 %v191
    %v224 = vunpack.c.l.b16 %v192
    %v225 = vunpack.c.l.b16 %v193
    %v226 = vunpack.c.l.b16 %v194
    %v227 = vunpack.c.l.b16 %v195
    %v228 = vunpack.c.l.b16 %v196
    %v229 = vunpack.c.l.b16 %v197
    %v230 = vunpack.c.l.b16 %v198
    %v231 = vpack.c.b16 %v216, %v215
    %v232 = vpack.c.b16 %v218, %v217
    %v233 = vpack.c.b16 %v220, %v219
    %v234 = vpack.c.b16 %v222, %v221
    %v235 = vpack.c.b16 %v224, %v223
    %v236 = vpack.c.b16 %v226, %v225
    %v237 = vpack.c.b16 %v228, %v227
    %v238 = vpack.c.b16 %v230, %v229
    %247 = vmatprep.subr.bf16.mxu0 0
    %248 = vmatpush1.bf16.msra.mxu0 %v238
    %249 = vmatprep.subr.bf16.mxu0 0
    %250 = vmatpush1.bf16.msra.mxu0 %v237
    %251 = vmatprep.subr.bf16.mxu0 0
    %252 = vmatpush1.bf16.msra.mxu0 %v236
    %253 = vmatprep.subr.bf16.mxu0 0
    %254 = vmatpush1.bf16.msra.mxu0 %v235
    %255 = vmatprep.subr.bf16.mxu0 0
    %256 = vmatpush1.bf16.msra.mxu0 %v234
    %257 = vmatprep.subr.bf16.mxu0 0
    %258 = vmatpush1.bf16.msra.mxu0 %v233
    %259 = vmatprep.subr.bf16.mxu0 0
    %260 = vmatpush1.bf16.msra.mxu0 %v232
    %261 = vmatprep.subr.bf16.mxu0 0
    %262 = vmatpush1.bf16.msra.mxu0 %v231
    %263 = vmatprep.subr.bf16.mxu0 0
    %264 = vmatpush2.bf16.msra.mxu0 0
    %265 = vmatprep.subr.bf16.mxu0 0
    %266 = vmatpush2.bf16.msra.mxu0 0
    %267 = vmatprep.subr.bf16.mxu0 0
    %268 = vmatpush2.bf16.msra.mxu0 0
    %269 = vmatprep.subr.bf16.mxu0 0
    %270 = vmatpush2.bf16.msra.mxu0 0
    %271 = vmatprep.subr.bf16.mxu0 0
    %272 = vmatpush2.bf16.msra.mxu0 0
    %273 = vmatprep.subr.bf16.mxu0 0
    %274 = vmatpush2.bf16.msra.mxu0 0
    %275 = vmatprep.subr.bf16.mxu0 0
    %276 = vmatpush2.bf16.msra.mxu0 0
    %277 = vmatprep.subr.bf16.mxu0 0
    %278 = vmatpush2.bf16.msra.mxu0 0
    %279 = vmatprep.mubr.bf16.mxu0 0
    %280 = vmatmul.mubr.bf16.gmra.mxu0 %v179
    %v281 = vpop.f32.mrf.mxu0
    %v282 = vadd.f32 0.0, %v281
    %v283 = vpop.f32.mrf.mxu0
    %v284 = vpop.f32.mrf.mxu0
    %v285 = vadd.f32 0.0, %v284
    %v286 = vpop.f32.mrf.mxu0
    %287 = vmatprep.mubr.bf16.mxu0 0
    %288 = vmatmul.mubr.bf16.gmra.mxu0 %v180
    %v289 = vpop.f32.mrf.mxu0
    %v290 = vadd.f32 0.0, %v289
    %v291 = vpop.f32.mrf.mxu0
    %v292 = vpop.f32.mrf.mxu0
    %v293 = vadd.f32 0.0, %v292
    %v294 = vpop.f32.mrf.mxu0
    %295 = vmatprep.mubr.bf16.mxu0 0
    %296 = vmatmul.mubr.bf16.gmra.mxu0 %v181
    %v297 = vpop.f32.mrf.mxu0
    %v298 = vadd.f32 0.0, %v297
    %v299 = vpop.f32.mrf.mxu0
    %v300 = vpop.f32.mrf.mxu0
    %v301 = vadd.f32 0.0, %v300
    %v302 = vpop.f32.mrf.mxu0
    %303 = vmatprep.mubr.bf16.mxu0 0
    %304 = vmatmul.mubr.bf16.gmra.mxu0 %v182
    %v305 = vpop.f32.mrf.mxu0
    %v306 = vadd.f32 0.0, %v305
    %v307 = vpop.f32.mrf.mxu0
    %v308 = vpop.f32.mrf.mxu0
    %v309 = vadd.f32 0.0, %v308
    %v310 = vpop.f32.mrf.mxu0
    %311 = vdwg.mxu0
    %v312 = vld [vmem:[#allocation3] sm:$0xff]
    %v313 = vld [vmem:[#allocation3 + $0x8] sm:$0xff]
    %v314 = vld [vmem:[#allocation3 + $0x10] sm:$0xff]
    %v315 = vld [vmem:[#allocation3 + $0x18] sm:$0xff]
    %v316 = vld [vmem:[#allocation6] sm:$0xff]
    %v317 = vld [vmem:[#allocation6 + $0x8] sm:$0xff]
    %v318 = vld [vmem:[#allocation6 + $0x10] sm:$0xff]
    %v319 = vld [vmem:[#allocation6 + $0x18] sm:$0xff]
    %v320 = vld [vmem:[%s4] sm:$0xff]
    %v321 = vld [vmem:[%s4 + $0x8] sm:$0xff]
    %v322 = vld [vmem:[%s4 + $0x10] sm:$0xff]
    %v323 = vld [vmem:[%s4 + $0x18] sm:$0xff]
    %v324 = vld [vmem:[%s4 + $0x20] sm:$0xff]
    %v325 = vld [vmem:[%s4 + $0x28] sm:$0xff]
    %v326 = vld [vmem:[%s4 + $0x30] sm:$0xff]
    %v327 = vld [vmem:[%s4 + $0x38] sm:$0xff]
    %v328 = vld [vmem:[#allocation8] sm:$0x3]
    %v329 = vpack.c.bf16 %v285, %v282
    %v330 = vpack.c.bf16 %v293, %v290
    %v331 = vpack.c.bf16 %v301, %v298
    %v332 = vpack.c.bf16 %v309, %v306
    %v333 = vpack.c.bf16 %v306, %v309
    %v334 = vpack.c.bf16 %v298, %v301
    %v335 = vpack.c.bf16 %v290, %v293
    %v336 = vpack.c.bf16 %v282, %v285
    %v341 = vunpack.c.l.b16 %v316
    %v342 = vunpack.c.h.b16 %v316
    %v343 = vunpack.c.l.b16 %v317
    %v344 = vunpack.c.h.b16 %v317
    %v345 = vunpack.c.l.b16 %v318
    %v346 = vunpack.c.h.b16 %v318
    %v347 = vunpack.c.l.b16 %v319
    %v348 = vunpack.c.h.b16 %v319
    %v349 = vpack.c.b16 %v343, %v341
    %v350 = vpack.c.b16 %v344, %v342
    %v351 = vpack.c.b16 %v347, %v345
    %v352 = vpack.c.b16 %v348, %v346
    %vm357 = vcmask 261120
    %v359 = vsel %vm357, %v333, 0
    %v362 = vsel %vm357, %v334, 0
    %v365 = vsel %vm357, %v335, 0
    %v368 = vsel %vm357, %v336, 0
    %370 = vmatprep.subr.bf16.mxu0 0
    %371 = vmatpush1.bf16.msra.mxu0 0
    %372 = vmatprep.subr.bf16.mxu0 0
    %373 = vmatpush1.bf16.msra.mxu0 0
    %374 = vmatprep.subr.bf16.mxu0 0
    %375 = vmatpush1.bf16.msra.mxu0 0
    %376 = vmatprep.subr.bf16.mxu0 0
    %377 = vmatpush1.bf16.msra.mxu0 0
    %378 = vmatprep.subr.bf16.mxu0 0
    %379 = vmatpush1.bf16.msra.mxu0 0
    %380 = vmatprep.subr.bf16.mxu0 0
    %381 = vmatpush1.bf16.msra.mxu0 0
    %382 = vmatprep.subr.bf16.mxu0 %v352
    %383 = vmatpush1.bf16.msra.mxu0 %v351
    %384 = vmatprep.subr.bf16.mxu0 %v350
    %385 = vmatpush1.bf16.msra.mxu0 %v349
    %386 = vmatprep.subr.bf16.mxu0 0
    %387 = vmatpush2.bf16.msra.mxu0 0
    %388 = vmatprep.subr.bf16.mxu0 0
    %389 = vmatpush2.bf16.msra.mxu0 0
    %390 = vmatprep.subr.bf16.mxu0 0
    %391 = vmatpush2.bf16.msra.mxu0 0
    %392 = vmatprep.subr.bf16.mxu0 0
    %393 = vmatpush2.bf16.msra.mxu0 0
    %394 = vmatprep.subr.bf16.mxu0 0
    %395 = vmatpush2.bf16.msra.mxu0 0
    %396 = vmatprep.subr.bf16.mxu0 0
    %397 = vmatpush2.bf16.msra.mxu0 0
    %398 = vmatprep.subr.bf16.mxu0 0
    %399 = vmatpush2.bf16.msra.mxu0 0
    %400 = vmatprep.subr.bf16.mxu0 0
    %401 = vmatpush2.bf16.msra.mxu0 0
    %402 = vmatprep.mubr.bf16.mxu0 0
    %403 = vmatmul.mubr.bf16.gmra.mxu0 %v359
    %v404 = vpop.f32.mrf.mxu0
    %v405 = vadd.f32 0.0, %v404
    %v406 = vpop.f32.mrf.mxu0
    %v407 = vadd.f32 0.0, %v406
    %v408 = vpop.f32.mrf.mxu0
    %v409 = vadd.f32 0.0, %v408
    %v410 = vpop.f32.mrf.mxu0
    %v411 = vadd.f32 0.0, %v410
    %412 = vmatprep.mubr.bf16.mxu0 0
    %413 = vmatmul.mubr.bf16.gmra.mxu0 %v362
    %v414 = vpop.f32.mrf.mxu0
    %v415 = vadd.f32 0.0, %v414
    %v416 = vpop.f32.mrf.mxu0
    %v417 = vadd.f32 0.0, %v416
    %v418 = vpop.f32.mrf.mxu0
    %v419 = vadd.f32 0.0, %v418
    %v420 = vpop.f32.mrf.mxu0
    %v421 = vadd.f32 0.0, %v420
    %422 = vmatprep.mubr.bf16.mxu0 0
    %423 = vmatmul.mubr.bf16.gmra.mxu0 %v365
    %v424 = vpop.f32.mrf.mxu0
    %v425 = vadd.f32 0.0, %v424
    %v426 = vpop.f32.mrf.mxu0
    %v427 = vadd.f32 0.0, %v426
    %v428 = vpop.f32.mrf.mxu0
    %v429 = vadd.f32 0.0, %v428
    %v430 = vpop.f32.mrf.mxu0
    %v431 = vadd.f32 0.0, %v430
    %432 = vmatprep.mubr.bf16.mxu0 0
    %433 = vmatmul.mubr.bf16.gmra.mxu0 %v368
    %v434 = vpop.f32.mrf.mxu0
    %v435 = vadd.f32 0.0, %v434
    %v436 = vpop.f32.mrf.mxu0
    %v437 = vadd.f32 0.0, %v436
    %v438 = vpop.f32.mrf.mxu0
    %v439 = vadd.f32 0.0, %v438
    %v440 = vpop.f32.mrf.mxu0
    %v441 = vadd.f32 0.0, %v440
    %442 = vdwg.mxu0
    %v447 = vunpack.c.l.b16 %v312
    %v448 = vunpack.c.h.b16 %v312
    %v449 = vunpack.c.l.b16 %v313
    %v450 = vunpack.c.h.b16 %v313
    %v451 = vunpack.c.l.b16 %v314
    %v452 = vunpack.c.h.b16 %v314
    %v453 = vunpack.c.l.b16 %v315
    %v454 = vunpack.c.h.b16 %v315
    %v455 = vpack.c.b16 %v449, %v447
    %v456 = vpack.c.b16 %v450, %v448
    %v457 = vpack.c.b16 %v453, %v451
    %v458 = vpack.c.b16 %v454, %v452
    %v464 = vsel %vm357, %v329, 0
    %v467 = vsel %vm357, %v330, 0
    %v470 = vsel %vm357, %v331, 0
    %v473 = vsel %vm357, %v332, 0
    %475 = vmatprep.subr.bf16.mxu0 0
    %476 = vmatpush1.bf16.msra.mxu0 0
    %477 = vmatprep.subr.bf16.mxu0 0
    %478 = vmatpush1.bf16.msra.mxu0 0
    %479 = vmatprep.subr.bf16.mxu0 0
    %480 = vmatpush1.bf16.msra.mxu0 0
    %481 = vmatprep.subr.bf16.mxu0 0
    %482 = vmatpush1.bf16.msra.mxu0 0
    %483 = vmatprep.subr.bf16.mxu0 0
    %484 = vmatpush1.bf16.msra.mxu0 0
    %485 = vmatprep.subr.bf16.mxu0 0
    %486 = vmatpush1.bf16.msra.mxu0 0
    %487 = vmatprep.subr.bf16.mxu0 %v458
    %488 = vmatpush1.bf16.msra.mxu0 %v457
    %489 = vmatprep.subr.bf16.mxu0 %v456
    %490 = vmatpush1.bf16.msra.mxu0 %v455
    %491 = vmatprep.subr.bf16.mxu0 0
    %492 = vmatpush2.bf16.msra.mxu0 0
    %493 = vmatprep.subr.bf16.mxu0 0
    %494 = vmatpush2.bf16.msra.mxu0 0
    %495 = vmatprep.subr.bf16.mxu0 0
    %496 = vmatpush2.bf16.msra.mxu0 0
    %497 = vmatprep.subr.bf16.mxu0 0
    %498 = vmatpush2.bf16.msra.mxu0 0
    %499 = vmatprep.subr.bf16.mxu0 0
    %500 = vmatpush2.bf16.msra.mxu0 0
    %501 = vmatprep.subr.bf16.mxu0 0
    %502 = vmatpush2.bf16.msra.mxu0 0
    %503 = vmatprep.subr.bf16.mxu0 0
    %504 = vmatpush2.bf16.msra.mxu0 0
    %505 = vmatprep.subr.bf16.mxu0 0
    %506 = vmatpush2.bf16.msra.mxu0 0
    %507 = vmatprep.mubr.bf16.mxu0 0
    %508 = vmatmul.mubr.bf16.gmra.mxu0 %v464
    %v509 = vpop.f32.mrf.mxu0
    %v510 = vadd.f32 %v405, %v509
    %v511 = vpop.f32.mrf.mxu0
    %v512 = vadd.f32 %v407, %v511
    %v513 = vpop.f32.mrf.mxu0
    %v514 = vadd.f32 %v409, %v513
    %v515 = vpop.f32.mrf.mxu0
    %v516 = vadd.f32 %v411, %v515
    %517 = vmatprep.mubr.bf16.mxu0 0
    %518 = vmatmul.mubr.bf16.gmra.mxu0 %v467
    %v519 = vpop.f32.mrf.mxu0
    %v520 = vadd.f32 %v415, %v519
    %v521 = vpop.f32.mrf.mxu0
    %v522 = vadd.f32 %v417, %v521
    %v523 = vpop.f32.mrf.mxu0
    %v524 = vadd.f32 %v419, %v523
    %v525 = vpop.f32.mrf.mxu0
    %v526 = vadd.f32 %v421, %v525
    %527 = vmatprep.mubr.bf16.mxu0 0
    %528 = vmatmul.mubr.bf16.gmra.mxu0 %v470
    %v529 = vpop.f32.mrf.mxu0
    %v530 = vadd.f32 %v425, %v529
    %v531 = vpop.f32.mrf.mxu0
    %v532 = vadd.f32 %v427, %v531
    %v533 = vpop.f32.mrf.mxu0
    %v534 = vadd.f32 %v429, %v533
    %v535 = vpop.f32.mrf.mxu0
    %v536 = vadd.f32 %v431, %v535
    %537 = vmatprep.mubr.bf16.mxu0 0
    %538 = vmatmul.mubr.bf16.gmra.mxu0 %v473
    %v539 = vpop.f32.mrf.mxu0
    %v540 = vadd.f32 %v435, %v539
    %v541 = vpop.f32.mrf.mxu0
    %v542 = vadd.f32 %v437, %v541
    %v543 = vpop.f32.mrf.mxu0
    %v544 = vadd.f32 %v439, %v543
    %v545 = vpop.f32.mrf.mxu0
    %v546 = vadd.f32 %v441, %v545
    %547 = vdwg.mxu0
    %v549 = vlaneseq
    %v550 = vshrl.u32 %v549, 7
    %v551 = vsub.s32 0, %v550
    %v552 = vrot.slane %v328, %v551
    %v553 = vlaneseq
    %v554 = vshrl.u32 %v553, 7
    %v555 = vsub.s32 1, %v554
    %v556 = vrot.slane %v328, %v555
    %v559 = vadd.f32 %v510, %v552
    %v560 = vadd.f32 %v512, %v556
    %v561 = vadd.f32 %v514, %v552
    %v562 = vadd.f32 %v516, %v556
    %v563 = vadd.f32 %v520, %v552
    %v564 = vadd.f32 %v522, %v556
    %v565 = vadd.f32 %v524, %v552
    %v566 = vadd.f32 %v526, %v556
    %v567 = vadd.f32 %v530, %v552
    %v568 = vadd.f32 %v532, %v556
    %v569 = vadd.f32 %v534, %v552
    %v570 = vadd.f32 %v536, %v556
    %v571 = vadd.f32 %v540, %v552
    %v572 = vadd.f32 %v542, %v556
    %v573 = vadd.f32 %v544, %v552
    %v574 = vadd.f32 %v546, %v556
    %v583 = vunpack.c.l.b16 %v320
    %v584 = vunpack.c.h.b16 %v320
    %v585 = vunpack.c.l.b16 %v321
    %v586 = vunpack.c.h.b16 %v321
    %v587 = vunpack.c.l.b16 %v322
    %v588 = vunpack.c.h.b16 %v322
    %v589 = vunpack.c.l.b16 %v323
    %v590 = vunpack.c.h.b16 %v323
    %v591 = vunpack.c.l.b16 %v324
    %v592 = vunpack.c.h.b16 %v324
    %v593 = vunpack.c.l.b16 %v325
    %v594 = vunpack.c.h.b16 %v325
    %v595 = vunpack.c.l.b16 %v326
    %v596 = vunpack.c.h.b16 %v326
    %v597 = vunpack.c.l.b16 %v327
    %v598 = vunpack.c.h.b16 %v327
    %v599 = vpack.c.b16 %v585, %v583
    %v600 = vpack.c.b16 %v586, %v584
    %v601 = vpack.c.b16 %v589, %v587
    %v602 = vpack.c.b16 %v590, %v588
    %v603 = vpack.c.b16 %v593, %v591
    %v604 = vpack.c.b16 %v594, %v592
    %v605 = vpack.c.b16 %v597, %v595
    %v606 = vpack.c.b16 %v598, %v596
    %vm615 = vcmask 523264
    %v617 = vsel %vm615, 0, 0
    %619 = vmatprep.subr.bf16.mxu0 0
    %620 = vmatpush1.bf16.msra.mxu0 0
    %621 = vmatprep.subr.bf16.mxu0 0
    %622 = vmatpush1.bf16.msra.mxu0 0
    %623 = vmatprep.subr.bf16.mxu0 0
    %624 = vmatpush1.bf16.msra.mxu0 0
    %625 = vmatprep.subr.bf16.mxu0 0
    %626 = vmatpush1.bf16.msra.mxu0 0
    %627 = vmatprep.subr.bf16.mxu0 %v606
    %628 = vmatpush1.bf16.msra.mxu0 %v605
    %629 = vmatprep.subr.bf16.mxu0 %v604
    %630 = vmatpush1.bf16.msra.mxu0 %v603
    %631 = vmatprep.subr.bf16.mxu0 %v602
    %632 = vmatpush1.bf16.msra.mxu0 %v601
    %633 = vmatprep.subr.bf16.mxu0 %v600
    %634 = vmatpush1.bf16.msra.mxu0 %v599
    %635 = vmatprep.subr.bf16.mxu0 0
    %636 = vmatpush2.bf16.msra.mxu0 0
    %637 = vmatprep.subr.bf16.mxu0 0
    %638 = vmatpush2.bf16.msra.mxu0 0
    %639 = vmatprep.subr.bf16.mxu0 0
    %640 = vmatpush2.bf16.msra.mxu0 0
    %641 = vmatprep.subr.bf16.mxu0 0
    %642 = vmatpush2.bf16.msra.mxu0 0
    %643 = vmatprep.subr.bf16.mxu0 0
    %644 = vmatpush2.bf16.msra.mxu0 0
    %645 = vmatprep.subr.bf16.mxu0 0
    %646 = vmatpush2.bf16.msra.mxu0 0
    %647 = vmatprep.subr.bf16.mxu0 0
    %648 = vmatpush2.bf16.msra.mxu0 0
    %649 = vmatprep.subr.bf16.mxu0 0
    %650 = vmatpush2.bf16.msra.mxu0 0
    %651 = vmatprep.mubr.bf16.mxu0 0
    %652 = vmatmul.mubr.bf16.gmra.mxu0 %v617
    %v653 = vpop.f32.mrf.mxu0
    %v654 = vadd.f32 0.0, %v653
    %v655 = vpop.f32.mrf.mxu0
    %v656 = vadd.f32 0.0, %v655
    %v657 = vpop.f32.mrf.mxu0
    %v658 = vpop.f32.mrf.mxu0
    %659 = vdwg.mxu0
    %v660 = vadd.f32 %v559, %v654
    %v661 = vadd.f32 %v560, %v656
    %v662 = vmul.f32 %v660, 0.5
    %v663 = vtanh.pop %v662
    %v664 = vmul.f32 %v663, 0.5
    %v665 = vadd.f32 %v664, 0.5
    %v666 = vtanh.pop %v661
    %v667 = vmul.f32 %v661, 0.5
    %v668 = vtanh.pop %v667
    %v669 = vmul.f32 %v668, 0.5
    %v670 = vadd.f32 %v669, 0.5
    %v671 = vmul.f32 %v665, 0.0
    %v672 = vmul.f32 %v665, %v666
    %674 = vrot.lane.b32.xlu0 %v672, 64
    %v675 = vpop.permute.xlu0 %674
    %v677 = vadd.f32 %v671, %v675
    %v678 = vtanh.pop %v677
    %v679 = vmul.f32 %v670, %v678
    %681 = vrot.lane.b32.xlu0 %v679, 64
    %v682 = vpop.permute.xlu0 %681
    %684 = vst.msk [vmem:[#allocation2] sm:$0xff] %vm615, %v682
    %v685 = vpack.c.bf16 %v679, %v679
    %687 = vrot.lane.b32.xlu0 %v685, 64
    %v688 = vpop.permute.xlu0 %687
    %v690 = vsel %vm615, %v688, 0
    %692 = vmatprep.subr.bf16.mxu0 0
    %693 = vmatpush1.bf16.msra.mxu0 0
    %694 = vmatprep.subr.bf16.mxu0 0
    %695 = vmatpush1.bf16.msra.mxu0 0
    %696 = vmatprep.subr.bf16.mxu0 0
    %697 = vmatpush1.bf16.msra.mxu0 0
    %698 = vmatprep.subr.bf16.mxu0 0
    %699 = vmatpush1.bf16.msra.mxu0 0
    %700 = vmatprep.subr.bf16.mxu0 %v606
    %701 = vmatpush1.bf16.msra.mxu0 %v605
    %702 = vmatprep.subr.bf16.mxu0 %v604
    %703 = vmatpush1.bf16.msra.mxu0 %v603
    %704 = vmatprep.subr.bf16.mxu0 %v602
    %705 = vmatpush1.bf16.msra.mxu0 %v601
    %706 = vmatprep.subr.bf16.mxu0 %v600
    %707 = vmatpush1.bf16.msra.mxu0 %v599
    %708 = vmatprep.subr.bf16.mxu0 0
    %709 = vmatpush2.bf16.msra.mxu0 0
    %710 = vmatprep.subr.bf16.mxu0 0
    %711 = vmatpush2.bf16.msra.mxu0 0
    %712 = vmatprep.subr.bf16.mxu0 0
    %713 = vmatpush2.bf16.msra.mxu0 0
    %714 = vmatprep.subr.bf16.mxu0 0
    %715 = vmatpush2.bf16.msra.mxu0 0
    %716 = vmatprep.subr.bf16.mxu0 0
    %717 = vmatpush2.bf16.msra.mxu0 0
    %718 = vmatprep.subr.bf16.mxu0 0
    %719 = vmatpush2.bf16.msra.mxu0 0
    %720 = vmatprep.subr.bf16.mxu0 0
    %721 = vmatpush2.bf16.msra.mxu0 0
    %722 = vmatprep.subr.bf16.mxu0 0
    %723 = vmatpush2.bf16.msra.mxu0 0
    %724 = vmatprep.mubr.bf16.mxu0 0
    %725 = vmatmul.mubr.bf16.gmra.mxu0 %v690
    %v726 = vpop.f32.mrf.mxu0
    %v727 = vadd.f32 0.0, %v726
    %v728 = vpop.f32.mrf.mxu0
    %v729 = vadd.f32 0.0, %v728
    %v730 = vpop.f32.mrf.mxu0
    %v731 = vpop.f32.mrf.mxu0
    %732 = vdwg.mxu0
    %v733 = vadd.f32 %v561, %v727
    %v734 = vadd.f32 %v562, %v729
    %v735 = vmul.f32 %v733, 0.5
    %v736 = vtanh.pop %v735
    %v737 = vmul.f32 %v736, 0.5
    %v738 = vadd.f32 %v737, 0.5
    %v739 = vtanh.pop %v734
    %v740 = vmul.f32 %v734, 0.5
    %v741 = vtanh.pop %v740
    %v742 = vmul.f32 %v741, 0.5
    %v743 = vadd.f32 %v742, 0.5
    %v744 = vmul.f32 %v738, %v677
    %v745 = vmul.f32 %v738, %v739
    %747 = vrot.lane.b32.xlu0 %v745, 64
    %v748 = vpop.permute.xlu0 %747
    %v750 = vadd.f32 %v744, %v748
    %v751 = vtanh.pop %v750
    %v752 = vmul.f32 %v743, %v751
    %754 = vrot.lane.b32.xlu0 %v752, 64
    %v755 = vpop.permute.xlu0 %754
    %757 = vst.msk [vmem:[#allocation2 + $0x8] sm:$0xff] %vm615, %v755
    %v758 = vpack.c.bf16 %v752, %v752
    %760 = vrot.lane.b32.xlu0 %v758, 64
    %v761 = vpop.permute.xlu0 %760
    %v763 = vsel %vm615, %v761, 0
    %765 = vmatprep.subr.bf16.mxu0 0
    %766 = vmatpush1.bf16.msra.mxu0 0
    %767 = vmatprep.subr.bf16.mxu0 0
    %768 = vmatpush1.bf16.msra.mxu0 0
    %769 = vmatprep.subr.bf16.mxu0 0
    %770 = vmatpush1.bf16.msra.mxu0 0
    %771 = vmatprep.subr.bf16.mxu0 0
    %772 = vmatpush1.bf16.msra.mxu0 0
    %773 = vmatprep.subr.bf16.mxu0 %v606
    %774 = vmatpush1.bf16.msra.mxu0 %v605
    %775 = vmatprep.subr.bf16.mxu0 %v604
    %776 = vmatpush1.bf16.msra.mxu0 %v603
    %777 = vmatprep.subr.bf16.mxu0 %v602
    %778 = vmatpush1.bf16.msra.mxu0 %v601
    %779 = vmatprep.subr.bf16.mxu0 %v600
    %780 = vmatpush1.bf16.msra.mxu0 %v599
    %781 = vmatprep.subr.bf16.mxu0 0
    %782 = vmatpush2.bf16.msra.mxu0 0
    %783 = vmatprep.subr.bf16.mxu0 0
    %784 = vmatpush2.bf16.msra.mxu0 0
    %785 = vmatprep.subr.bf16.mxu0 0
    %786 = vmatpush2.bf16.msra.mxu0 0
    %787 = vmatprep.subr.bf16.mxu0 0
    %788 = vmatpush2.bf16.msra.mxu0 0
    %789 = vmatprep.subr.bf16.mxu0 0
    %790 = vmatpush2.bf16.msra.mxu0 0
    %791 = vmatprep.subr.bf16.mxu0 0
    %792 = vmatpush2.bf16.msra.mxu0 0
    %793 = vmatprep.subr.bf16.mxu0 0
    %794 = vmatpush2.bf16.msra.mxu0 0
    %795 = vmatprep.subr.bf16.mxu0 0
    %796 = vmatpush2.bf16.msra.mxu0 0
    %797 = vmatprep.mubr.bf16.mxu0 0
    %798 = vmatmul.mubr.bf16.gmra.mxu0 %v763
    %v799 = vpop.f32.mrf.mxu0
    %v800 = vadd.f32 0.0, %v799
    %v801 = vpop.f32.mrf.mxu0
    %v802 = vadd.f32 0.0, %v801
    %v803 = vpop.f32.mrf.mxu0
    %v804 = vpop.f32.mrf.mxu0
    %805 = vdwg.mxu0
    %v806 = vadd.f32 %v563, %v800
    %v807 = vadd.f32 %v564, %v802
    %v808 = vmul.f32 %v806, 0.5
    %v809 = vtanh.pop %v808
    %v810 = vmul.f32 %v809, 0.5
    %v811 = vadd.f32 %v810, 0.5
    %v812 = vtanh.pop %v807
    %v813 = vmul.f32 %v807, 0.5
    %v814 = vtanh.pop %v813
    %v815 = vmul.f32 %v814, 0.5
    %v816 = vadd.f32 %v815, 0.5
    %v817 = vmul.f32 %v811, %v750
    %v818 = vmul.f32 %v811, %v812
    %820 = vrot.lane.b32.xlu0 %v818, 64
    %v821 = vpop.permute.xlu0 %820
    %v823 = vadd.f32 %v817, %v821
    %v824 = vtanh.pop %v823
    %v825 = vmul.f32 %v816, %v824
    %827 = vrot.lane.b32.xlu0 %v825, 64
    %v828 = vpop.permute.xlu0 %827
    %830 = vst.msk [vmem:[#allocation2 + $0x10] sm:$0xff] %vm615, %v828
    %v831 = vpack.c.bf16 %v825, %v825
    %833 = vrot.lane.b32.xlu0 %v831, 64
    %v834 = vpop.permute.xlu0 %833
    %v836 = vsel %vm615, %v834, 0
    %838 = vmatprep.subr.bf16.mxu0 0
    %839 = vmatpush1.bf16.msra.mxu0 0
    %840 = vmatprep.subr.bf16.mxu0 0
    %841 = vmatpush1.bf16.msra.mxu0 0
    %842 = vmatprep.subr.bf16.mxu0 0
    %843 = vmatpush1.bf16.msra.mxu0 0
    %844 = vmatprep.subr.bf16.mxu0 0
    %845 = vmatpush1.bf16.msra.mxu0 0
    %846 = vmatprep.subr.bf16.mxu0 %v606
    %847 = vmatpush1.bf16.msra.mxu0 %v605
    %848 = vmatprep.subr.bf16.mxu0 %v604
    %849 = vmatpush1.bf16.msra.mxu0 %v603
    %850 = vmatprep.subr.bf16.mxu0 %v602
    %851 = vmatpush1.bf16.msra.mxu0 %v601
    %852 = vmatprep.subr.bf16.mxu0 %v600
    %853 = vmatpush1.bf16.msra.mxu0 %v599
    %854 = vmatprep.subr.bf16.mxu0 0
    %855 = vmatpush2.bf16.msra.mxu0 0
    %856 = vmatprep.subr.bf16.mxu0 0
    %857 = vmatpush2.bf16.msra.mxu0 0
    %858 = vmatprep.subr.bf16.mxu0 0
    %859 = vmatpush2.bf16.msra.mxu0 0
    %860 = vmatprep.subr.bf16.mxu0 0
    %861 = vmatpush2.bf16.msra.mxu0 0
    %862 = vmatprep.subr.bf16.mxu0 0
    %863 = vmatpush2.bf16.msra.mxu0 0
    %864 = vmatprep.subr.bf16.mxu0 0
    %865 = vmatpush2.bf16.msra.mxu0 0
    %866 = vmatprep.subr.bf16.mxu0 0
    %867 = vmatpush2.bf16.msra.mxu0 0
    %868 = vmatprep.subr.bf16.mxu0 0
    %869 = vmatpush2.bf16.msra.mxu0 0
    %870 = vmatprep.mubr.bf16.mxu0 0
    %871 = vmatmul.mubr.bf16.gmra.mxu0 %v836
    %v872 = vpop.f32.mrf.mxu0
    %v873 = vadd.f32 0.0, %v872
    %v874 = vpop.f32.mrf.mxu0
    %v875 = vadd.f32 0.0, %v874
    %v876 = vpop.f32.mrf.mxu0
    %v877 = vpop.f32.mrf.mxu0
    %878 = vdwg.mxu0
    %v879 = vadd.f32 %v565, %v873
    %v880 = vadd.f32 %v566, %v875
    %v881 = vmul.f32 %v879, 0.5
    %v882 = vtanh.pop %v881
    %v883 = vmul.f32 %v882, 0.5
    %v884 = vadd.f32 %v883, 0.5
    %v885 = vtanh.pop %v880
    %v886 = vmul.f32 %v880, 0.5
    %v887 = vtanh.pop %v886
    %v888 = vmul.f32 %v887, 0.5
    %v889 = vadd.f32 %v888, 0.5
    %v890 = vmul.f32 %v884, %v823
    %v891 = vmul.f32 %v884, %v885
    %893 = vrot.lane.b32.xlu0 %v891, 64
    %v894 = vpop.permute.xlu0 %893
    %v896 = vadd.f32 %v890, %v894
    %v897 = vtanh.pop %v896
    %v898 = vmul.f32 %v889, %v897
    %900 = vrot.lane.b32.xlu0 %v898, 64
    %v901 = vpop.permute.xlu0 %900
    %903 = vst.msk [vmem:[#allocation2 + $0x18] sm:$0xff] %vm615, %v901
    %v904 = vpack.c.bf16 %v898, %v898
    %906 = vrot.lane.b32.xlu0 %v904, 64
    %v907 = vpop.permute.xlu0 %906
    %v909 = vsel %vm615, %v907, 0
    %911 = vmatprep.subr.bf16.mxu0 0
    %912 = vmatpush1.bf16.msra.mxu0 0
    %913 = vmatprep.subr.bf16.mxu0 0
    %914 = vmatpush1.bf16.msra.mxu0 0
    %915 = vmatprep.subr.bf16.mxu0 0
    %916 = vmatpush1.bf16.msra.mxu0 0
    %917 = vmatprep.subr.bf16.mxu0 0
    %918 = vmatpush1.bf16.msra.mxu0 0
    %919 = vmatprep.subr.bf16.mxu0 %v606
    %920 = vmatpush1.bf16.msra.mxu0 %v605
    %921 = vmatprep.subr.bf16.mxu0 %v604
    %922 = vmatpush1.bf16.msra.mxu0 %v603
    %923 = vmatprep.subr.bf16.mxu0 %v602
    %924 = vmatpush1.bf16.msra.mxu0 %v601
    %925 = vmatprep.subr.bf16.mxu0 %v600
    %926 = vmatpush1.bf16.msra.mxu0 %v599
    %927 = vmatprep.subr.bf16.mxu0 0
    %928 = vmatpush2.bf16.msra.mxu0 0
    %929 = vmatprep.subr.bf16.mxu0 0
    %930 = vmatpush2.bf16.msra.mxu0 0
    %931 = vmatprep.subr.bf16.mxu0 0
    %932 = vmatpush2.bf16.msra.mxu0 0
    %933 = vmatprep.subr.bf16.mxu0 0
    %934 = vmatpush2.bf16.msra.mxu0 0
    %935 = vmatprep.subr.bf16.mxu0 0
    %936 = vmatpush2.bf16.msra.mxu0 0
    %937 = vmatprep.subr.bf16.mxu0 0
    %938 = vmatpush2.bf16.msra.mxu0 0
    %939 = vmatprep.subr.bf16.mxu0 0
    %940 = vmatpush2.bf16.msra.mxu0 0
    %941 = vmatprep.subr.bf16.mxu0 0
    %942 = vmatpush2.bf16.msra.mxu0 0
    %943 = vmatprep.mubr.bf16.mxu0 0
    %944 = vmatmul.mubr.bf16.gmra.mxu0 %v909
    %v945 = vpop.f32.mrf.mxu0
    %v946 = vadd.f32 0.0, %v945
    %v947 = vpop.f32.mrf.mxu0
    %v948 = vadd.f32 0.0, %v947
    %v949 = vpop.f32.mrf.mxu0
    %v950 = vpop.f32.mrf.mxu0
    %951 = vdwg.mxu0
    %v952 = vadd.f32 %v567, %v946
    %v953 = vadd.f32 %v568, %v948
    %v954 = vmul.f32 %v952, 0.5
    %v955 = vtanh.pop %v954
    %v956 = vmul.f32 %v955, 0.5
    %v957 = vadd.f32 %v956, 0.5
    %v958 = vtanh.pop %v953
    %v959 = vmul.f32 %v953, 0.5
    %v960 = vtanh.pop %v959
    %v961 = vmul.f32 %v960, 0.5
    %v962 = vadd.f32 %v961, 0.5
    %v963 = vmul.f32 %v957, %v896
    %v964 = vmul.f32 %v957, %v958
    %966 = vrot.lane.b32.xlu0 %v964, 64
    %v967 = vpop.permute.xlu0 %966
    %v969 = vadd.f32 %v963, %v967
    %v970 = vtanh.pop %v969
    %v971 = vmul.f32 %v962, %v970
    %973 = vrot.lane.b32.xlu0 %v971, 64
    %v974 = vpop.permute.xlu0 %973
    %976 = vst.msk [vmem:[#allocation2 + $0x20] sm:$0xff] %vm615, %v974
    %v977 = vpack.c.bf16 %v971, %v971
    %979 = vrot.lane.b32.xlu0 %v977, 64
    %v980 = vpop.permute.xlu0 %979
    %v982 = vsel %vm615, %v980, 0
    %984 = vmatprep.subr.bf16.mxu0 0
    %985 = vmatpush1.bf16.msra.mxu0 0
    %986 = vmatprep.subr.bf16.mxu0 0
    %987 = vmatpush1.bf16.msra.mxu0 0
    %988 = vmatprep.subr.bf16.mxu0 0
    %989 = vmatpush1.bf16.msra.mxu0 0
    %990 = vmatprep.subr.bf16.mxu0 0
    %991 = vmatpush1.bf16.msra.mxu0 0
    %992 = vmatprep.subr.bf16.mxu0 %v606
    %993 = vmatpush1.bf16.msra.mxu0 %v605
    %994 = vmatprep.subr.bf16.mxu0 %v604
    %995 = vmatpush1.bf16.msra.mxu0 %v603
    %996 = vmatprep.subr.bf16.mxu0 %v602
    %997 = vmatpush1.bf16.msra.mxu0 %v601
    %998 = vmatprep.subr.bf16.mxu0 %v600
    %999 = vmatpush1.bf16.msra.mxu0 %v599
    %1000 = vmatprep.subr.bf16.mxu0 0
    %1001 = vmatpush2.bf16.msra.mxu0 0
    %1002 = vmatprep.subr.bf16.mxu0 0
    %1003 = vmatpush2.bf16.msra.mxu0 0
    %1004 = vmatprep.subr.bf16.mxu0 0
    %1005 = vmatpush2.bf16.msra.mxu0 0
    %1006 = vmatprep.subr.bf16.mxu0 0
    %1007 = vmatpush2.bf16.msra.mxu0 0
    %1008 = vmatprep.subr.bf16.mxu0 0
    %1009 = vmatpush2.bf16.msra.mxu0 0
    %1010 = vmatprep.subr.bf16.mxu0 0
    %1011 = vmatpush2.bf16.msra.mxu0 0
    %1012 = vmatprep.subr.bf16.mxu0 0
    %1013 = vmatpush2.bf16.msra.mxu0 0
    %1014 = vmatprep.subr.bf16.mxu0 0
    %1015 = vmatpush2.bf16.msra.mxu0 0
    %1016 = vmatprep.mubr.bf16.mxu0 0
    %1017 = vmatmul.mubr.bf16.gmra.mxu0 %v982
    %v1018 = vpop.f32.mrf.mxu0
    %v1019 = vadd.f32 0.0, %v1018
    %v1020 = vpop.f32.mrf.mxu0
    %v1021 = vadd.f32 0.0, %v1020
    %v1022 = vpop.f32.mrf.mxu0
    %v1023 = vpop.f32.mrf.mxu0
    %1024 = vdwg.mxu0
    %v1025 = vadd.f32 %v569, %v1019
    %v1026 = vadd.f32 %v570, %v1021
    %v1027 = vmul.f32 %v1025, 0.5
    %v1028 = vtanh.pop %v1027
    %v1029 = vmul.f32 %v1028, 0.5
    %v1030 = vadd.f32 %v1029, 0.5
    %v1031 = vtanh.pop %v1026
    %v1032 = vmul.f32 %v1026, 0.5
    %v1033 = vtanh.pop %v1032
    %v1034 = vmul.f32 %v1033, 0.5
    %v1035 = vadd.f32 %v1034, 0.5
    %v1036 = vmul.f32 %v1030, %v969
    %v1037 = vmul.f32 %v1030, %v1031
    %1039 = vrot.lane.b32.xlu0 %v1037, 64
    %v1040 = vpop.permute.xlu0 %1039
    %v1042 = vadd.f32 %v1036, %v1040
    %v1043 = vtanh.pop %v1042
    %v1044 = vmul.f32 %v1035, %v1043
    %1046 = vrot.lane.b32.xlu0 %v1044, 64
    %v1047 = vpop.permute.xlu0 %1046
    %1049 = vst.msk [vmem:[#allocation2 + $0x28] sm:$0xff] %vm615, %v1047
    %v1050 = vpack.c.bf16 %v1044, %v1044
    %1052 = vrot.lane.b32.xlu0 %v1050, 64
    %v1053 = vpop.permute.xlu0 %1052
    %v1055 = vsel %vm615, %v1053, 0
    %1057 = vmatprep.subr.bf16.mxu0 0
    %1058 = vmatpush1.bf16.msra.mxu0 0
    %1059 = vmatprep.subr.bf16.mxu0 0
    %1060 = vmatpush1.bf16.msra.mxu0 0
    %1061 = vmatprep.subr.bf16.mxu0 0
    %1062 = vmatpush1.bf16.msra.mxu0 0
    %1063 = vmatprep.subr.bf16.mxu0 0
    %1064 = vmatpush1.bf16.msra.mxu0 0
    %1065 = vmatprep.subr.bf16.mxu0 %v606
    %1066 = vmatpush1.bf16.msra.mxu0 %v605
    %1067 = vmatprep.subr.bf16.mxu0 %v604
    %1068 = vmatpush1.bf16.msra.mxu0 %v603
    %1069 = vmatprep.subr.bf16.mxu0 %v602
    %1070 = vmatpush1.bf16.msra.mxu0 %v601
    %1071 = vmatprep.subr.bf16.mxu0 %v600
    %1072 = vmatpush1.bf16.msra.mxu0 %v599
    %1073 = vmatprep.subr.bf16.mxu0 0
    %1074 = vmatpush2.bf16.msra.mxu0 0
    %1075 = vmatprep.subr.bf16.mxu0 0
    %1076 = vmatpush2.bf16.msra.mxu0 0
    %1077 = vmatprep.subr.bf16.mxu0 0
    %1078 = vmatpush2.bf16.msra.mxu0 0
    %1079 = vmatprep.subr.bf16.mxu0 0
    %1080 = vmatpush2.bf16.msra.mxu0 0
    %1081 = vmatprep.subr.bf16.mxu0 0
    %1082 = vmatpush2.bf16.msra.mxu0 0
    %1083 = vmatprep.subr.bf16.mxu0 0
    %1084 = vmatpush2.bf16.msra.mxu0 0
    %1085 = vmatprep.subr.bf16.mxu0 0
    %1086 = vmatpush2.bf16.msra.mxu0 0
    %1087 = vmatprep.subr.bf16.mxu0 0
    %1088 = vmatpush2.bf16.msra.mxu0 0
    %1089 = vmatprep.mubr.bf16.mxu0 0
    %1090 = vmatmul.mubr.bf16.gmra.mxu0 %v1055
    %v1091 = vpop.f32.mrf.mxu0
    %v1092 = vadd.f32 0.0, %v1091
    %v1093 = vpop.f32.mrf.mxu0
    %v1094 = vadd.f32 0.0, %v1093
    %v1095 = vpop.f32.mrf.mxu0
    %v1096 = vpop.f32.mrf.mxu0
    %1097 = vdwg.mxu0
    %v1098 = vadd.f32 %v571, %v1092
    %v1099 = vadd.f32 %v572, %v1094
    %v1100 = vmul.f32 %v1098, 0.5
    %v1101 = vtanh.pop %v1100
    %v1102 = vmul.f32 %v1101, 0.5
    %v1103 = vadd.f32 %v1102, 0.5
    %v1104 = vtanh.pop %v1099
    %v1105 = vmul.f32 %v1099, 0.5
    %v1106 = vtanh.pop %v1105
    %v1107 = vmul.f32 %v1106, 0.5
    %v1108 = vadd.f32 %v1107, 0.5
    %v1109 = vmul.f32 %v1103, %v1042
    %v1110 = vmul.f32 %v1103, %v1104
    %1112 = vrot.lane.b32.xlu0 %v1110, 64
    %v1113 = vpop.permute.xlu0 %1112
    %v1115 = vadd.f32 %v1109, %v1113
    %v1116 = vtanh.pop %v1115
    %v1117 = vmul.f32 %v1108, %v1116
    %1119 = vrot.lane.b32.xlu0 %v1117, 64
    %v1120 = vpop.permute.xlu0 %1119
    %1122 = vst.msk [vmem:[#allocation2 + $0x30] sm:$0xff] %vm615, %v1120
    %v1123 = vpack.c.bf16 %v1117, %v1117
    %1125 = vrot.lane.b32.xlu0 %v1123, 64
    %v1126 = vpop.permute.xlu0 %1125
    %v1128 = vsel %vm615, %v1126, 0
    %1130 = vmatprep.subr.bf16.mxu0 0
    %1131 = vmatpush1.bf16.msra.mxu0 0
    %1132 = vmatprep.subr.bf16.mxu0 0
    %1133 = vmatpush1.bf16.msra.mxu0 0
    %1134 = vmatprep.subr.bf16.mxu0 0
    %1135 = vmatpush1.bf16.msra.mxu0 0
    %1136 = vmatprep.subr.bf16.mxu0 0
    %1137 = vmatpush1.bf16.msra.mxu0 0
    %1138 = vmatprep.subr.bf16.mxu0 %v606
    %1139 = vmatpush1.bf16.msra.mxu0 %v605
    %1140 = vmatprep.subr.bf16.mxu0 %v604
    %1141 = vmatpush1.bf16.msra.mxu0 %v603
    %1142 = vmatprep.subr.bf16.mxu0 %v602
    %1143 = vmatpush1.bf16.msra.mxu0 %v601
    %1144 = vmatprep.subr.bf16.mxu0 %v600
    %1145 = vmatpush1.bf16.msra.mxu0 %v599
    %1146 = vmatprep.subr.bf16.mxu0 0
    %1147 = vmatpush2.bf16.msra.mxu0 0
    %1148 = vmatprep.subr.bf16.mxu0 0
    %1149 = vmatpush2.bf16.msra.mxu0 0
    %1150 = vmatprep.subr.bf16.mxu0 0
    %1151 = vmatpush2.bf16.msra.mxu0 0
    %1152 = vmatprep.subr.bf16.mxu0 0
    %1153 = vmatpush2.bf16.msra.mxu0 0
    %1154 = vmatprep.subr.bf16.mxu0 0
    %1155 = vmatpush2.bf16.msra.mxu0 0
    %1156 = vmatprep.subr.bf16.mxu0 0
    %1157 = vmatpush2.bf16.msra.mxu0 0
    %1158 = vmatprep.subr.bf16.mxu0 0
    %1159 = vmatpush2.bf16.msra.mxu0 0
    %1160 = vmatprep.subr.bf16.mxu0 0
    %1161 = vmatpush2.bf16.msra.mxu0 0
    %1162 = vmatprep.mubr.bf16.mxu0 0
    %1163 = vmatmul.mubr.bf16.gmra.mxu0 %v1128
    %v1164 = vpop.f32.mrf.mxu0
    %v1165 = vadd.f32 0.0, %v1164
    %v1166 = vpop.f32.mrf.mxu0
    %v1167 = vadd.f32 0.0, %v1166
    %v1168 = vpop.f32.mrf.mxu0
    %v1169 = vpop.f32.mrf.mxu0
    %1170 = vdwg.mxu0
    %v1171 = vadd.f32 %v573, %v1165
    %v1172 = vadd.f32 %v574, %v1167
    %v1173 = vmul.f32 %v1171, 0.5
    %v1174 = vtanh.pop %v1173
    %v1175 = vmul.f32 %v1174, 0.5
    %v1176 = vadd.f32 %v1175, 0.5
    %v1177 = vtanh.pop %v1172
    %v1178 = vmul.f32 %v1172, 0.5
    %v1179 = vtanh.pop %v1178
    %v1180 = vmul.f32 %v1179, 0.5
    %v1181 = vadd.f32 %v1180, 0.5
    %v1182 = vmul.f32 %v1176, %v1115
    %v1183 = vmul.f32 %v1176, %v1177
    %1185 = vrot.lane.b32.xlu0 %v1183, 64
    %v1186 = vpop.permute.xlu0 %1185
    %v1188 = vadd.f32 %v1182, %v1186
    %v1189 = vtanh.pop %v1188
    %v1190 = vmul.f32 %v1181, %v1189
    %1192 = vrot.lane.b32.xlu0 %v1190, 64
    %v1193 = vpop.permute.xlu0 %1192
    %1195 = vst.msk [vmem:[#allocation2 + $0x38] sm:$0xff] %vm615, %v1193
    %v1196 = vld [vmem:[#allocation2] sm:$0xff]
    %v1197 = vld [vmem:[#allocation2 + $0x8] sm:$0xff]
    %v1198 = vld [vmem:[#allocation2 + $0x10] sm:$0xff]
    %v1199 = vld [vmem:[#allocation2 + $0x18] sm:$0xff]
    %v1200 = vld [vmem:[#allocation2 + $0x20] sm:$0xff]
    %v1201 = vld [vmem:[#allocation2 + $0x28] sm:$0xff]
    %v1202 = vld [vmem:[#allocation2 + $0x30] sm:$0xff]
    %v1203 = vld [vmem:[#allocation2 + $0x38] sm:$0xff]
    %v1204 = vld [vmem:[%s6] sm:$0xff]
    %v1205 = vld [vmem:[%s6 + $0x8] sm:$0xff]
    %v1206 = vld [vmem:[%s6 + $0x10] sm:$0xff]
    %v1207 = vld [vmem:[%s6 + $0x18] sm:$0xff]
    %v1208 = vld [vmem:[%s6 + $0x20] sm:$0xff]
    %v1209 = vld [vmem:[%s6 + $0x28] sm:$0xff]
    %v1210 = vld [vmem:[%s6 + $0x30] sm:$0xff]
    %v1211 = vld [vmem:[%s6 + $0x38] sm:$0xff]
    %v1212 = vld [vmem:[#allocation9] sm:$0xff]
    %v1213 = vld [vmem:[#allocation9 + $0x8] sm:$0xff]
    %v1214 = vld [vmem:[#allocation9 + $0x10] sm:$0xff]
    %v1215 = vld [vmem:[#allocation9 + $0x18] sm:$0xff]
    %v1216 = vld [vmem:[#allocation9 + $0x20] sm:$0xff]
    %v1217 = vld [vmem:[#allocation9 + $0x28] sm:$0xff]
    %v1218 = vld [vmem:[#allocation9 + $0x30] sm:$0xff]
    %v1219 = vld [vmem:[#allocation9 + $0x38] sm:$0xff]
    %v1220 = vld [vmem:[#allocation11] sm:$0xff]
    %v1221 = vld [vmem:[#allocation11 + $0x8] sm:$0xff]
    %v1222 = vld [vmem:[#allocation11 + $0x10] sm:$0xff]
    %v1223 = vld [vmem:[#allocation11 + $0x18] sm:$0xff]
    %v1224 = vld [vmem:[#allocation11 + $0x20] sm:$0xff]
    %v1225 = vld [vmem:[#allocation11 + $0x28] sm:$0xff]
    %v1226 = vld [vmem:[#allocation11 + $0x30] sm:$0xff]
    %v1227 = vld [vmem:[#allocation11 + $0x38] sm:$0xff]
    %v1228 = vld [vmem:[#allocation12] sm:$0x3]
    %v1229 = vpack.c.bf16 %v1197, %v1196
    %v1230 = vpack.c.bf16 %v1199, %v1198
    %v1231 = vpack.c.bf16 %v1201, %v1200
    %v1232 = vpack.c.bf16 %v1203, %v1202
    %v1233 = vpack.c.bf16 %v1202, %v1203
    %v1234 = vpack.c.bf16 %v1200, %v1201
    %v1235 = vpack.c.bf16 %v1198, %v1199
    %v1236 = vpack.c.bf16 %v1196, %v1197
    %v1245 = vunpack.c.l.b16 %v1212
    %v1246 = vunpack.c.h.b16 %v1212
    %v1247 = vunpack.c.l.b16 %v1213
    %v1248 = vunpack.c.h.b16 %v1213
    %v1249 = vunpack.c.l.b16 %v1214
    %v1250 = vunpack.c.h.b16 %v1214
    %v1251 = vunpack.c.l.b16 %v1215
    %v1252 = vunpack.c.h.b16 %v1215
    %v1253 = vunpack.c.l.b16 %v1216
    %v1254 = vunpack.c.h.b16 %v1216
    %v1255 = vunpack.c.l.b16 %v1217
    %v1256 = vunpack.c.h.b16 %v1217
    %v1257 = vunpack.c.l.b16 %v1218
    %v1258 = vunpack.c.h.b16 %v1218
    %v1259 = vunpack.c.l.b16 %v1219
    %v1260 = vunpack.c.h.b16 %v1219
    %v1261 = vpack.c.b16 %v1247, %v1245
    %v1262 = vpack.c.b16 %v1248, %v1246
    %v1263 = vpack.c.b16 %v1251, %v1249
    %v1264 = vpack.c.b16 %v1252, %v1250
    %v1265 = vpack.c.b16 %v1255, %v1253
    %v1266 = vpack.c.b16 %v1256, %v1254
    %v1267 = vpack.c.b16 %v1259, %v1257
    %v1268 = vpack.c.b16 %v1260, %v1258
    %v1278 = vsel %vm615, %v1233, 0
    %v1281 = vsel %vm615, %v1234, 0
    %v1284 = vsel %vm615, %v1235, 0
    %v1287 = vsel %vm615, %v1236, 0
    %1289 = vmatprep.subr.bf16.mxu0 0
    %1290 = vmatpush1.bf16.msra.mxu0 0
    %1291 = vmatprep.subr.bf16.mxu0 0
    %1292 = vmatpush1.bf16.msra.mxu0 0
    %1293 = vmatprep.subr.bf16.mxu0 0
    %1294 = vmatpush1.bf16.msra.mxu0 0
    %1295 = vmatprep.subr.bf16.mxu0 0
    %1296 = vmatpush1.bf16.msra.mxu0 0
    %1297 = vmatprep.subr.bf16.mxu0 %v1268
    %1298 = vmatpush1.bf16.msra.mxu0 %v1267
    %1299 = vmatprep.subr.bf16.mxu0 %v1266
    %1300 = vmatpush1.bf16.msra.mxu0 %v1265
    %1301 = vmatprep.subr.bf16.mxu0 %v1264
    %1302 = vmatpush1.bf16.msra.mxu0 %v1263
    %1303 = vmatprep.subr.bf16.mxu0 %v1262
    %1304 = vmatpush1.bf16.msra.mxu0 %v1261
    %1305 = vmatprep.subr.bf16.mxu0 0
    %1306 = vmatpush2.bf16.msra.mxu0 0
    %1307 = vmatprep.subr.bf16.mxu0 0
    %1308 = vmatpush2.bf16.msra.mxu0 0
    %1309 = vmatprep.subr.bf16.mxu0 0
    %1310 = vmatpush2.bf16.msra.mxu0 0
    %1311 = vmatprep.subr.bf16.mxu0 0
    %1312 = vmatpush2.bf16.msra.mxu0 0
    %1313 = vmatprep.subr.bf16.mxu0 0
    %1314 = vmatpush2.bf16.msra.mxu0 0
    %1315 = vmatprep.subr.bf16.mxu0 0
    %1316 = vmatpush2.bf16.msra.mxu0 0
    %1317 = vmatprep.subr.bf16.mxu0 0
    %1318 = vmatpush2.bf16.msra.mxu0 0
    %1319 = vmatprep.subr.bf16.mxu0 0
    %1320 = vmatpush2.bf16.msra.mxu0 0
    %1321 = vmatprep.mubr.bf16.mxu0 0
    %1322 = vmatmul.mubr.bf16.gmra.mxu0 %v1278
    %v1323 = vpop.f32.mrf.mxu0
    %v1324 = vadd.f32 0.0, %v1323
    %v1325 = vpop.f32.mrf.mxu0
    %v1326 = vadd.f32 0.0, %v1325
    %v1327 = vpop.f32.mrf.mxu0
    %v1328 = vadd.f32 0.0, %v1327
    %v1329 = vpop.f32.mrf.mxu0
    %v1330 = vadd.f32 0.0, %v1329
    %1331 = vmatprep.mubr.bf16.mxu0 0
    %1332 = vmatmul.mubr.bf16.gmra.mxu0 %v1281
    %v1333 = vpop.f32.mrf.mxu0
    %v1334 = vadd.f32 0.0, %v1333
    %v1335 = vpop.f32.mrf.mxu0
    %v1336 = vadd.f32 0.0, %v1335
    %v1337 = vpop.f32.mrf.mxu0
    %v1338 = vadd.f32 0.0, %v1337
    %v1339 = vpop.f32.mrf.mxu0
    %v1340 = vadd.f32 0.0, %v1339
    %1341 = vmatprep.mubr.bf16.mxu0 0
    %1342 = vmatmul.mubr.bf16.gmra.mxu0 %v1284
    %v1343 = vpop.f32.mrf.mxu0
    %v1344 = vadd.f32 0.0, %v1343
    %v1345 = vpop.f32.mrf.mxu0
    %v1346 = vadd.f32 0.0, %v1345
    %v1347 = vpop.f32.mrf.mxu0
    %v1348 = vadd.f32 0.0, %v1347
    %v1349 = vpop.f32.mrf.mxu0
    %v1350 = vadd.f32 0.0, %v1349
    %1351 = vmatprep.mubr.bf16.mxu0 0
    %1352 = vmatmul.mubr.bf16.gmra.mxu0 %v1287
    %v1353 = vpop.f32.mrf.mxu0
    %v1354 = vadd.f32 0.0, %v1353
    %v1355 = vpop.f32.mrf.mxu0
    %v1356 = vadd.f32 0.0, %v1355
    %v1357 = vpop.f32.mrf.mxu0
    %v1358 = vadd.f32 0.0, %v1357
    %v1359 = vpop.f32.mrf.mxu0
    %v1360 = vadd.f32 0.0, %v1359
    %1361 = vdwg.mxu0
    %v1370 = vunpack.c.l.b16 %v1204
    %v1371 = vunpack.c.h.b16 %v1204
    %v1372 = vunpack.c.l.b16 %v1205
    %v1373 = vunpack.c.h.b16 %v1205
    %v1374 = vunpack.c.l.b16 %v1206
    %v1375 = vunpack.c.h.b16 %v1206
    %v1376 = vunpack.c.l.b16 %v1207
    %v1377 = vunpack.c.h.b16 %v1207
    %v1378 = vunpack.c.l.b16 %v1208
    %v1379 = vunpack.c.h.b16 %v1208
    %v1380 = vunpack.c.l.b16 %v1209
    %v1381 = vunpack.c.h.b16 %v1209
    %v1382 = vunpack.c.l.b16 %v1210
    %v1383 = vunpack.c.h.b16 %v1210
    %v1384 = vunpack.c.l.b16 %v1211
    %v1385 = vunpack.c.h.b16 %v1211
    %v1386 = vpack.c.b16 %v1372, %v1370
    %v1387 = vpack.c.b16 %v1373, %v1371
    %v1388 = vpack.c.b16 %v1376, %v1374
    %v1389 = vpack.c.b16 %v1377, %v1375
    %v1390 = vpack.c.b16 %v1380, %v1378
    %v1391 = vpack.c.b16 %v1381, %v1379
    %v1392 = vpack.c.b16 %v1384, %v1382
    %v1393 = vpack.c.b16 %v1385, %v1383
    %v1403 = vsel %vm615, %v1229, 0
    %v1406 = vsel %vm615, %v1230, 0
    %v1409 = vsel %vm615, %v1231, 0
    %v1412 = vsel %vm615, %v1232, 0
    %1414 = vmatprep.subr.bf16.mxu0 0
    %1415 = vmatpush1.bf16.msra.mxu0 0
    %1416 = vmatprep.subr.bf16.mxu0 0
    %1417 = vmatpush1.bf16.msra.mxu0 0
    %1418 = vmatprep.subr.bf16.mxu0 0
    %1419 = vmatpush1.bf16.msra.mxu0 0
    %1420 = vmatprep.subr.bf16.mxu0 0
    %1421 = vmatpush1.bf16.msra.mxu0 0
    %1422 = vmatprep.subr.bf16.mxu0 %v1393
    %1423 = vmatpush1.bf16.msra.mxu0 %v1392
    %1424 = vmatprep.subr.bf16.mxu0 %v1391
    %1425 = vmatpush1.bf16.msra.mxu0 %v1390
    %1426 = vmatprep.subr.bf16.mxu0 %v1389
    %1427 = vmatpush1.bf16.msra.mxu0 %v1388
    %1428 = vmatprep.subr.bf16.mxu0 %v1387
    %1429 = vmatpush1.bf16.msra.mxu0 %v1386
    %1430 = vmatprep.subr.bf16.mxu0 0
    %1431 = vmatpush2.bf16.msra.mxu0 0
    %1432 = vmatprep.subr.bf16.mxu0 0
    %1433 = vmatpush2.bf16.msra.mxu0 0
    %1434 = vmatprep.subr.bf16.mxu0 0
    %1435 = vmatpush2.bf16.msra.mxu0 0
    %1436 = vmatprep.subr.bf16.mxu0 0
    %1437 = vmatpush2.bf16.msra.mxu0 0
    %1438 = vmatprep.subr.bf16.mxu0 0
    %1439 = vmatpush2.bf16.msra.mxu0 0
    %1440 = vmatprep.subr.bf16.mxu0 0
    %1441 = vmatpush2.bf16.msra.mxu0 0
    %1442 = vmatprep.subr.bf16.mxu0 0
    %1443 = vmatpush2.bf16.msra.mxu0 0
    %1444 = vmatprep.subr.bf16.mxu0 0
    %1445 = vmatpush2.bf16.msra.mxu0 0
    %1446 = vmatprep.mubr.bf16.mxu0 0
    %1447 = vmatmul.mubr.bf16.gmra.mxu0 %v1403
    %v1448 = vpop.f32.mrf.mxu0
    %v1449 = vadd.f32 %v1324, %v1448
    %v1450 = vpop.f32.mrf.mxu0
    %v1451 = vadd.f32 %v1326, %v1450
    %v1452 = vpop.f32.mrf.mxu0
    %v1453 = vadd.f32 %v1328, %v1452
    %v1454 = vpop.f32.mrf.mxu0
    %v1455 = vadd.f32 %v1330, %v1454
    %1456 = vmatprep.mubr.bf16.mxu0 0
    %1457 = vmatmul.mubr.bf16.gmra.mxu0 %v1406
    %v1458 = vpop.f32.mrf.mxu0
    %v1459 = vadd.f32 %v1334, %v1458
    %v1460 = vpop.f32.mrf.mxu0
    %v1461 = vadd.f32 %v1336, %v1460
    %v1462 = vpop.f32.mrf.mxu0
    %v1463 = vadd.f32 %v1338, %v1462
    %v1464 = vpop.f32.mrf.mxu0
    %v1465 = vadd.f32 %v1340, %v1464
    %1466 = vmatprep.mubr.bf16.mxu0 0
    %1467 = vmatmul.mubr.bf16.gmra.mxu0 %v1409
    %v1468 = vpop.f32.mrf.mxu0
    %v1469 = vadd.f32 %v1344, %v1468
    %v1470 = vpop.f32.mrf.mxu0
    %v1471 = vadd.f32 %v1346, %v1470
    %v1472 = vpop.f32.mrf.mxu0
    %v1473 = vadd.f32 %v1348, %v1472
    %v1474 = vpop.f32.mrf.mxu0
    %v1475 = vadd.f32 %v1350, %v1474
    %1476 = vmatprep.mubr.bf16.mxu0 0
    %1477 = vmatmul.mubr.bf16.gmra.mxu0 %v1412
    %v1478 = vpop.f32.mrf.mxu0
    %v1479 = vadd.f32 %v1354, %v1478
    %v1480 = vpop.f32.mrf.mxu0
    %v1481 = vadd.f32 %v1356, %v1480
    %v1482 = vpop.f32.mrf.mxu0
    %v1483 = vadd.f32 %v1358, %v1482
    %v1484 = vpop.f32.mrf.mxu0
    %v1485 = vadd.f32 %v1360, %v1484
    %1486 = vdwg.mxu0
    %v1488 = vlaneseq
    %v1489 = vshrl.u32 %v1488, 7
    %v1490 = vsub.s32 0, %v1489
    %v1491 = vrot.slane %v1228, %v1490
    %v1492 = vlaneseq
    %v1493 = vshrl.u32 %v1492, 7
    %v1494 = vsub.s32 1, %v1493
    %v1495 = vrot.slane %v1228, %v1494
    %v1498 = vadd.f32 %v1449, %v1491
    %v1499 = vadd.f32 %v1451, %v1495
    %v1500 = vadd.f32 %v1453, %v1491
    %v1501 = vadd.f32 %v1455, %v1495
    %v1502 = vadd.f32 %v1459, %v1491
    %v1503 = vadd.f32 %v1461, %v1495
    %v1504 = vadd.f32 %v1463, %v1491
    %v1505 = vadd.f32 %v1465, %v1495
    %v1506 = vadd.f32 %v1469, %v1491
    %v1507 = vadd.f32 %v1471, %v1495
    %v1508 = vadd.f32 %v1473, %v1491
    %v1509 = vadd.f32 %v1475, %v1495
    %v1510 = vadd.f32 %v1479, %v1491
    %v1511 = vadd.f32 %v1481, %v1495
    %v1512 = vadd.f32 %v1483, %v1491
    %v1513 = vadd.f32 %v1485, %v1495
    %v1522 = vunpack.c.l.b16 %v1220
    %v1523 = vunpack.c.h.b16 %v1220
    %v1524 = vunpack.c.l.b16 %v1221
    %v1525 = vunpack.c.h.b16 %v1221
    %v1526 = vunpack.c.l.b16 %v1222
    %v1527 = vunpack.c.h.b16 %v1222
    %v1528 = vunpack.c.l.b16 %v1223
    %v1529 = vunpack.c.h.b16 %v1223
    %v1530 = vunpack.c.l.b16 %v1224
    %v1531 = vunpack.c.h.b16 %v1224
    %v1532 = vunpack.c.l.b16 %v1225
    %v1533 = vunpack.c.h.b16 %v1225
    %v1534 = vunpack.c.l.b16 %v1226
    %v1535 = vunpack.c.h.b16 %v1226
    %v1536 = vunpack.c.l.b16 %v1227
    %v1537 = vunpack.c.h.b16 %v1227
    %v1538 = vpack.c.b16 %v1524, %v1522
    %v1539 = vpack.c.b16 %v1525, %v1523
    %v1540 = vpack.c.b16 %v1528, %v1526
    %v1541 = vpack.c.b16 %v1529, %v1527
    %v1542 = vpack.c.b16 %v1532, %v1530
    %v1543 = vpack.c.b16 %v1533, %v1531
    %v1544 = vpack.c.b16 %v1536, %v1534
    %v1545 = vpack.c.b16 %v1537, %v1535
    %1554 = vmatprep.subr.bf16.mxu0 0
    %1555 = vmatpush1.bf16.msra.mxu0 0
    %1556 = vmatprep.subr.bf16.mxu0 0
    %1557 = vmatpush1.bf16.msra.mxu0 0
    %1558 = vmatprep.subr.bf16.mxu0 0
    %1559 = vmatpush1.bf16.msra.mxu0 0
    %1560 = vmatprep.subr.bf16.mxu0 0
    %1561 = vmatpush1.bf16.msra.mxu0 0
    %1562 = vmatprep.subr.bf16.mxu0 %v1545
    %1563 = vmatpush1.bf16.msra.mxu0 %v1544
    %1564 = vmatprep.subr.bf16.mxu0 %v1543
    %1565 = vmatpush1.bf16.msra.mxu0 %v1542
    %1566 = vmatprep.subr.bf16.mxu0 %v1541
    %1567 = vmatpush1.bf16.msra.mxu0 %v1540
    %1568 = vmatprep.subr.bf16.mxu0 %v1539
    %1569 = vmatpush1.bf16.msra.mxu0 %v1538
    %1570 = vmatprep.subr.bf16.mxu0 0
    %1571 = vmatpush2.bf16.msra.mxu0 0
    %1572 = vmatprep.subr.bf16.mxu0 0
    %1573 = vmatpush2.bf16.msra.mxu0 0
    %1574 = vmatprep.subr.bf16.mxu0 0
    %1575 = vmatpush2.bf16.msra.mxu0 0
    %1576 = vmatprep.subr.bf16.mxu0 0
    %1577 = vmatpush2.bf16.msra.mxu0 0
    %1578 = vmatprep.subr.bf16.mxu0 0
    %1579 = vmatpush2.bf16.msra.mxu0 0
    %1580 = vmatprep.subr.bf16.mxu0 0
    %1581 = vmatpush2.bf16.msra.mxu0 0
    %1582 = vmatprep.subr.bf16.mxu0 0
    %1583 = vmatpush2.bf16.msra.mxu0 0
    %1584 = vmatprep.subr.bf16.mxu0 0
    %1585 = vmatpush2.bf16.msra.mxu0 0
    %1586 = vmatprep.mubr.bf16.mxu0 0
    %1587 = vmatmul.mubr.bf16.gmra.mxu0 %v617
    %v1588 = vpop.f32.mrf.mxu0
    %v1589 = vadd.f32 0.0, %v1588
    %v1590 = vpop.f32.mrf.mxu0
    %v1591 = vadd.f32 0.0, %v1590
    %v1592 = vpop.f32.mrf.mxu0
    %v1593 = vpop.f32.mrf.mxu0
    %1594 = vdwg.mxu0
    %v1595 = vadd.f32 %v1498, %v1589
    %v1596 = vadd.f32 %v1499, %v1591
    %v1597 = vmul.f32 %v1595, 0.5
    %v1598 = vtanh.pop %v1597
    %v1599 = vmul.f32 %v1598, 0.5
    %v1600 = vadd.f32 %v1599, 0.5
    %v1601 = vtanh.pop %v1596
    %v1602 = vmul.f32 %v1596, 0.5
    %v1603 = vtanh.pop %v1602
    %v1604 = vmul.f32 %v1603, 0.5
    %v1605 = vadd.f32 %v1604, 0.5
    %v1606 = vmul.f32 %v1600, 0.0
    %v1607 = vmul.f32 %v1600, %v1601
    %1609 = vrot.lane.b32.xlu0 %v1607, 64
    %v1610 = vpop.permute.xlu0 %1609
    %v1612 = vadd.f32 %v1606, %v1610
    %v1613 = vtanh.pop %v1612
    %v1614 = vmul.f32 %v1605, %v1613
    %v1615 = vpack.c.bf16 %v1614, %v1614
    %1617 = vrot.lane.b32.xlu0 %v1615, 64
    %v1618 = vpop.permute.xlu0 %1617
    %v1620 = vsel %vm615, %v1618, 0
    %1622 = vmatprep.subr.bf16.mxu0 0
    %1623 = vmatpush1.bf16.msra.mxu0 0
    %1624 = vmatprep.subr.bf16.mxu0 0
    %1625 = vmatpush1.bf16.msra.mxu0 0
    %1626 = vmatprep.subr.bf16.mxu0 0
    %1627 = vmatpush1.bf16.msra.mxu0 0
    %1628 = vmatprep.subr.bf16.mxu0 0
    %1629 = vmatpush1.bf16.msra.mxu0 0
    %1630 = vmatprep.subr.bf16.mxu0 %v1545
    %1631 = vmatpush1.bf16.msra.mxu0 %v1544
    %1632 = vmatprep.subr.bf16.mxu0 %v1543
    %1633 = vmatpush1.bf16.msra.mxu0 %v1542
    %1634 = vmatprep.subr.bf16.mxu0 %v1541
    %1635 = vmatpush1.bf16.msra.mxu0 %v1540
    %1636 = vmatprep.subr.bf16.mxu0 %v1539
    %1637 = vmatpush1.bf16.msra.mxu0 %v1538
    %1638 = vmatprep.subr.bf16.mxu0 0
    %1639 = vmatpush2.bf16.msra.mxu0 0
    %1640 = vmatprep.subr.bf16.mxu0 0
    %1641 = vmatpush2.bf16.msra.mxu0 0
    %1642 = vmatprep.subr.bf16.mxu0 0
    %1643 = vmatpush2.bf16.msra.mxu0 0
    %1644 = vmatprep.subr.bf16.mxu0 0
    %1645 = vmatpush2.bf16.msra.mxu0 0
    %1646 = vmatprep.subr.bf16.mxu0 0
    %1647 = vmatpush2.bf16.msra.mxu0 0
    %1648 = vmatprep.subr.bf16.mxu0 0
    %1649 = vmatpush2.bf16.msra.mxu0 0
    %1650 = vmatprep.subr.bf16.mxu0 0
    %1651 = vmatpush2.bf16.msra.mxu0 0
    %1652 = vmatprep.subr.bf16.mxu0 0
    %1653 = vmatpush2.bf16.msra.mxu0 0
    %1654 = vmatprep.mubr.bf16.mxu0 0
    %1655 = vmatmul.mubr.bf16.gmra.mxu0 %v1620
    %v1656 = vpop.f32.mrf.mxu0
    %v1657 = vadd.f32 0.0, %v1656
    %v1658 = vpop.f32.mrf.mxu0
    %v1659 = vadd.f32 0.0, %v1658
    %v1660 = vpop.f32.mrf.mxu0
    %v1661 = vpop.f32.mrf.mxu0
    %1662 = vdwg.mxu0
    %v1663 = vadd.f32 %v1500, %v1657
    %v1664 = vadd.f32 %v1501, %v1659
    %v1665 = vmul.f32 %v1663, 0.5
    %v1666 = vtanh.pop %v1665
    %v1667 = vmul.f32 %v1666, 0.5
    %v1668 = vadd.f32 %v1667, 0.5
    %v1669 = vtanh.pop %v1664
    %v1670 = vmul.f32 %v1664, 0.5
    %v1671 = vtanh.pop %v1670
    %v1672 = vmul.f32 %v1671, 0.5
    %v1673 = vadd.f32 %v1672, 0.5
    %v1674 = vmul.f32 %v1668, %v1612
    %v1675 = vmul.f32 %v1668, %v1669
    %1677 = vrot.lane.b32.xlu0 %v1675, 64
    %v1678 = vpop.permute.xlu0 %1677
    %v1680 = vadd.f32 %v1674, %v1678
    %v1681 = vtanh.pop %v1680
    %v1682 = vmul.f32 %v1673, %v1681
    %v1683 = vpack.c.bf16 %v1682, %v1682
    %1685 = vrot.lane.b32.xlu0 %v1683, 64
    %v1686 = vpop.permute.xlu0 %1685
    %v1688 = vsel %vm615, %v1686, 0
    %1690 = vmatprep.subr.bf16.mxu0 0
    %1691 = vmatpush1.bf16.msra.mxu0 0
    %1692 = vmatprep.subr.bf16.mxu0 0
    %1693 = vmatpush1.bf16.msra.mxu0 0
    %1694 = vmatprep.subr.bf16.mxu0 0
    %1695 = vmatpush1.bf16.msra.mxu0 0
    %1696 = vmatprep.subr.bf16.mxu0 0
    %1697 = vmatpush1.bf16.msra.mxu0 0
    %1698 = vmatprep.subr.bf16.mxu0 %v1545
    %1699 = vmatpush1.bf16.msra.mxu0 %v1544
    %1700 = vmatprep.subr.bf16.mxu0 %v1543
    %1701 = vmatpush1.bf16.msra.mxu0 %v1542
    %1702 = vmatprep.subr.bf16.mxu0 %v1541
    %1703 = vmatpush1.bf16.msra.mxu0 %v1540
    %1704 = vmatprep.subr.bf16.mxu0 %v1539
    %1705 = vmatpush1.bf16.msra.mxu0 %v1538
    %1706 = vmatprep.subr.bf16.mxu0 0
    %1707 = vmatpush2.bf16.msra.mxu0 0
    %1708 = vmatprep.subr.bf16.mxu0 0
    %1709 = vmatpush2.bf16.msra.mxu0 0
    %1710 = vmatprep.subr.bf16.mxu0 0
    %1711 = vmatpush2.bf16.msra.mxu0 0
    %1712 = vmatprep.subr.bf16.mxu0 0
    %1713 = vmatpush2.bf16.msra.mxu0 0
    %1714 = vmatprep.subr.bf16.mxu0 0
    %1715 = vmatpush2.bf16.msra.mxu0 0
    %1716 = vmatprep.subr.bf16.mxu0 0
    %1717 = vmatpush2.bf16.msra.mxu0 0
    %1718 = vmatprep.subr.bf16.mxu0 0
    %1719 = vmatpush2.bf16.msra.mxu0 0
    %1720 = vmatprep.subr.bf16.mxu0 0
    %1721 = vmatpush2.bf16.msra.mxu0 0
    %1722 = vmatprep.mubr.bf16.mxu0 0
    %1723 = vmatmul.mubr.bf16.gmra.mxu0 %v1688
    %v1724 = vpop.f32.mrf.mxu0
    %v1725 = vadd.f32 0.0, %v1724
    %v1726 = vpop.f32.mrf.mxu0
    %v1727 = vadd.f32 0.0, %v1726
    %v1728 = vpop.f32.mrf.mxu0
    %v1729 = vpop.f32.mrf.mxu0
    %1730 = vdwg.mxu0
    %v1731 = vadd.f32 %v1502, %v1725
    %v1732 = vadd.f32 %v1503, %v1727
    %v1733 = vmul.f32 %v1731, 0.5
    %v1734 = vtanh.pop %v1733
    %v1735 = vmul.f32 %v1734, 0.5
    %v1736 = vadd.f32 %v1735, 0.5
    %v1737 = vtanh.pop %v1732
    %v1738 = vmul.f32 %v1732, 0.5
    %v1739 = vtanh.pop %v1738
    %v1740 = vmul.f32 %v1739, 0.5
    %v1741 = vadd.f32 %v1740, 0.5
    %v1742 = vmul.f32 %v1736, %v1680
    %v1743 = vmul.f32 %v1736, %v1737
    %1745 = vrot.lane.b32.xlu0 %v1743, 64
    %v1746 = vpop.permute.xlu0 %1745
    %v1748 = vadd.f32 %v1742, %v1746
    %v1749 = vtanh.pop %v1748
    %v1750 = vmul.f32 %v1741, %v1749
    %v1751 = vpack.c.bf16 %v1750, %v1750
    %1753 = vrot.lane.b32.xlu0 %v1751, 64
    %v1754 = vpop.permute.xlu0 %1753
    %v1756 = vsel %vm615, %v1754, 0
    %1758 = vmatprep.subr.bf16.mxu0 0
    %1759 = vmatpush1.bf16.msra.mxu0 0
    %1760 = vmatprep.subr.bf16.mxu0 0
    %1761 = vmatpush1.bf16.msra.mxu0 0
    %1762 = vmatprep.subr.bf16.mxu0 0
    %1763 = vmatpush1.bf16.msra.mxu0 0
    %1764 = vmatprep.subr.bf16.mxu0 0
    %1765 = vmatpush1.bf16.msra.mxu0 0
    %1766 = vmatprep.subr.bf16.mxu0 %v1545
    %1767 = vmatpush1.bf16.msra.mxu0 %v1544
    %1768 = vmatprep.subr.bf16.mxu0 %v1543
    %1769 = vmatpush1.bf16.msra.mxu0 %v1542
    %1770 = vmatprep.subr.bf16.mxu0 %v1541
    %1771 = vmatpush1.bf16.msra.mxu0 %v1540
    %1772 = vmatprep.subr.bf16.mxu0 %v1539
    %1773 = vmatpush1.bf16.msra.mxu0 %v1538
    %1774 = vmatprep.subr.bf16.mxu0 0
    %1775 = vmatpush2.bf16.msra.mxu0 0
    %1776 = vmatprep.subr.bf16.mxu0 0
    %1777 = vmatpush2.bf16.msra.mxu0 0
    %1778 = vmatprep.subr.bf16.mxu0 0
    %1779 = vmatpush2.bf16.msra.mxu0 0
    %1780 = vmatprep.subr.bf16.mxu0 0
    %1781 = vmatpush2.bf16.msra.mxu0 0
    %1782 = vmatprep.subr.bf16.mxu0 0
    %1783 = vmatpush2.bf16.msra.mxu0 0
    %1784 = vmatprep.subr.bf16.mxu0 0
    %1785 = vmatpush2.bf16.msra.mxu0 0
    %1786 = vmatprep.subr.bf16.mxu0 0
    %1787 = vmatpush2.bf16.msra.mxu0 0
    %1788 = vmatprep.subr.bf16.mxu0 0
    %1789 = vmatpush2.bf16.msra.mxu0 0
    %1790 = vmatprep.mubr.bf16.mxu0 0
    %1791 = vmatmul.mubr.bf16.gmra.mxu0 %v1756
    %v1792 = vpop.f32.mrf.mxu0
    %v1793 = vadd.f32 0.0, %v1792
    %v1794 = vpop.f32.mrf.mxu0
    %v1795 = vadd.f32 0.0, %v1794
    %v1796 = vpop.f32.mrf.mxu0
    %v1797 = vpop.f32.mrf.mxu0
    %1798 = vdwg.mxu0
    %v1799 = vadd.f32 %v1504, %v1793
    %v1800 = vadd.f32 %v1505, %v1795
    %v1801 = vmul.f32 %v1799, 0.5
    %v1802 = vtanh.pop %v1801
    %v1803 = vmul.f32 %v1802, 0.5
    %v1804 = vadd.f32 %v1803, 0.5
    %v1805 = vtanh.pop %v1800
    %v1806 = vmul.f32 %v1800, 0.5
    %v1807 = vtanh.pop %v1806
    %v1808 = vmul.f32 %v1807, 0.5
    %v1809 = vadd.f32 %v1808, 0.5
    %v1810 = vmul.f32 %v1804, %v1748
    %v1811 = vmul.f32 %v1804, %v1805
    %1813 = vrot.lane.b32.xlu0 %v1811, 64
    %v1814 = vpop.permute.xlu0 %1813
    %v1816 = vadd.f32 %v1810, %v1814
    %v1817 = vtanh.pop %v1816
    %v1818 = vmul.f32 %v1809, %v1817
    %v1819 = vpack.c.bf16 %v1818, %v1818
    %1821 = vrot.lane.b32.xlu0 %v1819, 64
    %v1822 = vpop.permute.xlu0 %1821
    %v1824 = vsel %vm615, %v1822, 0
    %1826 = vmatprep.subr.bf16.mxu0 0
    %1827 = vmatpush1.bf16.msra.mxu0 0
    %1828 = vmatprep.subr.bf16.mxu0 0
    %1829 = vmatpush1.bf16.msra.mxu0 0
    %1830 = vmatprep.subr.bf16.mxu0 0
    %1831 = vmatpush1.bf16.msra.mxu0 0
    %1832 = vmatprep.subr.bf16.mxu0 0
    %1833 = vmatpush1.bf16.msra.mxu0 0
    %1834 = vmatprep.subr.bf16.mxu0 %v1545
    %1835 = vmatpush1.bf16.msra.mxu0 %v1544
    %1836 = vmatprep.subr.bf16.mxu0 %v1543
    %1837 = vmatpush1.bf16.msra.mxu0 %v1542
    %1838 = vmatprep.subr.bf16.mxu0 %v1541
    %1839 = vmatpush1.bf16.msra.mxu0 %v1540
    %1840 = vmatprep.subr.bf16.mxu0 %v1539
    %1841 = vmatpush1.bf16.msra.mxu0 %v1538
    %1842 = vmatprep.subr.bf16.mxu0 0
    %1843 = vmatpush2.bf16.msra.mxu0 0
    %1844 = vmatprep.subr.bf16.mxu0 0
    %1845 = vmatpush2.bf16.msra.mxu0 0
    %1846 = vmatprep.subr.bf16.mxu0 0
    %1847 = vmatpush2.bf16.msra.mxu0 0
    %1848 = vmatprep.subr.bf16.mxu0 0
    %1849 = vmatpush2.bf16.msra.mxu0 0
    %1850 = vmatprep.subr.bf16.mxu0 0
    %1851 = vmatpush2.bf16.msra.mxu0 0
    %1852 = vmatprep.subr.bf16.mxu0 0
    %1853 = vmatpush2.bf16.msra.mxu0 0
    %1854 = vmatprep.subr.bf16.mxu0 0
    %1855 = vmatpush2.bf16.msra.mxu0 0
    %1856 = vmatprep.subr.bf16.mxu0 0
    %1857 = vmatpush2.bf16.msra.mxu0 0
    %1858 = vmatprep.mubr.bf16.mxu0 0
    %1859 = vmatmul.mubr.bf16.gmra.mxu0 %v1824
    %v1860 = vpop.f32.mrf.mxu0
    %v1861 = vadd.f32 0.0, %v1860
    %v1862 = vpop.f32.mrf.mxu0
    %v1863 = vadd.f32 0.0, %v1862
    %v1864 = vpop.f32.mrf.mxu0
    %v1865 = vpop.f32.mrf.mxu0
    %1866 = vdwg.mxu0
    %v1867 = vadd.f32 %v1506, %v1861
    %v1868 = vadd.f32 %v1507, %v1863
    %v1869 = vmul.f32 %v1867, 0.5
    %v1870 = vtanh.pop %v1869
    %v1871 = vmul.f32 %v1870, 0.5
    %v1872 = vadd.f32 %v1871, 0.5
    %v1873 = vtanh.pop %v1868
    %v1874 = vmul.f32 %v1868, 0.5
    %v1875 = vtanh.pop %v1874
    %v1876 = vmul.f32 %v1875, 0.5
    %v1877 = vadd.f32 %v1876, 0.5
    %v1878 = vmul.f32 %v1872, %v1816
    %v1879 = vmul.f32 %v1872, %v1873
    %1881 = vrot.lane.b32.xlu0 %v1879, 64
    %v1882 = vpop.permute.xlu0 %1881
    %v1884 = vadd.f32 %v1878, %v1882
    %v1885 = vtanh.pop %v1884
    %v1886 = vmul.f32 %v1877, %v1885
    %v1887 = vpack.c.bf16 %v1886, %v1886
    %1889 = vrot.lane.b32.xlu0 %v1887, 64
    %v1890 = vpop.permute.xlu0 %1889
    %v1892 = vsel %vm615, %v1890, 0
    %1894 = vmatprep.subr.bf16.mxu0 0
    %1895 = vmatpush1.bf16.msra.mxu0 0
    %1896 = vmatprep.subr.bf16.mxu0 0
    %1897 = vmatpush1.bf16.msra.mxu0 0
    %1898 = vmatprep.subr.bf16.mxu0 0
    %1899 = vmatpush1.bf16.msra.mxu0 0
    %1900 = vmatprep.subr.bf16.mxu0 0
    %1901 = vmatpush1.bf16.msra.mxu0 0
    %1902 = vmatprep.subr.bf16.mxu0 %v1545
    %1903 = vmatpush1.bf16.msra.mxu0 %v1544
    %1904 = vmatprep.subr.bf16.mxu0 %v1543
    %1905 = vmatpush1.bf16.msra.mxu0 %v1542
    %1906 = vmatprep.subr.bf16.mxu0 %v1541
    %1907 = vmatpush1.bf16.msra.mxu0 %v1540
    %1908 = vmatprep.subr.bf16.mxu0 %v1539
    %1909 = vmatpush1.bf16.msra.mxu0 %v1538
    %1910 = vmatprep.subr.bf16.mxu0 0
    %1911 = vmatpush2.bf16.msra.mxu0 0
    %1912 = vmatprep.subr.bf16.mxu0 0
    %1913 = vmatpush2.bf16.msra.mxu0 0
    %1914 = vmatprep.subr.bf16.mxu0 0
    %1915 = vmatpush2.bf16.msra.mxu0 0
    %1916 = vmatprep.subr.bf16.mxu0 0
    %1917 = vmatpush2.bf16.msra.mxu0 0
    %1918 = vmatprep.subr.bf16.mxu0 0
    %1919 = vmatpush2.bf16.msra.mxu0 0
    %1920 = vmatprep.subr.bf16.mxu0 0
    %1921 = vmatpush2.bf16.msra.mxu0 0
    %1922 = vmatprep.subr.bf16.mxu0 0
    %1923 = vmatpush2.bf16.msra.mxu0 0
    %1924 = vmatprep.subr.bf16.mxu0 0
    %1925 = vmatpush2.bf16.msra.mxu0 0
    %1926 = vmatprep.mubr.bf16.mxu0 0
    %1927 = vmatmul.mubr.bf16.gmra.mxu0 %v1892
    %v1928 = vpop.f32.mrf.mxu0
    %v1929 = vadd.f32 0.0, %v1928
    %v1930 = vpop.f32.mrf.mxu0
    %v1931 = vadd.f32 0.0, %v1930
    %v1932 = vpop.f32.mrf.mxu0
    %v1933 = vpop.f32.mrf.mxu0
    %1934 = vdwg.mxu0
    %v1935 = vadd.f32 %v1508, %v1929
    %v1936 = vadd.f32 %v1509, %v1931
    %v1937 = vmul.f32 %v1935, 0.5
    %v1938 = vtanh.pop %v1937
    %v1939 = vmul.f32 %v1938, 0.5
    %v1940 = vadd.f32 %v1939, 0.5
    %v1941 = vtanh.pop %v1936
    %v1942 = vmul.f32 %v1936, 0.5
    %v1943 = vtanh.pop %v1942
    %v1944 = vmul.f32 %v1943, 0.5
    %v1945 = vadd.f32 %v1944, 0.5
    %v1946 = vmul.f32 %v1940, %v1884
    %v1947 = vmul.f32 %v1940, %v1941
    %1949 = vrot.lane.b32.xlu0 %v1947, 64
    %v1950 = vpop.permute.xlu0 %1949
    %v1952 = vadd.f32 %v1946, %v1950
    %v1953 = vtanh.pop %v1952
    %v1954 = vmul.f32 %v1945, %v1953
    %v1955 = vpack.c.bf16 %v1954, %v1954
    %1957 = vrot.lane.b32.xlu0 %v1955, 64
    %v1958 = vpop.permute.xlu0 %1957
    %v1960 = vsel %vm615, %v1958, 0
    %1962 = vmatprep.subr.bf16.mxu0 0
    %1963 = vmatpush1.bf16.msra.mxu0 0
    %1964 = vmatprep.subr.bf16.mxu0 0
    %1965 = vmatpush1.bf16.msra.mxu0 0
    %1966 = vmatprep.subr.bf16.mxu0 0
    %1967 = vmatpush1.bf16.msra.mxu0 0
    %1968 = vmatprep.subr.bf16.mxu0 0
    %1969 = vmatpush1.bf16.msra.mxu0 0
    %1970 = vmatprep.subr.bf16.mxu0 %v1545
    %1971 = vmatpush1.bf16.msra.mxu0 %v1544
    %1972 = vmatprep.subr.bf16.mxu0 %v1543
    %1973 = vmatpush1.bf16.msra.mxu0 %v1542
    %1974 = vmatprep.subr.bf16.mxu0 %v1541
    %1975 = vmatpush1.bf16.msra.mxu0 %v1540
    %1976 = vmatprep.subr.bf16.mxu0 %v1539
    %1977 = vmatpush1.bf16.msra.mxu0 %v1538
    %1978 = vmatprep.subr.bf16.mxu0 0
    %1979 = vmatpush2.bf16.msra.mxu0 0
    %1980 = vmatprep.subr.bf16.mxu0 0
    %1981 = vmatpush2.bf16.msra.mxu0 0
    %1982 = vmatprep.subr.bf16.mxu0 0
    %1983 = vmatpush2.bf16.msra.mxu0 0
    %1984 = vmatprep.subr.bf16.mxu0 0
    %1985 = vmatpush2.bf16.msra.mxu0 0
    %1986 = vmatprep.subr.bf16.mxu0 0
    %1987 = vmatpush2.bf16.msra.mxu0 0
    %1988 = vmatprep.subr.bf16.mxu0 0
    %1989 = vmatpush2.bf16.msra.mxu0 0
    %1990 = vmatprep.subr.bf16.mxu0 0
    %1991 = vmatpush2.bf16.msra.mxu0 0
    %1992 = vmatprep.subr.bf16.mxu0 0
    %1993 = vmatpush2.bf16.msra.mxu0 0
    %1994 = vmatprep.mubr.bf16.mxu0 0
    %1995 = vmatmul.mubr.bf16.gmra.mxu0 %v1960
    %v1996 = vpop.f32.mrf.mxu0
    %v1997 = vadd.f32 0.0, %v1996
    %v1998 = vpop.f32.mrf.mxu0
    %v1999 = vadd.f32 0.0, %v1998
    %v2000 = vpop.f32.mrf.mxu0
    %v2001 = vpop.f32.mrf.mxu0
    %2002 = vdwg.mxu0
    %v2003 = vadd.f32 %v1510, %v1997
    %v2004 = vadd.f32 %v1511, %v1999
    %v2005 = vmul.f32 %v2003, 0.5
    %v2006 = vtanh.pop %v2005
    %v2007 = vmul.f32 %v2006, 0.5
    %v2008 = vadd.f32 %v2007, 0.5
    %v2009 = vtanh.pop %v2004
    %v2010 = vmul.f32 %v2004, 0.5
    %v2011 = vtanh.pop %v2010
    %v2012 = vmul.f32 %v2011, 0.5
    %v2013 = vadd.f32 %v2012, 0.5
    %v2014 = vmul.f32 %v2008, %v1952
    %v2015 = vmul.f32 %v2008, %v2009
    %2017 = vrot.lane.b32.xlu0 %v2015, 64
    %v2018 = vpop.permute.xlu0 %2017
    %v2020 = vadd.f32 %v2014, %v2018
    %v2021 = vtanh.pop %v2020
    %v2022 = vmul.f32 %v2013, %v2021
    %v2023 = vpack.c.bf16 %v2022, %v2022
    %2025 = vrot.lane.b32.xlu0 %v2023, 64
    %v2026 = vpop.permute.xlu0 %2025
    %v2028 = vsel %vm615, %v2026, 0
    %2030 = vmatprep.subr.bf16.mxu0 0
    %2031 = vmatpush1.bf16.msra.mxu0 0
    %2032 = vmatprep.subr.bf16.mxu0 0
    %2033 = vmatpush1.bf16.msra.mxu0 0
    %2034 = vmatprep.subr.bf16.mxu0 0
    %2035 = vmatpush1.bf16.msra.mxu0 0
    %2036 = vmatprep.subr.bf16.mxu0 0
    %2037 = vmatpush1.bf16.msra.mxu0 0
    %2038 = vmatprep.subr.bf16.mxu0 %v1545
    %2039 = vmatpush1.bf16.msra.mxu0 %v1544
    %2040 = vmatprep.subr.bf16.mxu0 %v1543
    %2041 = vmatpush1.bf16.msra.mxu0 %v1542
    %2042 = vmatprep.subr.bf16.mxu0 %v1541
    %2043 = vmatpush1.bf16.msra.mxu0 %v1540
    %2044 = vmatprep.subr.bf16.mxu0 %v1539
    %2045 = vmatpush1.bf16.msra.mxu0 %v1538
    %2046 = vmatprep.subr.bf16.mxu0 0
    %2047 = vmatpush2.bf16.msra.mxu0 0
    %2048 = vmatprep.subr.bf16.mxu0 0
    %2049 = vmatpush2.bf16.msra.mxu0 0
    %2050 = vmatprep.subr.bf16.mxu0 0
    %2051 = vmatpush2.bf16.msra.mxu0 0
    %2052 = vmatprep.subr.bf16.mxu0 0
    %2053 = vmatpush2.bf16.msra.mxu0 0
    %2054 = vmatprep.subr.bf16.mxu0 0
    %2055 = vmatpush2.bf16.msra.mxu0 0
    %2056 = vmatprep.subr.bf16.mxu0 0
    %2057 = vmatpush2.bf16.msra.mxu0 0
    %2058 = vmatprep.subr.bf16.mxu0 0
    %2059 = vmatpush2.bf16.msra.mxu0 0
    %2060 = vmatprep.subr.bf16.mxu0 0
    %2061 = vmatpush2.bf16.msra.mxu0 0
    %2062 = vmatprep.mubr.bf16.mxu0 0
    %2063 = vmatmul.mubr.bf16.gmra.mxu0 %v2028
    %v2064 = vpop.f32.mrf.mxu0
    %v2065 = vadd.f32 0.0, %v2064
    %v2066 = vpop.f32.mrf.mxu0
    %v2067 = vadd.f32 0.0, %v2066
    %v2068 = vpop.f32.mrf.mxu0
    %v2069 = vpop.f32.mrf.mxu0
    %2070 = vdwg.mxu0
    %v2071 = vadd.f32 %v1512, %v2065
    %v2072 = vadd.f32 %v1513, %v2067
    %v2073 = vmul.f32 %v2071, 0.5
    %v2074 = vtanh.pop %v2073
    %v2075 = vmul.f32 %v2074, 0.5
    %v2076 = vadd.f32 %v2075, 0.5
    %v2077 = vtanh.pop %v2072
    %v2078 = vmul.f32 %v2072, 0.5
    %v2079 = vtanh.pop %v2078
    %v2080 = vmul.f32 %v2079, 0.5
    %v2081 = vadd.f32 %v2080, 0.5
    %v2082 = vmul.f32 %v2076, %v2020
    %v2083 = vmul.f32 %v2076, %v2077
    %2085 = vrot.lane.b32.xlu0 %v2083, 64
    %v2086 = vpop.permute.xlu0 %2085
    %v2088 = vadd.f32 %v2082, %v2086
    %v2089 = vtanh.pop %v2088
    %v2090 = vmul.f32 %v2081, %v2089
    %v2091 = vpack.c.bf16 %v2090, %v2090
    %v2092 = vld [vmem:[%s10] sm:$0xf]
    %v2093 = vld [vmem:[%s10 + $0x4] sm:$0xf]
    %v2094 = vld [vmem:[%s10 + $0x8] sm:$0xf]
    %v2095 = vld [vmem:[%s10 + $0xc] sm:$0xf]
    %v2096 = vld [vmem:[%s10 + $0x10] sm:$0xf]
    %v2097 = vld [vmem:[%s10 + $0x14] sm:$0xf]
    %v2098 = vld [vmem:[%s10 + $0x18] sm:$0xf]
    %v2099 = vld [vmem:[%s10 + $0x1c] sm:$0xf]
    %v2100 = vld [vmem:[%s11] sm:$0x1]
    %v2102 = vlaneseq
    %v2103 = vshrl.u32 %v2102, 7
    %v2104 = vsub.s32 0, %v2103
    %v2105 = vrot.slane %v2100, %v2104
    %2108 = vrot.lane.b32.xlu0 %v2091, 64
    %v2109 = vpop.permute.xlu0 %2108
    %v2118 = vunpack.c.l.b16 %v2092
    %v2119 = vunpack.c.l.b16 %v2093
    %v2120 = vunpack.c.l.b16 %v2094
    %v2121 = vunpack.c.l.b16 %v2095
    %v2122 = vunpack.c.l.b16 %v2096
    %v2123 = vunpack.c.l.b16 %v2097
    %v2124 = vunpack.c.l.b16 %v2098
    %v2125 = vunpack.c.l.b16 %v2099
    %v2126 = vpack.c.b16 %v2119, %v2118
    %v2127 = vpack.c.b16 %v2121, %v2120
    %v2128 = vpack.c.b16 %v2123, %v2122
    %v2129 = vpack.c.b16 %v2125, %v2124
    %v2135 = vsel %vm615, %v2109, 0
    %2137 = vmatprep.subr.bf16.mxu0 0
    %2138 = vmatpush1.bf16.msra.mxu0 0
    %2139 = vmatprep.subr.bf16.mxu0 0
    %2140 = vmatpush1.bf16.msra.mxu0 0
    %2141 = vmatprep.subr.bf16.mxu0 0
    %2142 = vmatpush1.bf16.msra.mxu0 0
    %2143 = vmatprep.subr.bf16.mxu0 0
    %2144 = vmatpush1.bf16.msra.mxu0 0
    %2145 = vmatprep.subr.bf16.mxu0 0
    %2146 = vmatpush1.bf16.msra.mxu0 %v2129
    %2147 = vmatprep.subr.bf16.mxu0 0
    %2148 = vmatpush1.bf16.msra.mxu0 %v2128
    %2149 = vmatprep.subr.bf16.mxu0 0
    %2150 = vmatpush1.bf16.msra.mxu0 %v2127
    %2151 = vmatprep.subr.bf16.mxu0 0
    %2152 = vmatpush1.bf16.msra.mxu0 %v2126
    %2153 = vmatprep.subr.bf16.mxu0 0
    %2154 = vmatpush2.bf16.msra.mxu0 0
    %2155 = vmatprep.subr.bf16.mxu0 0
    %2156 = vmatpush2.bf16.msra.mxu0 0
    %2157 = vmatprep.subr.bf16.mxu0 0
    %2158 = vmatpush2.bf16.msra.mxu0 0
    %2159 = vmatprep.subr.bf16.mxu0 0
    %2160 = vmatpush2.bf16.msra.mxu0 0
    %2161 = vmatprep.subr.bf16.mxu0 0
    %2162 = vmatpush2.bf16.msra.mxu0 0
    %2163 = vmatprep.subr.bf16.mxu0 0
    %2164 = vmatpush2.bf16.msra.mxu0 0
    %2165 = vmatprep.subr.bf16.mxu0 0
    %2166 = vmatpush2.bf16.msra.mxu0 0
    %2167 = vmatprep.subr.bf16.mxu0 0
    %2168 = vmatpush2.bf16.msra.mxu0 0
    %2169 = vmatprep.mubr.bf16.mxu0 0
    %2170 = vmatmul.mubr.bf16.gmra.mxu0 %v2135
    %v2171 = vpop.f32.mrf.mxu0
    %v2172 = vadd.f32 %v2105, %v2171
    %v2173 = vpop.f32.mrf.mxu0
    %v2174 = vpop.f32.mrf.mxu0
    %v2175 = vpop.f32.mrf.mxu0
    %2176 = vdwg.mxu0
    %2177 = vst [vmem:[#allocation14] sm:$0xff] %v2172
    // Predicated region
    $region74: #{tpu_custom_call.1} parent=1 // pred_check
      _
    $region75: #{tpu_custom_call.1} parent=1 // pred_check_branch
      %2179 = sbr.rel (0) target = $region77
    $region76: #{tpu_custom_call.1} parent=1 // pred_region
      %s2181 = ssub.s32 128, 128
      %2182 = vsyncadd [#allocation5], %s2181
      %s2184 = sshll.u32 [#allocation14], 4
      %s2185 = int_to_ptr.vmem [resolvable:$true] %s2184
      %2187 = dma.vmem_to_hbm [thread:$0]  %s2185, 128, %s12, [#allocation5]
    $region77: #{tpu_custom_call.1} parent=1 // pred_fallthru
      _
    // Predicated region
    $region78: #{tpu_custom_call.1} parent=1 // pred_check
      _
    $region79: #{tpu_custom_call.1} parent=1 // pred_check_branch
      %2189 = sbr.rel (0) target = $region81
    $region80: #{tpu_custom_call.1} parent=1 // pred_region
      %2190 = dma.done [#allocation5], 128
    $region81: #{tpu_custom_call.1} parent=1 // pred_fallthru
      _
    %2191 = vsyncpa [#allocation4], 1
    %2192 = vsyncpa [#allocation7], 1
    %2193 = vsyncpa [#allocation10], 1
    %2194 = vsyncpa [#allocation13], 1
    %2195 = vsyncpa [#allocation5], 1

</llo_original>
